<compile_context>
chip_gen: v5e
topology: v5e:2x2
jax: 0.10.0
libtpu: 0.0.40
codegen_flags: <defaults>
</compile_context>

<pallas_src>
import jax
import jax.numpy as jnp
from jax.experimental import pallas as pl
from jax.experimental.pallas import tpu as pltpu


# ---------------------------------------------------------------------------
# helpers
# ---------------------------------------------------------------------------

def _round_up(x, m):
    return (x + m - 1) // m * m


def _fold_bn(w, b, bnp, eps=1e-5):
    """Fold eval-mode BatchNorm1d into a 1x1-conv / linear layer.

    w: (Cout, Cin), b: (Cout,).  Returns w_eff (Cin, Cout), b_eff (Cout,) such
    that BN(x @ w.T + b) == x @ w_eff + b_eff.
    """
    scale = bnp["g"] / jnp.sqrt(bnp["v"] + eps)
    w_eff = (w * scale[:, None]).T
    b_eff = (b - bnp["m"]) * scale + bnp["be"]
    return w_eff.astype(jnp.float32), b_eff.astype(jnp.float32)


# ---------------------------------------------------------------------------
# Encoder backbone: PointNetfeat (trans=False, global_feat=True)
# ---------------------------------------------------------------------------

ENC_C_OUT = 1024      # layer-3 output channels
ENC_C_CHUNK = 256     # layer-3 output channels processed per chunk


def _pointnetfeat_kernel(x_ref, w1_ref, b1_ref, w2_ref, b2_ref, w3_ref, b3_ref,
                         o_ref, acc_ref):
    n = pl.program_id(2)

    @pl.when(n == 0)
    def _():
        acc_ref[...] = jnp.full(acc_ref.shape, -jnp.inf, acc_ref.dtype)

    x = x_ref[0]                       # (tn, 8) f32, channels zero-padded 3 -> 8
    tn = x.shape[0]

    # layer 1: 1x1 conv (3->64, K padded to 8) + folded bn1 + relu  (f32)
    h1 = jnp.dot(x, w1_ref[...], preferred_element_type=jnp.float32) + b1_ref[...]
    h1 = jnp.maximum(h1, 0.0).astype(jnp.bfloat16)

    # layer 2: 1x1 conv (64->128) + folded bn2 + relu  (bf16 MXU, f32 accum)
    h2 = jnp.dot(h1, w2_ref[...], preferred_element_type=jnp.float32) + b2_ref[...]
    h2 = jnp.maximum(h2, 0.0).astype(jnp.bfloat16)

    # layer 3: 1x1 conv (128->1024) + folded bn3, chunked over output channels
    # so the live h3 value stays (tn, 256) f32.  The point-axis max is folded
    # elementwise per 8-row group (no cross-sublane XLU reduce on the hot path).
    for c in range(0, ENC_C_OUT, ENC_C_CHUNK):
        h3c = jnp.dot(h2, w3_ref[:, c:c + ENC_C_CHUNK],
                      preferred_element_type=jnp.float32)
        h3c = h3c + b3_ref[:, c:c + ENC_C_CHUNK]
        part = jnp.max(h3c.reshape(tn // 8, 8, ENC_C_CHUNK), axis=0)
        acc_ref[:, c:c + ENC_C_CHUNK] = jnp.maximum(
            acc_ref[:, c:c + ENC_C_CHUNK], part)

    @pl.when(n == pl.num_programs(2) - 1)
    def _():
        o_ref[...] = acc_ref[...].reshape(o_ref.shape)


def pointnetfeat_forward(x_ncw, enc, *, tn=512, n_splits=2):
    """x_ncw: (B, 3, N) float32, PyTorch NCW layout.  Returns (B, 1024)."""
    B, C, N = x_ncw.shape
    assert C == 3

    # Layout (B, N, C): points on sublanes, channels on lanes.
    x = jnp.transpose(x_ncw, (0, 2, 1)).astype(jnp.float32)          # (B, N, 3)

    # Pad the point axis up to a multiple of n_splits*tn by replicating a real
    # point (keeps the max exact), then zero-pad channels 3 -> 8.
    span = n_splits * tn
    n_pad = (-N) % span
    if n_pad:
        x = jnp.concatenate(
            [x, jnp.broadcast_to(x[:, :1, :], (B, n_pad, 3))], axis=1)
    Np = N + n_pad
    x = jnp.pad(x, ((0, 0), (0, 0), (0, 5)))                         # (B, Np, 8)
    n_tiles = Np // span

    w1, b1 = _fold_bn(enc["w1"], enc["b1"], enc["bn1"])
    w1 = jnp.pad(w1, ((0, 5), (0, 0)))                               # (8, 64)
    w2, b2 = _fold_bn(enc["w2"], enc["b2"], enc["bn2"])
    w3, b3 = _fold_bn(enc["w3"], enc["b3"], enc["bn3"])
    w2 = w2.astype(jnp.bfloat16)
    w3 = w3.astype(jnp.bfloat16)
    b1, b2, b3 = b1[None, :], b2[None, :], b3[None, :]

    def full(shape):
        return pl.BlockSpec(shape, lambda b, s, n: (0, 0))

    flops = 2 * B * Np * (8 * 64 + 64 * 128 + 128 * 1024)
    bytes_accessed = (B * Np * 8 * 4
                      + 8 * 64 * 4 + 64 * 4
                      + 64 * 128 * 2 + 128 * 4
                      + 128 * 1024 * 2 + 1024 * 4
                      + B * n_splits * 8 * 1024 * 4)
    cost = pl.CostEstimate(flops=flops, transcendentals=0,
                           bytes_accessed=bytes_accessed)

    out = pl.pallas_call(
        _pointnetfeat_kernel,
        out_shape=jax.ShapeDtypeStruct((B, n_splits, 8, 1024), jnp.float32),
        grid_spec=pltpu.PrefetchScalarGridSpec(
            num_scalar_prefetch=0,
            grid=(B, n_splits, n_tiles),
            in_specs=[
                pl.BlockSpec((1, tn, 8),
                             lambda b, s, n: (b, s * n_tiles + n, 0)),  # x tile
                full((8, 64)),      full((1, 64)),                      # layer 1
                full((64, 128)),    full((1, 128)),                     # layer 2
                full((128, 1024)),  full((1, 1024)),                    # layer 3
            ],
            out_specs=pl.BlockSpec((1, 1, 8, 1024),
                                   lambda b, s, n: (b, s, 0, 0)),
            scratch_shapes=[pltpu.VMEM((8, 1024), jnp.float32)],
        ),
        compiler_params=pltpu.CompilerParams(
            dimension_semantics=("parallel", "parallel", "arbitrary")),
        cost_estimate=cost,
    )(x, w1, b1, w2, b2, w3, b3)

    # Collapse the point-split axis and the 8 sublane partial maxima.
    return jnp.max(out, axis=(1, 2))                                  # (B, 1024)


# ---------------------------------------------------------------------------
# Decoder: PointGenCon(bottleneck_size = 3 + 1024) per-point MLP
# ---------------------------------------------------------------------------

def _pointgencon_kernel(g_ref, w1g_ref, bb1_ref, w2_ref, b2_ref,
                        w3_ref, b3_ref, w4_ref, b4_ref, o_ref):
    g = g_ref[0]                                                     # (tn, 8) f32

    # conv1 (1027->1027) + folded bn1 + relu; the 1024 latent input rows are
    # pre-folded into the per-batch bias bb1, so only the 3 xyz channels remain.
    h1 = jnp.dot(g, w1g_ref[...], preferred_element_type=jnp.float32) + bb1_ref[0]
    h1 = jnp.maximum(h1, 0.0).astype(jnp.bfloat16)                   # (tn, 1152)

    # conv2 (1027->513) + folded bn2 + relu
    h2 = jnp.dot(h1, w2_ref[...], preferred_element_type=jnp.float32) + b2_ref[...]
    h2 = jnp.maximum(h2, 0.0).astype(jnp.bfloat16)                   # (tn, 640)

    # conv3 (513->256) + folded bn3 + relu
    h3 = jnp.dot(h2, w3_ref[...], preferred_element_type=jnp.float32) + b3_ref[...]
    h3 = jnp.maximum(h3, 0.0).astype(jnp.bfloat16)                   # (tn, 256)

    # conv4 (256->3, output channels padded to 128 for lane-dense stores) + tanh
    h4 = jnp.dot(h3, w4_ref[...], preferred_element_type=jnp.float32) + b4_ref[...]
    o_ref[...] = jnp.tanh(h4).reshape(o_ref.shape)                   # (1, tn, 128)


def _prep_decoder(dec, eps=1e-5):
    """Fold BN into the decoder convs and zero-pad channel dims to multiples of
    128 (zero padding is exact: padded channels stay identically zero)."""
    c1 = dec["w1"].shape[0]            # 1027
    c2 = dec["w2"].shape[0]            # 513
    c3 = dec["w3"].shape[0]            # 256
    c1p, c2p, c3p = _round_up(c1, 128), _round_up(c2, 128), _round_up(c3, 128)

    w1, b1 = _fold_bn(dec["w1"], dec["b1"], dec["bn1"], eps)
    w1 = jnp.pad(w1, ((0, 0), (0, c1p - c1)))                        # (1027, 1152)
    b1 = jnp.pad(b1, (0, c1p - c1))[None, :]                         # (1, 1152)
    w1_grid = jnp.pad(w1[:3], ((0, 5), (0, 0)))                      # (8, 1152) f32
    w1_latent = w1[3:]                                               # (1024, 1152) f32

    w2, b2 = _fold_bn(dec["w2"], dec["b2"], dec["bn2"], eps)
    w2 = jnp.pad(w2, ((0, c1p - c1), (0, c2p - c2))).astype(jnp.bfloat16)
    b2 = jnp.pad(b2, (0, c2p - c2))[None, :]

    w3, b3 = _fold_bn(dec["w3"], dec["b3"], dec["bn3"], eps)
    w3 = jnp.pad(w3, ((0, c2p - c2), (0, c3p - c3))).astype(jnp.bfloat16)
    b3 = jnp.pad(b3, (0, c3p - c3))[None, :]

    w4 = jnp.pad(dec["w4"].T.astype(jnp.float32),
                 ((0, c3p - c3), (0, 128 - 3))).astype(jnp.bfloat16)  # (256, 128)
    b4 = jnp.pad(dec["b4"].astype(jnp.float32), (0, 128 - 3))[None, :]

    return dict(w1_grid=w1_grid, w1_latent=w1_latent, b1=b1,
                w2=w2, b2=b2, w3=w3, b3=b3, w4=w4, b4=b4)


def pointgencon_forward(grid_pts, bb1, dec, *, tn=512):
    """grid_pts: (B, P, 3) unit-sphere samples; bb1: (B, C1p) per-batch layer-1
    effective bias (folded conv1 bias + latent contribution).  Returns (B, P, 3)."""
    B, P, _ = grid_pts.shape
    c1p = dec["w1_grid"].shape[1]
    c2p = dec["w2"].shape[1]
    c3p = dec["w3"].shape[1]

    # Pad the point axis to a tile multiple (padded rows are sliced off) and the
    # xyz channels 3 -> 8.
    n_pad = (-P) % tn
    if n_pad:
        grid_pts = jnp.pad(grid_pts, ((0, 0), (0, n_pad), (0, 0)))
    Pp = P + n_pad
    g = jnp.pad(grid_pts.astype(jnp.float32), ((0, 0), (0, 0), (0, 5)))  # (B, Pp, 8)
    bb1 = bb1.reshape(B, 1, c1p).astype(jnp.float32)
    n_tiles = Pp // tn

    def full(shape):
        return pl.BlockSpec(shape, lambda b, n: (0, 0))

    flops = 2 * B * Pp * (8 * c1p + c1p * c2p + c2p * c3p + c3p * 128)
    bytes_accessed = (B * Pp * 8 * 4 + B * Pp * 128 * 4 + B * c1p * 4
                      + dec["w1_grid"].size * 4
                      + dec["w2"].size * 2 + dec["b2"].size * 4
                      + dec["w3"].size * 2 + dec["b3"].size * 4
                      + dec["w4"].size * 2 + dec["b4"].size * 4)
    cost = pl.CostEstimate(flops=flops, transcendentals=B * Pp * 128,
                           bytes_accessed=bytes_accessed)

    out = pl.pallas_call(
        _pointgencon_kernel,
        out_shape=jax.ShapeDtypeStruct((B, Pp, 128), jnp.float32),
        grid_spec=pltpu.PrefetchScalarGridSpec(
            num_scalar_prefetch=0,
            grid=(B, n_tiles),
            in_specs=[
                pl.BlockSpec((1, tn, 8), lambda b, n: (b, n, 0)),     # sphere xyz
                full((8, c1p)),                                       # conv1 (xyz rows)
                pl.BlockSpec((1, 1, c1p), lambda b, n: (b, 0, 0)),    # per-batch bias
                full((c1p, c2p)), full((1, c2p)),                     # conv2
                full((c2p, c3p)), full((1, c3p)),                     # conv3
                full((c3p, 128)), full((1, 128)),                     # conv4
            ],
            out_specs=pl.BlockSpec((1, tn, 128), lambda b, n: (b, n, 0)),
        ),
        compiler_params=pltpu.CompilerParams(
            dimension_semantics=("parallel", "parallel"),
            vmem_limit_bytes=32 * 1024 * 1024),
        cost_estimate=cost,
    )(g, dec["w1_grid"], bb1, dec["w2"], dec["b2"],
      dec["w3"], dec["b3"], dec["w4"], dec["b4"])

    return out[:, :P, :3]                                             # (B, P, 3)


# ---------------------------------------------------------------------------
# Full AE_AtlasNet_SPHERE forward
# ---------------------------------------------------------------------------

def sample_sphere(key, B, n):
    """rand_grid.normal_(0,1) followed by per-point normalization (as in forward)."""
    g = jax.random.normal(key, (B, 3, n), jnp.float32)
    return g / jnp.sqrt(jnp.sum(g ** 2, axis=1, keepdims=True))


def ae_atlasnet_sphere_forward(x_ncw, params, rand_grid=None, key=None, *,
                               num_points=2048, tn_enc=512, tn_dec=512,
                               n_splits=2):
    """x_ncw: (B, 3, N).  Returns the reconstructed cloud (B, num_points, 3)."""
    B = x_ncw.shape[0]

    # --- encoder backbone (Pallas kernel) ---
    feat = pointnetfeat_forward(x_ncw, params["enc"], tn=tn_enc,
                                n_splits=n_splits)                    # (B, 1024)

    # --- bottleneck head: Linear(1024,1024)+BN+ReLU (tiny per-batch matmul, XLA) ---
    wl, bl = _fold_bn(params["head"]["w"], params["head"]["b"], params["head"]["bn"])
    latent = jnp.maximum(feat @ wl + bl, 0.0)                         # (B, 1024)

    # --- decoder (Pallas kernel) ---
    if rand_grid is None:
        rand_grid = sample_sphere(key, B, num_points)                 # (B, 3, P)
    grid_pts = jnp.transpose(rand_grid, (0, 2, 1))                    # (B, P, 3)

    dec = _prep_decoder(params["dec"])
    # conv1 is linear, so its latent input rows fold into a per-batch bias.
    bb1 = dec["b1"] + latent @ dec["w1_latent"]                       # (B, 1152)
    return pointgencon_forward(grid_pts, bb1, dec, tn=tn_dec)         # (B, P, 3)


# ---------------------------------------------------------------------------
# Parameters + pure-JAX f32 reference
# ---------------------------------------------------------------------------

def make_params(key, bottleneck=1024):
    kiter = iter(jax.random.split(key, 48))

    def conv(cout, cin):
        w = jax.random.normal(next(kiter), (cout, cin), jnp.float32) / jnp.sqrt(cin)
        b = 0.1 * jax.random.normal(next(kiter), (cout,), jnp.float32)
        return w, b

    def bn(c):
        return dict(
            g=1.0 + 0.1 * jax.random.normal(next(kiter), (c,), jnp.float32),
            be=0.1 * jax.random.normal(next(kiter), (c,), jnp.float32),
            m=0.1 * jax.random.normal(next(kiter), (c,), jnp.float32),
            v=1.0 + 0.1 * jax.nn.softplus(
                jax.random.normal(next(kiter), (c,), jnp.float32)))

    enc = {}
    for i, (cin, cout) in enumerate(((3, 64), (64, 128), (128, 1024)), start=1):
        w, b = conv(cout, cin)
        enc[f"w{i}"], enc[f"b{i}"], enc[f"bn{i}"] = w, b, bn(cout)

    hw, hb = conv(bottleneck, 1024)
    head = dict(w=hw, b=hb, bn=bn(bottleneck))

    c_in = 3 + bottleneck
    dims = (c_in, c_in, c_in // 2, c_in // 4, 3)
    dec = {}
    for i in range(1, 5):
        w, b = conv(dims[i], dims[i - 1])
        dec[f"w{i}"], dec[f"b{i}"] = w, b
        if i < 4:
            dec[f"bn{i}"] = bn(dims[i])

    return dict(enc=enc, head=head, dec=dec)


def atlasnet_reference(x_ncw, rand_grid, params, eps=1e-5):
    """Pure-JAX f32 reference of the same (eval-mode BN) forward."""
    def layer(h, w, b, bnp, act):                  # h: (B, N, Cin), w: (Cout, Cin)
        y = jnp.einsum("bnc,oc->bno", h, w) + b
        if bnp is not None:
            y = (y - bnp["m"]) / jnp.sqrt(bnp["v"] + eps) * bnp["g"] + bnp["be"]
        if act == "relu":
            return jnp.maximum(y, 0.0)
        if act == "tanh":
            return jnp.tanh(y)
        return y

    enc, head, dec = params["enc"], params["head"], params["dec"]
    h = jnp.transpose(x_ncw, (0, 2, 1))
    h = layer(h, enc["w1"], enc["b1"], enc["bn1"], "relu")
    h = layer(h, enc["w2"], enc["b2"], enc["bn2"], "relu")
    h = layer(h, enc["w3"], enc["b3"], enc["bn3"], None)
    feat = jnp.max(h, axis=1)                                         # (B, 1024)
    latent = layer(feat[:, None, :], head["w"], head["b"], head["bn"],
                   "relu")[:, 0, :]                                   # (B, 1024)

    B, _, P = rand_grid.shape
    y = jnp.concatenate(
        [jnp.transpose(rand_grid, (0, 2, 1)),
         jnp.broadcast_to(latent[:, None, :], (B, P, latent.shape[1]))], axis=-1)
    y = layer(y, dec["w1"], dec["b1"], dec["bn1"], "relu")
    y = layer(y, dec["w2"], dec["b2"], dec["bn2"], "relu")
    y = layer(y, dec["w3"], dec["b3"], dec["bn3"], "relu")
    return layer(y, dec["w4"], dec["b4"], None, "tanh")               # (B, P, 3)


# ---------------------------------------------------------------------------
# Test
# ---------------------------------------------------------------------------

if __name__ == "__main__":
    key = jax.random.PRNGKey(0)
    kx, kp, kg = jax.random.split(key, 3)
    params = make_params(kp, bottleneck=1024)

    def run(kx_, kg_, B, N, P):
        x = jax.random.normal(kx_, (B, 3, N), jnp.float32)            # PyTorch NCW
        rand_grid = sample_sphere(kg_, B, P)
        out = ae_atlasnet_sphere_forward(x, params, rand_grid=rand_grid,
                                         num_points=P, tn_enc=512, tn_dec=512,
                                         n_splits=2)
        out = jax.block_until_ready(out)
        ref = atlasnet_reference(x, rand_grid, params)
        assert out.shape == (B, P, 3)
        # bf16 matmul operands (f32 accumulation) -> loosened tolerance.
        assert jnp.allclose(out, ref, atol=4e-2, rtol=4e-2), \
            float(jnp.max(jnp.abs(out - ref)))

    # Tile-aligned case (small version of the module's default num_points=2048).
    run(kx, kg, B=2, N=1024, P=1024)
    # Non-tile-multiple point counts (exercises encoder + decoder padding paths).
    run(jax.random.fold_in(kx, 1), jax.random.fold_in(kg, 1), B=2, N=600, P=700)

    print("KERNEL_OK")
</pallas_src>

<mosaic_0001>
module attributes {stable_mosaic.version = 11 : i64} {
  func.func @_pointnetfeat_kernel(%arg0: i32, %arg1: i32, %arg2: i32, %arg3: memref<1x512x8xf32, #tpu.memory_space<vmem>>, %arg4: memref<8x64xf32, #tpu.memory_space<vmem>>, %arg5: memref<1x64xf32, #tpu.memory_space<vmem>>, %arg6: memref<64x128xbf16, #tpu.memory_space<vmem>>, %arg7: memref<1x128xf32, #tpu.memory_space<vmem>>, %arg8: memref<128x1024xbf16, #tpu.memory_space<vmem>>, %arg9: memref<1x1024xf32, #tpu.memory_space<vmem>>, %arg10: memref<1x1x8x1024xf32, #tpu.memory_space<vmem>>, %arg11: memref<8x1024xf32, #tpu.memory_space<vmem>>) attributes {dimension_semantics = [#tpu.dimension_semantics<parallel>, #tpu.dimension_semantics<parallel>, #tpu.dimension_semantics<arbitrary>], iteration_bounds = array<i64: 2, 2, 1>, scalar_prefetch = 0 : i64, scratch_operands = 1 : i64, tpu.core_type = #tpu.core_type<tc>, window_params = [{transform_indices = @transform_0, window_bounds = array<i64: 1, 512, 8>}, {pipeline_mode = #tpu.pipeline_mode<synchronous>, transform_indices = @transform_1, window_bounds = array<i64: 8, 64>}, {pipeline_mode = #tpu.pipeline_mode<synchronous>, transform_indices = @transform_2, window_bounds = array<i64: 1, 64>}, {pipeline_mode = #tpu.pipeline_mode<synchronous>, transform_indices = @transform_3, window_bounds = array<i64: 64, 128>}, {pipeline_mode = #tpu.pipeline_mode<synchronous>, transform_indices = @transform_4, window_bounds = array<i64: 1, 128>}, {pipeline_mode = #tpu.pipeline_mode<synchronous>, transform_indices = @transform_5, window_bounds = array<i64: 128, 1024>}, {pipeline_mode = #tpu.pipeline_mode<synchronous>, transform_indices = @transform_6, window_bounds = array<i64: 1, 1024>}, {transform_indices = @transform_7, window_bounds = array<i64: 1, 1, 8, 1024>}]} {
    %c0_i32 = arith.constant 0 : i32
    %0 = arith.cmpi eq, %arg2, %c0_i32 : i32
    %1 = arith.extui %0 : i1 to i32
    %c0_i32_0 = arith.constant 0 : i32
    %2 = arith.cmpi ne, %1, %c0_i32_0 : i32
    scf.if %2 {
      %cst_53 = arith.constant 0xFF800000 : f32
      %64 = vector.broadcast %cst_53 : f32 to vector<8x1024xf32>
      %c0_54 = arith.constant 0 : index
      %c0_55 = arith.constant 0 : index
      %65 = vector.load %arg11[%c0_54, %c0_55] : memref<8x1024xf32, #tpu.memory_space<vmem>>, vector<8x1024xf32>
      tpu.vector_store %arg11[%c0_54, %c0_55], %64 {strides = array<i32>} : memref<8x1024xf32, #tpu.memory_space<vmem>>, vector<8x1024xf32>,
    } else {
    }
    %c0 = arith.constant 0 : index
    %c0_1 = arith.constant 0 : index
    %c0_2 = arith.constant 0 : index
    %3 = vector.load %arg3[%c0, %c0_1, %c0_2] : memref<1x512x8xf32, #tpu.memory_space<vmem>>, vector<1x512x8xf32>
    %4 = vector.shape_cast %3 : vector<1x512x8xf32> to vector<512x8xf32>
    %c0_3 = arith.constant 0 : index
    %c0_4 = arith.constant 0 : index
    %5 = vector.load %arg4[%c0_3, %c0_4] : memref<8x64xf32, #tpu.memory_space<vmem>>, vector<8x64xf32>
    %cst = arith.constant dense<0.000000e+00> : vector<512x64xf32>
    %6 = tpu.matmul %4, %5, %cst {dimension_numbers = #tpu.dot_dimension_numbers<[1], [0], [0], [1], [0, 0, 1, 1], [], []>} : vector<512x8xf32>, vector<8x64xf32>, vector<512x64xf32> -> vector<512x64xf32>
    %c0_5 = arith.constant 0 : index
    %c0_6 = arith.constant 0 : index
    %7 = vector.load %arg5[%c0_5, %c0_6] : memref<1x64xf32, #tpu.memory_space<vmem>>, vector<1x64xf32>
    %8 = vector.broadcast %7 : vector<1x64xf32> to vector<512x64xf32>
    %9 = arith.addf %6, %8 : vector<512x64xf32>
    %cst_7 = arith.constant 0.000000e+00 : f32
    %10 = vector.broadcast %cst_7 : f32 to vector<512x64xf32>
    %11 = arith.maximumf %9, %10 : vector<512x64xf32>
    %12 = arith.truncf %11 : vector<512x64xf32> to vector<512x64xbf16>
    %c0_8 = arith.constant 0 : index
    %c0_9 = arith.constant 0 : index
    %13 = vector.load %arg6[%c0_8, %c0_9] : memref<64x128xbf16, #tpu.memory_space<vmem>>, vector<64x128xbf16>
    %cst_10 = arith.constant dense<0.000000e+00> : vector<512x128xf32>
    %14 = tpu.matmul %12, %13, %cst_10 {dimension_numbers = #tpu.dot_dimension_numbers<[1], [0], [0], [1], [0, 0, 1, 1], [], []>} : vector<512x64xbf16>, vector<64x128xbf16>, vector<512x128xf32> -> vector<512x128xf32>
    %c0_11 = arith.constant 0 : index
    %c0_12 = arith.constant 0 : index
    %15 = vector.load %arg7[%c0_11, %c0_12] : memref<1x128xf32, #tpu.memory_space<vmem>>, vector<1x128xf32>
    %16 = vector.broadcast %15 : vector<1x128xf32> to vector<512x128xf32>
    %17 = arith.addf %14, %16 : vector<512x128xf32>
    %cst_13 = arith.constant 0.000000e+00 : f32
    %18 = vector.broadcast %cst_13 : f32 to vector<512x128xf32>
    %19 = arith.maximumf %17, %18 : vector<512x128xf32>
    %20 = arith.truncf %19 : vector<512x128xf32> to vector<512x128xbf16>
    %c0_14 = arith.constant 0 : index
    %c0_15 = arith.constant 0 : index
    %21 = vector.load %arg8[%c0_14, %c0_15] : memref<128x1024xbf16, #tpu.memory_space<vmem>>, vector<128x256xbf16>
    %cst_16 = arith.constant dense<0.000000e+00> : vector<512x256xf32>
    %22 = tpu.matmul %20, %21, %cst_16 {dimension_numbers = #tpu.dot_dimension_numbers<[1], [0], [0], [1], [0, 0, 1, 1], [], []>} : vector<512x128xbf16>, vector<128x256xbf16>, vector<512x256xf32> -> vector<512x256xf32>
    %c0_17 = arith.constant 0 : index
    %c0_18 = arith.constant 0 : index
    %23 = vector.load %arg9[%c0_17, %c0_18] : memref<1x1024xf32, #tpu.memory_space<vmem>>, vector<1x256xf32>
    %24 = vector.broadcast %23 : vector<1x256xf32> to vector<512x256xf32>
    %25 = arith.addf %22, %24 : vector<512x256xf32>
    %26 = vector.shape_cast %25 : vector<512x256xf32> to vector<64x8x256xf32>
    %cst_19 = arith.constant dense<0xFF800000> : vector<8x256xf32>
    %27 = vector.multi_reduction <maximumf>, %26, %cst_19 [0] : vector<64x8x256xf32> to vector<8x256xf32>
    %c0_20 = arith.constant 0 : index
    %c0_21 = arith.constant 0 : index
    %28 = vector.load %arg11[%c0_20, %c0_21] : memref<8x1024xf32, #tpu.memory_space<vmem>>, vector<8x256xf32>
    %29 = arith.maximumf %28, %27 : vector<8x256xf32>
    %c0_22 = arith.constant 0 : index
    %c0_23 = arith.constant 0 : index
    %30 = vector.load %arg11[%c0_22, %c0_23] : memref<8x1024xf32, #tpu.memory_space<vmem>>, vector<8x256xf32>
    tpu.vector_store %arg11[%c0_22, %c0_23], %29 {strides = array<i32>} : memref<8x1024xf32, #tpu.memory_space<vmem>>, vector<8x256xf32>,
    %c0_24 = arith.constant 0 : index
    %c256 = arith.constant 256 : index
    %31 = vector.load %arg8[%c0_24, %c256] : memref<128x1024xbf16, #tpu.memory_space<vmem>>, vector<128x256xbf16>
    %cst_25 = arith.constant dense<0.000000e+00> : vector<512x256xf32>
    %32 = tpu.matmul %20, %31, %cst_25 {dimension_numbers = #tpu.dot_dimension_numbers<[1], [0], [0], [1], [0, 0, 1, 1], [], []>} : vector<512x128xbf16>, vector<128x256xbf16>, vector<512x256xf32> -> vector<512x256xf32>
    %c0_26 = arith.constant 0 : index
    %c256_27 = arith.constant 256 : index
    %33 = vector.load %arg9[%c0_26, %c256_27] : memref<1x1024xf32, #tpu.memory_space<vmem>>, vector<1x256xf32>
    %34 = vector.broadcast %33 : vector<1x256xf32> to vector<512x256xf32>
    %35 = arith.addf %32, %34 : vector<512x256xf32>
    %36 = vector.shape_cast %35 : vector<512x256xf32> to vector<64x8x256xf32>
    %cst_28 = arith.constant dense<0xFF800000> : vector<8x256xf32>
    %37 = vector.multi_reduction <maximumf>, %36, %cst_28 [0] : vector<64x8x256xf32> to vector<8x256xf32>
    %c0_29 = arith.constant 0 : index
    %c256_30 = arith.constant 256 : index
    %38 = vector.load %arg11[%c0_29, %c256_30] : memref<8x1024xf32, #tpu.memory_space<vmem>>, vector<8x256xf32>
    %39 = arith.maximumf %38, %37 : vector<8x256xf32>
    %c0_31 = arith.constant 0 : index
    %c256_32 = arith.constant 256 : index
    %40 = vector.load %arg11[%c0_31, %c256_32] : memref<8x1024xf32, #tpu.memory_space<vmem>>, vector<8x256xf32>
    tpu.vector_store %arg11[%c0_31, %c256_32], %39 {strides = array<i32>} : memref<8x1024xf32, #tpu.memory_space<vmem>>, vector<8x256xf32>,
    %c0_33 = arith.constant 0 : index
    %c512 = arith.constant 512 : index
    %41 = vector.load %arg8[%c0_33, %c512] : memref<128x1024xbf16, #tpu.memory_space<vmem>>, vector<128x256xbf16>
    %cst_34 = arith.constant dense<0.000000e+00> : vector<512x256xf32>
    %42 = tpu.matmul %20, %41, %cst_34 {dimension_numbers = #tpu.dot_dimension_numbers<[1], [0], [0], [1], [0, 0, 1, 1], [], []>} : vector<512x128xbf16>, vector<128x256xbf16>, vector<512x256xf32> -> vector<512x256xf32>
    %c0_35 = arith.constant 0 : index
    %c512_36 = arith.constant 512 : index
    %43 = vector.load %arg9[%c0_35, %c512_36] : memref<1x1024xf32, #tpu.memory_space<vmem>>, vector<1x256xf32>
    %44 = vector.broadcast %43 : vector<1x256xf32> to vector<512x256xf32>
    %45 = arith.addf %42, %44 : vector<512x256xf32>
    %46 = vector.shape_cast %45 : vector<512x256xf32> to vector<64x8x256xf32>
    %cst_37 = arith.constant dense<0xFF800000> : vector<8x256xf32>
    %47 = vector.multi_reduction <maximumf>, %46, %cst_37 [0] : vector<64x8x256xf32> to vector<8x256xf32>
    %c0_38 = arith.constant 0 : index
    %c512_39 = arith.constant 512 : index
    %48 = vector.load %arg11[%c0_38, %c512_39] : memref<8x1024xf32, #tpu.memory_space<vmem>>, vector<8x256xf32>
    %49 = arith.maximumf %48, %47 : vector<8x256xf32>
    %c0_40 = arith.constant 0 : index
    %c512_41 = arith.constant 512 : index
    %50 = vector.load %arg11[%c0_40, %c512_41] : memref<8x1024xf32, #tpu.memory_space<vmem>>, vector<8x256xf32>
    tpu.vector_store %arg11[%c0_40, %c512_41], %49 {strides = array<i32>} : memref<8x1024xf32, #tpu.memory_space<vmem>>, vector<8x256xf32>,
    %c0_42 = arith.constant 0 : index
    %c768 = arith.constant 768 : index
    %51 = vector.load %arg8[%c0_42, %c768] : memref<128x1024xbf16, #tpu.memory_space<vmem>>, vector<128x256xbf16>
    %cst_43 = arith.constant dense<0.000000e+00> : vector<512x256xf32>
    %52 = tpu.matmul %20, %51, %cst_43 {dimension_numbers = #tpu.dot_dimension_numbers<[1], [0], [0], [1], [0, 0, 1, 1], [], []>} : vector<512x128xbf16>, vector<128x256xbf16>, vector<512x256xf32> -> vector<512x256xf32>
    %c0_44 = arith.constant 0 : index
    %c768_45 = arith.constant 768 : index
    %53 = vector.load %arg9[%c0_44, %c768_45] : memref<1x1024xf32, #tpu.memory_space<vmem>>, vector<1x256xf32>
    %54 = vector.broadcast %53 : vector<1x256xf32> to vector<512x256xf32>
    %55 = arith.addf %52, %54 : vector<512x256xf32>
    %56 = vector.shape_cast %55 : vector<512x256xf32> to vector<64x8x256xf32>
    %cst_46 = arith.constant dense<0xFF800000> : vector<8x256xf32>
    %57 = vector.multi_reduction <maximumf>, %56, %cst_46 [0] : vector<64x8x256xf32> to vector<8x256xf32>
    %c0_47 = arith.constant 0 : index
    %c768_48 = arith.constant 768 : index
    %58 = vector.load %arg11[%c0_47, %c768_48] : memref<8x1024xf32, #tpu.memory_space<vmem>>, vector<8x256xf32>
    %59 = arith.maximumf %58, %57 : vector<8x256xf32>
    %c0_49 = arith.constant 0 : index
    %c768_50 = arith.constant 768 : index
    %60 = vector.load %arg11[%c0_49, %c768_50] : memref<8x1024xf32, #tpu.memory_space<vmem>>, vector<8x256xf32>
    tpu.vector_store %arg11[%c0_49, %c768_50], %59 {strides = array<i32>} : memref<8x1024xf32, #tpu.memory_space<vmem>>, vector<8x256xf32>,
    %c0_i32_51 = arith.constant 0 : i32
    %61 = arith.cmpi eq, %arg2, %c0_i32_51 : i32
    %62 = arith.extui %61 : i1 to i32
    %c0_i32_52 = arith.constant 0 : i32
    %63 = arith.cmpi ne, %62, %c0_i32_52 : i32
    scf.if %63 {
      %c0_53 = arith.constant 0 : index
      %c0_54 = arith.constant 0 : index
      %64 = vector.load %arg11[%c0_53, %c0_54] : memref<8x1024xf32, #tpu.memory_space<vmem>>, vector<8x1024xf32>
      %65 = vector.shape_cast %64 : vector<8x1024xf32> to vector<1x1x8x1024xf32>
      %c0_55 = arith.constant 0 : index
      %c0_56 = arith.constant 0 : index
      %c0_57 = arith.constant 0 : index
      %c0_58 = arith.constant 0 : index
      %66 = vector.load %arg10[%c0_55, %c0_56, %c0_57, %c0_58] : memref<1x1x8x1024xf32, #tpu.memory_space<vmem>>, vector<1x1x8x1024xf32>
      tpu.vector_store %arg10[%c0_55, %c0_56, %c0_57, %c0_58], %65 {strides = array<i32>} : memref<1x1x8x1024xf32, #tpu.memory_space<vmem>>, vector<1x1x8x1024xf32>,
    } else {
    }
    return
  }
  func.func @transform_0(%arg0: i32, %arg1: i32, %arg2: i32) -> (i32, i32, i32) {
    %c1_i32 = arith.constant 1 : i32
    %0 = arith.muli %arg1, %c1_i32 : i32
    %1 = arith.addi %0, %arg2 : i32
    %c0_i32 = arith.constant 0 : i32
    %c0_i32_0 = arith.constant 0 : i32
    return %arg0, %1, %c0_i32 : i32, i32, i32
  }
  func.func @transform_1(%arg0: i32, %arg1: i32, %arg2: i32) -> (i32, i32) {
    %c0_i32 = arith.constant 0 : i32
    %c0_i32_0 = arith.constant 0 : i32
    %c0_i32_1 = arith.constant 0 : i32
    return %c0_i32, %c0_i32_0 : i32, i32
  }
  func.func @transform_2(%arg0: i32, %arg1: i32, %arg2: i32) -> (i32, i32) {
    %c0_i32 = arith.constant 0 : i32
    %c0_i32_0 = arith.constant 0 : i32
    %c0_i32_1 = arith.constant 0 : i32
    return %c0_i32, %c0_i32_0 : i32, i32
  }
  func.func @transform_3(%arg0: i32, %arg1: i32, %arg2: i32) -> (i32, i32) {
    %c0_i32 = arith.constant 0 : i32
    %c0_i32_0 = arith.constant 0 : i32
    %c0_i32_1 = arith.constant 0 : i32
    return %c0_i32, %c0_i32_0 : i32, i32
  }
  func.func @transform_4(%arg0: i32, %arg1: i32, %arg2: i32) -> (i32, i32) {
    %c0_i32 = arith.constant 0 : i32
    %c0_i32_0 = arith.constant 0 : i32
    %c0_i32_1 = arith.constant 0 : i32
    return %c0_i32, %c0_i32_0 : i32, i32
  }
  func.func @transform_5(%arg0: i32, %arg1: i32, %arg2: i32) -> (i32, i32) {
    %c0_i32 = arith.constant 0 : i32
    %c0_i32_0 = arith.constant 0 : i32
    %c0_i32_1 = arith.constant 0 : i32
    return %c0_i32, %c0_i32_0 : i32, i32
  }
  func.func @transform_6(%arg0: i32, %arg1: i32, %arg2: i32) -> (i32, i32) {
    %c0_i32 = arith.constant 0 : i32
    %c0_i32_0 = arith.constant 0 : i32
    %c0_i32_1 = arith.constant 0 : i32
    return %c0_i32, %c0_i32_0 : i32, i32
  }
  func.func @transform_7(%arg0: i32, %arg1: i32, %arg2: i32) -> (i32, i32, i32, i32) {
    %c0_i32 = arith.constant 0 : i32
    %c0_i32_0 = arith.constant 0 : i32
    %c0_i32_1 = arith.constant 0 : i32
    return %arg0, %arg1, %c0_i32, %c0_i32_0 : i32, i32, i32, i32
  }
}

</mosaic_0001>

<llo_original>
// kernel: tpu_custom_call.1
$region0: #{tpu_custom_call.1}
  #allocation0 [shape = 'u32[]', space=smem, size = 0x4, offset = 0x4, fixed_abs, tag = 'smem constant byte address 0x4 - core index']
  #allocation1 [shape = 'u32[72,128]{1,0:T(1,128)}', space=vmem, size = 0x9000, scoped, tag = 'internal scratch']
  #allocation2 [shape = 'f32[8,1024]{1,0:T(8,128)}', space=vmem, size = 0x8000, scoped, tag = 'scratch operand']
  %s0 = inlined_call_operand.vmem [shape: f32[2,1024,8], index: 0, kind: input, shape index: {}]
  %s1 = inlined_call_operand.vmem [shape: f32[8,64], index: 1, kind: input, shape index: {}]
  %s2 = inlined_call_operand.vmem [shape: f32[1,64], index: 2, kind: input, shape index: {}]
  %s3 = inlined_call_operand.vmem [shape: bf16[64,128], index: 3, kind: input, shape index: {}]
  %s4 = inlined_call_operand.vmem [shape: f32[1,128], index: 4, kind: input, shape index: {}]
  %s5 = inlined_call_operand.vmem [shape: bf16[128,1024], index: 5, kind: input, shape index: {}]
  %s6 = inlined_call_operand.vmem [shape: f32[1,1024], index: 6, kind: input, shape index: {}]
  %s7 = inlined_call_operand.hbm [shape: f32[2,2,8,1024], index: 7, kind: output, shape index: {}]
  %s8 = sld [smem:[#allocation0]]
  $region69: #{tpu_custom_call.1} parent=0
    _
  %s10 = ssub.s32 1, %s8
  %s11 = scalar_select 0, %s10, %s8
  $region1: #{tpu_custom_call.1} parent=0
    #allocation3 [shape = 'u8[65536]{0}', space=vmem, size = 0x10000, scoped, tag = 'output window, operand 0']
    #allocation4 [shape = 's32[2]{0}', space=sflag, size = 0x8, scoped, tag = 'scoped memory for tpu_custom_call.1']
    %12 = vsyncpa [#allocation4], 0
    %s13 = scalar_lea.sflag [#allocation4], 1
    %14 = vsyncpa %s13, 0
    loop: start=0, step=1, limit=6
    $region2: #{tpu_custom_call.1} parent=1 // loop_pre_header
      _
    $region3: #{tpu_custom_call.1} parent=1 // loop_header
      %s16 = sphi 0, %s20
      %p17 = scmp.ge.s32.totalorder %s16, 6
      %s23 = sphi 0, %s42
      %s24 = sphi 0, %s38
      %s25 = sphi 0, %s34
      %s26 = sphi 0, %s23
      %s27 = sphi 0, %s24
      %s28 = sphi 0, %s25
      %s29 = sphi 0, %s26
      %s30 = sphi 0, %s27
      %s31 = sphi 0, %s28
      %s49 = sphi 0, %s51
      %s52 = sphi 0, %s49
      %s53 = sphi 0, %s52
      %s69 = sphi 0, %s53
      %s73 = sphi 0, %s73
      %s75 = sphi 0, %s73
      %s76 = sphi 0, %s75
      %s90 = sphi 0, %s76
      %s94 = sphi 0, %s94
      %s96 = sphi 0, %s94
      %s97 = sphi 0, %s96
      %s111 = sphi 0, %s97
      %s115 = sphi 0, %s115
      %s117 = sphi 0, %s115
      %s118 = sphi 0, %s117
      %s132 = sphi 0, %s118
      %s136 = sphi 0, %s136
      %s138 = sphi 0, %s136
      %s139 = sphi 0, %s138
      %s153 = sphi 0, %s139
      %s157 = sphi 0, %s157
      %s159 = sphi 0, %s157
      %s160 = sphi 0, %s159
      %s174 = sphi 0, %s160
      %s178 = sphi 0, %s178
      %s180 = sphi 0, %s178
      %s181 = sphi 0, %s180
      %s195 = sphi 0, %s181
      %s203 = sphi 0, %s205
      %s206 = sphi 0, %s203
      %s207 = sphi 0, %s206
      %s223 = sphi 0, %s207
    $region4: #{tpu_custom_call.1} parent=1 // loop_header_branch
      %19 = sbr.rel (%p17) target = $region8
    $region5: #{tpu_custom_call.1} parent=1 // loop_body
      %s21 = ssub.s32 %s16, 1
      %s22 = ssub.s32 %s16, 2
      %s32 = sadd.s32 1, %s25
      %p33 = scmp.ge.s32.totalorder %s32, 1
      %s34 = scalar_select %p33, 0, %s32
      %s35 = sadd.s32 1, %s24
      %s36 = scalar_select %p33, %s35, %s24
      %p37 = scmp.ge.s32.totalorder %s36, 2
      %s38 = scalar_select %p37, 0, %s36
      %s39 = sadd.s32 1, %s23
      %s40 = scalar_select %p37, %s39, %s23
      %p41 = scmp.ge.s32.totalorder %s40, 2
      %s42 = scalar_select %p41, 0, %s40
      %s43 = sadd.s32 %s24, %s25
      %s44 = sadd.s32 %s38, %s34
      %s45 = ssub.s32 %s23, %s42
      %s46 = ssub.s32 %s43, %s44
      %s47 = sor.u32 %s45, %s46
      %p48 = scmp.eq.s32.totalorder %s47, 0
      %s50 = sadd.s32 %s49, 1
      %s51 = scalar_select %p48, %s49, %s50
      %p54 = pneg %p48
      %p55 = scmp.eq.s32.totalorder %s16, 3
      %p56 = por %p54, %p55
      %p57 = scmp.ne.s32.totalorder %s49, %s52
      %p58 = scmp.eq.s32.totalorder %s16, 0
      %p59 = por %p57, %p58
      %p60 = scmp.ne.s32.totalorder %s49, %s52
      %p61 = scmp.eq.s32.totalorder %s21, 3
      %p62 = por %p60, %p61
      %p63 = scmp.ne.s32.totalorder %s52, %s53
      %p64 = scmp.eq.s32.totalorder %s21, 0
      %p65 = por %p63, %p64
      %p66 = scmp.ne.s32.totalorder %s52, %s53
      %p67 = scmp.eq.s32.totalorder %s22, 3
      %p68 = por %p66, %p67
      %p70 = scmp.ne.s32.totalorder %s53, %s69
      %p71 = scmp.eq.s32.totalorder %s22, 0
      %p72 = por %p70, %p71
      %s74 = sadd.s32 %s73, 1
      %p77 = scmp.eq.s32.totalorder %s16, 3
      %p78 = scmp.ne.s32.totalorder %s73, %s75
      %p79 = scmp.eq.s32.totalorder %s16, 0
      %p80 = por %p78, %p79
      %p81 = scmp.ne.s32.totalorder %s73, %s75
      %p82 = scmp.eq.s32.totalorder %s21, 3
      %p83 = por %p81, %p82
      %p84 = scmp.ne.s32.totalorder %s75, %s76
      %p85 = scmp.eq.s32.totalorder %s21, 0
      %p86 = por %p84, %p85
      %p87 = scmp.ne.s32.totalorder %s75, %s76
      %p88 = scmp.eq.s32.totalorder %s22, 3
      %p89 = por %p87, %p88
      %p91 = scmp.ne.s32.totalorder %s76, %s90
      %p92 = scmp.eq.s32.totalorder %s22, 0
      %p93 = por %p91, %p92
      %s95 = sadd.s32 %s94, 1
      %p98 = scmp.eq.s32.totalorder %s16, 3
      %p99 = scmp.ne.s32.totalorder %s94, %s96
      %p100 = scmp.eq.s32.totalorder %s16, 0
      %p101 = por %p99, %p100
      %p102 = scmp.ne.s32.totalorder %s94, %s96
      %p103 = scmp.eq.s32.totalorder %s21, 3
      %p104 = por %p102, %p103
      %p105 = scmp.ne.s32.totalorder %s96, %s97
      %p106 = scmp.eq.s32.totalorder %s21, 0
      %p107 = por %p105, %p106
      %p108 = scmp.ne.s32.totalorder %s96, %s97
      %p109 = scmp.eq.s32.totalorder %s22, 3
      %p110 = por %p108, %p109
      %p112 = scmp.ne.s32.totalorder %s97, %s111
      %p113 = scmp.eq.s32.totalorder %s22, 0
      %p114 = por %p112, %p113
      %s116 = sadd.s32 %s115, 1
      %p119 = scmp.eq.s32.totalorder %s16, 3
      %p120 = scmp.ne.s32.totalorder %s115, %s117
      %p121 = scmp.eq.s32.totalorder %s16, 0
      %p122 = por %p120, %p121
      %p123 = scmp.ne.s32.totalorder %s115, %s117
      %p124 = scmp.eq.s32.totalorder %s21, 3
      %p125 = por %p123, %p124
      %p126 = scmp.ne.s32.totalorder %s117, %s118
      %p127 = scmp.eq.s32.totalorder %s21, 0
      %p128 = por %p126, %p127
      %p129 = scmp.ne.s32.totalorder %s117, %s118
      %p130 = scmp.eq.s32.totalorder %s22, 3
      %p131 = por %p129, %p130
      %p133 = scmp.ne.s32.totalorder %s118, %s132
      %p134 = scmp.eq.s32.totalorder %s22, 0
      %p135 = por %p133, %p134
      %s137 = sadd.s32 %s136, 1
      %p140 = scmp.eq.s32.totalorder %s16, 3
      %p141 = scmp.ne.s32.totalorder %s136, %s138
      %p142 = scmp.eq.s32.totalorder %s16, 0
      %p143 = por %p141, %p142
      %p144 = scmp.ne.s32.totalorder %s136, %s138
      %p145 = scmp.eq.s32.totalorder %s21, 3
      %p146 = por %p144, %p145
      %p147 = scmp.ne.s32.totalorder %s138, %s139
      %p148 = scmp.eq.s32.totalorder %s21, 0
      %p149 = por %p147, %p148
      %p150 = scmp.ne.s32.totalorder %s138, %s139
      %p151 = scmp.eq.s32.totalorder %s22, 3
      %p152 = por %p150, %p151
      %p154 = scmp.ne.s32.totalorder %s139, %s153
      %p155 = scmp.eq.s32.totalorder %s22, 0
      %p156 = por %p154, %p155
      %s158 = sadd.s32 %s157, 1
      %p161 = scmp.eq.s32.totalorder %s16, 3
      %p162 = scmp.ne.s32.totalorder %s157, %s159
      %p163 = scmp.eq.s32.totalorder %s16, 0
      %p164 = por %p162, %p163
      %p165 = scmp.ne.s32.totalorder %s157, %s159
      %p166 = scmp.eq.s32.totalorder %s21, 3
      %p167 = por %p165, %p166
      %p168 = scmp.ne.s32.totalorder %s159, %s160
      %p169 = scmp.eq.s32.totalorder %s21, 0
      %p170 = por %p168, %p169
      %p171 = scmp.ne.s32.totalorder %s159, %s160
      %p172 = scmp.eq.s32.totalorder %s22, 3
      %p173 = por %p171, %p172
      %p175 = scmp.ne.s32.totalorder %s160, %s174
      %p176 = scmp.eq.s32.totalorder %s22, 0
      %p177 = por %p175, %p176
      %s179 = sadd.s32 %s178, 1
      %p182 = scmp.eq.s32.totalorder %s16, 3
      %p183 = scmp.ne.s32.totalorder %s178, %s180
      %p184 = scmp.eq.s32.totalorder %s16, 0
      %p185 = por %p183, %p184
      %p186 = scmp.ne.s32.totalorder %s178, %s180
      %p187 = scmp.eq.s32.totalorder %s21, 3
      %p188 = por %p186, %p187
      %p189 = scmp.ne.s32.totalorder %s180, %s181
      %p190 = scmp.eq.s32.totalorder %s21, 0
      %p191 = por %p189, %p190
      %p192 = scmp.ne.s32.totalorder %s180, %s181
      %p193 = scmp.eq.s32.totalorder %s22, 3
      %p194 = por %p192, %p193
      %p196 = scmp.ne.s32.totalorder %s181, %s195
      %p197 = scmp.eq.s32.totalorder %s22, 0
      %p198 = por %p196, %p197
      %s199 = ssub.s32 %s23, %s42
      %s200 = ssub.s32 %s24, %s38
      %s201 = sor.u32 %s199, %s200
      %p202 = scmp.eq.s32.totalorder %s201, 0
      %s204 = sadd.s32 %s203, 1
      %s205 = scalar_select %p202, %s203, %s204
      %p208 = pneg %p202
      %p209 = scmp.eq.s32.totalorder %s16, 3
      %p210 = por %p208, %p209
      %p211 = scmp.ne.s32.totalorder %s203, %s206
      %p212 = scmp.eq.s32.totalorder %s16, 0
      %p213 = por %p211, %p212
      %p214 = scmp.ne.s32.totalorder %s203, %s206
      %p215 = scmp.eq.s32.totalorder %s21, 3
      %p216 = por %p214, %p215
      %p217 = scmp.ne.s32.totalorder %s206, %s207
      %p218 = scmp.eq.s32.totalorder %s21, 0
      %p219 = por %p217, %p218
      %p220 = scmp.ne.s32.totalorder %s206, %s207
      %p221 = scmp.eq.s32.totalorder %s22, 3
      %p222 = por %p220, %p221
      %p224 = scmp.ne.s32.totalorder %s207, %s223
      %p225 = scmp.eq.s32.totalorder %s22, 0
      %p226 = por %p224, %p225
      %p227 = scmp.le.s32.totalorder 1, %s16
      %p228 = scmp.lt.s32.totalorder %s16, 5
      %p229 = pnand %p227, %p228
      %p230 = pneg %p229
      // Predicated region
      $region9: #{tpu_custom_call.1} parent=5 // pred_check
        _
      $region10: #{tpu_custom_call.1} parent=5 // pred_check_branch
        %232 = sbr.rel (%p229) target = $region12
      $region11: #{tpu_custom_call.1} parent=5 // pred_region
        %s233 = ssub.s32 %s16, 1
        // Predicated region
        $region13: #{tpu_custom_call.1} parent=11 // pred_check
          %p234 = pneg %p86
        $region14: #{tpu_custom_call.1} parent=11 // pred_check_branch
          %236 = sbr.rel (%p234) target = $region16
        $region15: #{tpu_custom_call.1} parent=11 // pred_region
          _
        $region16: #{tpu_custom_call.1} parent=11 // pred_fallthru
          _
        // Predicated region
        $region17: #{tpu_custom_call.1} parent=11 // pred_check
          %p237 = pneg %p107
        $region18: #{tpu_custom_call.1} parent=11 // pred_check_branch
          %239 = sbr.rel (%p237) target = $region20
        $region19: #{tpu_custom_call.1} parent=11 // pred_region
          _
        $region20: #{tpu_custom_call.1} parent=11 // pred_fallthru
          _
        // Predicated region
        $region21: #{tpu_custom_call.1} parent=11 // pred_check
          %p240 = pneg %p128
        $region22: #{tpu_custom_call.1} parent=11 // pred_check_branch
          %242 = sbr.rel (%p240) target = $region24
        $region23: #{tpu_custom_call.1} parent=11 // pred_region
          _
        $region24: #{tpu_custom_call.1} parent=11 // pred_fallthru
          _
        // Predicated region
        $region25: #{tpu_custom_call.1} parent=11 // pred_check
          %p243 = pneg %p149
        $region26: #{tpu_custom_call.1} parent=11 // pred_check_branch
          %245 = sbr.rel (%p243) target = $region28
        $region27: #{tpu_custom_call.1} parent=11 // pred_region
          _
        $region28: #{tpu_custom_call.1} parent=11 // pred_fallthru
          _
        // Predicated region
        $region29: #{tpu_custom_call.1} parent=11 // pred_check
          %p246 = pneg %p170
        $region30: #{tpu_custom_call.1} parent=11 // pred_check_branch
          %248 = sbr.rel (%p246) target = $region32
        $region31: #{tpu_custom_call.1} parent=11 // pred_region
          _
        $region32: #{tpu_custom_call.1} parent=11 // pred_fallthru
          _
        // Predicated region
        $region33: #{tpu_custom_call.1} parent=11 // pred_check
          %p249 = pneg %p191
        $region34: #{tpu_custom_call.1} parent=11 // pred_check_branch
          %251 = sbr.rel (%p249) target = $region36
        $region35: #{tpu_custom_call.1} parent=11 // pred_region
          _
        $region36: #{tpu_custom_call.1} parent=11 // pred_fallthru
          _
      $region12: #{tpu_custom_call.1} parent=5 // pred_fallthru
        _
      %p252 = scmp.lt.s32.totalorder %s16, 4
      // Predicated region
      $region37: #{tpu_custom_call.1} parent=5 // pred_check
        %p253 = pneg %p252
      $region38: #{tpu_custom_call.1} parent=5 // pred_check_branch
        %255 = sbr.rel (%p253) target = $region40
      $region39: #{tpu_custom_call.1} parent=5 // pred_region
        // Predicated region
        $region41: #{tpu_custom_call.1} parent=39 // pred_check
          %p256 = pneg %p59
        $region42: #{tpu_custom_call.1} parent=39 // pred_check_branch
          %258 = sbr.rel (%p256) target = $region44
        $region43: #{tpu_custom_call.1} parent=39 // pred_region
          %s259 = sadd.s32 %s24, %s25
          %s260 = smul.u32 64, %s259
          %p261 = scmp.lt.s32.totalorder %s23, 1
          %s262 = scalar_select %p261, %s23, 1
          %p263 = scmp.lt.s32.totalorder %s260, 127
          %s264 = scalar_select %p263, %s260, 127
          %s265 = smul.addr %s262, 128
          %s266 = sadd.s32 %s264, %s265
          %s267 = smul.addr %s266, 8
          %s268 = scalar_lea.vmem %s0, %s267
          %s269 = sadd.s32 %s24, %s25
          %s270 = smul.u32 64, %s269
        $region44: #{tpu_custom_call.1} parent=39 // pred_fallthru
          _
      $region40: #{tpu_custom_call.1} parent=5 // pred_fallthru
        _
      %p271 = scmp.le.s32.totalorder 1, %s16
      %p272 = scmp.lt.s32.totalorder %s16, 5
      %p273 = pnand %p271, %p272
      %p274 = pneg %p273
      // Predicated region
      $region45: #{tpu_custom_call.1} parent=5 // pred_check
        _
      $region46: #{tpu_custom_call.1} parent=5 // pred_check_branch
        %276 = sbr.rel (%p273) target = $region48
      $region47: #{tpu_custom_call.1} parent=5 // pred_region
        %s277 = ssub.s32 %s16, 1
        %s278 = sadd.s32 %s27, %s28
        %s279 = smul.u32 64, %s278
        %p280 = scmp.lt.s32.totalorder %s26, 1
        %s281 = scalar_select %p280, %s26, 1
        %p282 = scmp.lt.s32.totalorder %s279, 127
        %s283 = scalar_select %p282, %s279, 127
        %s284 = smul.addr %s281, 128
        %s285 = sadd.s32 %s283, %s284
        %s286 = smul.addr %s285, 8
        %s287 = scalar_lea.vmem %s0, %s286
        %p288 = pneg %p65
        %p289 = pneg %p62
        %p290 = pneg %p86
        %p291 = pneg %p83
        %p292 = pneg %p107
        %p293 = pneg %p104
        %p294 = pneg %p128
        %p295 = pneg %p125
        %p296 = pneg %p149
        %p297 = pneg %p146
        %p298 = pneg %p170
        %p299 = pneg %p167
        %p300 = pneg %p191
        %p301 = pneg %p188
        %p302 = pneg %p219
        %p303 = pneg %p216
        %s304 = sand.u32 %s206, 1
        %s305 = scalar_lea.sflag [#allocation4], %s304
        %s306 = sand.u32 %s206, 1
        %s307 = smul.addr %s306, 64
        %s308 = scalar_lea.vmem [#allocation3], %s307
        %s309 = sadd.s32 %s27, %s28
        %s310 = smul.u32 64, %s309
        %p311 = scmp.lt.s32.totalorder %s26, 1
        %s312 = scalar_select %p311, %s26, 1
        %p313 = scmp.lt.s32.totalorder %s310, 127
        %s314 = scalar_select %p313, %s310, 127
        %s315 = smul.addr %s312, 128
        %s316 = sadd.s32 %s314, %s315
        %s317 = smul.addr %s316, 8
        %s318 = scalar_lea.vmem %s0, %s317
        %s319 = sadd.s32 %s27, %s28
        %s320 = smul.u32 64, %s319
        %p322 = scmp.eq.s32.totalorder %s28, 0
        // Predicated region
        $region49: #{tpu_custom_call.1} parent=47 // pred_check
          %p323 = pneg %p322
        $region50: #{tpu_custom_call.1} parent=47 // pred_check_branch
          %325 = sbr.rel (%p323) target = $region52
        $region51: #{tpu_custom_call.1} parent=47 // pred_region
          %326 = vst [vmem:[#allocation2] sm:$0xff] -inf
          %327 = vst [vmem:[#allocation2 + $0x8] sm:$0xff] -inf
          %328 = vst [vmem:[#allocation2 + $0x10] sm:$0xff] -inf
          %329 = vst [vmem:[#allocation2 + $0x18] sm:$0xff] -inf
          %330 = vst [vmem:[#allocation2 + $0x20] sm:$0xff] -inf
          %331 = vst [vmem:[#allocation2 + $0x28] sm:$0xff] -inf
          %332 = vst [vmem:[#allocation2 + $0x30] sm:$0xff] -inf
          %333 = vst [vmem:[#allocation2 + $0x38] sm:$0xff] -inf
        $region52: #{tpu_custom_call.1} parent=47 // pred_fallthru
          _
        %v334 = vld [vmem:[%s318] sm:$0xff]
        %v335 = vld [vmem:[%s318 + $0x8] sm:$0xff]
        %v336 = vld [vmem:[%s318 + $0x10] sm:$0xff]
        %v337 = vld [vmem:[%s318 + $0x18] sm:$0xff]
        %v338 = vld [vmem:[%s318 + $0x20] sm:$0xff]
        %v339 = vld [vmem:[%s318 + $0x28] sm:$0xff]
        %v340 = vld [vmem:[%s318 + $0x30] sm:$0xff]
        %v341 = vld [vmem:[%s318 + $0x38] sm:$0xff]
        %v342 = vld [vmem:[%s318 + $0x40] sm:$0xff]
        %v343 = vld [vmem:[%s318 + $0x48] sm:$0xff]
        %v344 = vld [vmem:[%s318 + $0x50] sm:$0xff]
        %v345 = vld [vmem:[%s318 + $0x58] sm:$0xff]
        %v346 = vld [vmem:[%s318 + $0x60] sm:$0xff]
        %v347 = vld [vmem:[%s318 + $0x68] sm:$0xff]
        %v348 = vld [vmem:[%s318 + $0x70] sm:$0xff]
        %v349 = vld [vmem:[%s318 + $0x78] sm:$0xff]
        %v350 = vld [vmem:[%s318 + $0x80] sm:$0xff]
        %v351 = vld [vmem:[%s318 + $0x88] sm:$0xff]
        %v352 = vld [vmem:[%s318 + $0x90] sm:$0xff]
        %v353 = vld [vmem:[%s318 + $0x98] sm:$0xff]
        %v354 = vld [vmem:[%s318 + $0xa0] sm:$0xff]
        %v355 = vld [vmem:[%s318 + $0xa8] sm:$0xff]
        %v356 = vld [vmem:[%s318 + $0xb0] sm:$0xff]
        %v357 = vld [vmem:[%s318 + $0xb8] sm:$0xff]
        %v358 = vld [vmem:[%s318 + $0xc0] sm:$0xff]
        %v359 = vld [vmem:[%s318 + $0xc8] sm:$0xff]
        %v360 = vld [vmem:[%s318 + $0xd0] sm:$0xff]
        %v361 = vld [vmem:[%s318 + $0xd8] sm:$0xff]
        %v362 = vld [vmem:[%s318 + $0xe0] sm:$0xff]
        %v363 = vld [vmem:[%s318 + $0xe8] sm:$0xff]
        %v364 = vld [vmem:[%s318 + $0xf0] sm:$0xff]
        %v365 = vld [vmem:[%s318 + $0xf8] sm:$0xff]
        %v366 = vld [vmem:[%s318 + $0x100] sm:$0xff]
        %v367 = vld [vmem:[%s318 + $0x108] sm:$0xff]
        %v368 = vld [vmem:[%s318 + $0x110] sm:$0xff]
        %v369 = vld [vmem:[%s318 + $0x118] sm:$0xff]
        %v370 = vld [vmem:[%s318 + $0x120] sm:$0xff]
        %v371 = vld [vmem:[%s318 + $0x128] sm:$0xff]
        %v372 = vld [vmem:[%s318 + $0x130] sm:$0xff]
        %v373 = vld [vmem:[%s318 + $0x138] sm:$0xff]
        %v374 = vld [vmem:[%s318 + $0x140] sm:$0xff]
        %v375 = vld [vmem:[%s318 + $0x148] sm:$0xff]
        %v376 = vld [vmem:[%s318 + $0x150] sm:$0xff]
        %v377 = vld [vmem:[%s318 + $0x158] sm:$0xff]
        %v378 = vld [vmem:[%s318 + $0x160] sm:$0xff]
        %v379 = vld [vmem:[%s318 + $0x168] sm:$0xff]
        %v380 = vld [vmem:[%s318 + $0x170] sm:$0xff]
        %v381 = vld [vmem:[%s318 + $0x178] sm:$0xff]
        %v382 = vld [vmem:[%s318 + $0x180] sm:$0xff]
        %v383 = vld [vmem:[%s318 + $0x188] sm:$0xff]
        %v384 = vld [vmem:[%s318 + $0x190] sm:$0xff]
        %v385 = vld [vmem:[%s318 + $0x198] sm:$0xff]
        %v386 = vld [vmem:[%s318 + $0x1a0] sm:$0xff]
        %v387 = vld [vmem:[%s318 + $0x1a8] sm:$0xff]
        %v388 = vld [vmem:[%s318 + $0x1b0] sm:$0xff]
        %v389 = vld [vmem:[%s318 + $0x1b8] sm:$0xff]
        %v390 = vld [vmem:[%s318 + $0x1c0] sm:$0xff]
        %v391 = vld [vmem:[%s318 + $0x1c8] sm:$0xff]
        %v392 = vld [vmem:[%s318 + $0x1d0] sm:$0xff]
        %v393 = vld [vmem:[%s318 + $0x1d8] sm:$0xff]
        %v394 = vld [vmem:[%s318 + $0x1e0] sm:$0xff]
        %v395 = vld [vmem:[%s318 + $0x1e8] sm:$0xff]
        %v396 = vld [vmem:[%s318 + $0x1f0] sm:$0xff]
        %v397 = vld [vmem:[%s318 + $0x1f8] sm:$0xff]
        %v398 = vld [vmem:[%s1] sm:$0xff]
        %v399 = vld [vmem:[%s2] sm:$0x1]
        %v401 = vperm.slane %v399, 0
        %vm403 = vcmask 64512
        %v405 = vsel %vm403, %v334, 0
        %v408 = vsel %vm403, %v335, 0
        %v411 = vsel %vm403, %v336, 0
        %v414 = vsel %vm403, %v337, 0
        %v417 = vsel %vm403, %v338, 0
        %v420 = vsel %vm403, %v339, 0
        %v423 = vsel %vm403, %v340, 0
        %v426 = vsel %vm403, %v341, 0
        %v429 = vsel %vm403, %v342, 0
        %v432 = vsel %vm403, %v343, 0
        %v435 = vsel %vm403, %v344, 0
        %v438 = vsel %vm403, %v345, 0
        %v441 = vsel %vm403, %v346, 0
        %v444 = vsel %vm403, %v347, 0
        %v447 = vsel %vm403, %v348, 0
        %v450 = vsel %vm403, %v349, 0
        %v453 = vsel %vm403, %v350, 0
        %v456 = vsel %vm403, %v351, 0
        %v459 = vsel %vm403, %v352, 0
        %v462 = vsel %vm403, %v353, 0
        %v465 = vsel %vm403, %v354, 0
        %v468 = vsel %vm403, %v355, 0
        %v471 = vsel %vm403, %v356, 0
        %v474 = vsel %vm403, %v357, 0
        %v477 = vsel %vm403, %v358, 0
        %v480 = vsel %vm403, %v359, 0
        %v483 = vsel %vm403, %v360, 0
        %v486 = vsel %vm403, %v361, 0
        %v489 = vsel %vm403, %v362, 0
        %v492 = vsel %vm403, %v363, 0
        %v495 = vsel %vm403, %v364, 0
        %v498 = vsel %vm403, %v365, 0
        %v501 = vsel %vm403, %v366, 0
        %v504 = vsel %vm403, %v367, 0
        %v507 = vsel %vm403, %v368, 0
        %v510 = vsel %vm403, %v369, 0
        %v513 = vsel %vm403, %v370, 0
        %v516 = vsel %vm403, %v371, 0
        %v519 = vsel %vm403, %v372, 0
        %v522 = vsel %vm403, %v373, 0
        %v525 = vsel %vm403, %v374, 0
        %v528 = vsel %vm403, %v375, 0
        %v531 = vsel %vm403, %v376, 0
        %v534 = vsel %vm403, %v377, 0
        %v537 = vsel %vm403, %v378, 0
        %v540 = vsel %vm403, %v379, 0
        %v543 = vsel %vm403, %v380, 0
        %v546 = vsel %vm403, %v381, 0
        %v549 = vsel %vm403, %v382, 0
        %v552 = vsel %vm403, %v383, 0
        %v555 = vsel %vm403, %v384, 0
        %v558 = vsel %vm403, %v385, 0
        %v561 = vsel %vm403, %v386, 0
        %v564 = vsel %vm403, %v387, 0
        %v567 = vsel %vm403, %v388, 0
        %v570 = vsel %vm403, %v389, 0
        %v573 = vsel %vm403, %v390, 0
        %v576 = vsel %vm403, %v391, 0
        %v579 = vsel %vm403, %v392, 0
        %v582 = vsel %vm403, %v393, 0
        %v585 = vsel %vm403, %v394, 0
        %v588 = vsel %vm403, %v395, 0
        %v591 = vsel %vm403, %v396, 0
        %v594 = vsel %vm403, %v397, 0
        %596 = vmatpush.msra.mxu0 0.0
        %597 = vmatpush.msra.mxu0 0.0
        %598 = vmatpush.msra.mxu0 0.0
        %599 = vmatpush.msra.mxu0 0.0
        %600 = vmatpush.msra.mxu0 0.0
        %601 = vmatpush.msra.mxu0 0.0
        %602 = vmatpush.msra.mxu0 0.0
        %603 = vmatpush.msra.mxu0 0.0
        %604 = vmatpush.msra.mxu0 0.0
        %605 = vmatpush.msra.mxu0 0.0
        %606 = vmatpush.msra.mxu0 0.0
        %607 = vmatpush.msra.mxu0 0.0
        %608 = vmatpush.msra.mxu0 0.0
        %609 = vmatpush.msra.mxu0 0.0
        %610 = vmatpush.msra.mxu0 0.0
        %611 = vmatpush.msra.mxu0 %v398
        %612 = vmatmul.f32.gmra.mxu0 %v405
        %v613 = vpop.f32.mrf.mxu0
        %v614 = vadd.f32 %v401, %v613
        %615 = vmatmul.f32.gmra.mxu0 %v408
        %v616 = vpop.f32.mrf.mxu0
        %v617 = vadd.f32 %v401, %v616
        %618 = vmatmul.f32.gmra.mxu0 %v411
        %v619 = vpop.f32.mrf.mxu0
        %v620 = vadd.f32 %v401, %v619
        %621 = vmatmul.f32.gmra.mxu0 %v414
        %v622 = vpop.f32.mrf.mxu0
        %v623 = vadd.f32 %v401, %v622
        %624 = vmatmul.f32.gmra.mxu0 %v417
        %v625 = vpop.f32.mrf.mxu0
        %v626 = vadd.f32 %v401, %v625
        %627 = vmatmul.f32.gmra.mxu0 %v420
        %v628 = vpop.f32.mrf.mxu0
        %v629 = vadd.f32 %v401, %v628
        %630 = vmatmul.f32.gmra.mxu0 %v423
        %v631 = vpop.f32.mrf.mxu0
        %v632 = vadd.f32 %v401, %v631
        %633 = vmatmul.f32.gmra.mxu0 %v426
        %v634 = vpop.f32.mrf.mxu0
        %v635 = vadd.f32 %v401, %v634
        %636 = vmatmul.f32.gmra.mxu0 %v429
        %v637 = vpop.f32.mrf.mxu0
        %v638 = vadd.f32 %v401, %v637
        %639 = vmatmul.f32.gmra.mxu0 %v432
        %v640 = vpop.f32.mrf.mxu0
        %v641 = vadd.f32 %v401, %v640
        %642 = vmatmul.f32.gmra.mxu0 %v435
        %v643 = vpop.f32.mrf.mxu0
        %v644 = vadd.f32 %v401, %v643
        %645 = vmatmul.f32.gmra.mxu0 %v438
        %v646 = vpop.f32.mrf.mxu0
        %v647 = vadd.f32 %v401, %v646
        %648 = vmatmul.f32.gmra.mxu0 %v441
        %v649 = vpop.f32.mrf.mxu0
        %v650 = vadd.f32 %v401, %v649
        %651 = vmatmul.f32.gmra.mxu0 %v444
        %v652 = vpop.f32.mrf.mxu0
        %v653 = vadd.f32 %v401, %v652
        %654 = vmatmul.f32.gmra.mxu0 %v447
        %v655 = vpop.f32.mrf.mxu0
        %v656 = vadd.f32 %v401, %v655
        %657 = vmatmul.f32.gmra.mxu0 %v450
        %v658 = vpop.f32.mrf.mxu0
        %v659 = vadd.f32 %v401, %v658
        %660 = vmatmul.f32.gmra.mxu0 %v453
        %v661 = vpop.f32.mrf.mxu0
        %v662 = vadd.f32 %v401, %v661
        %663 = vmatmul.f32.gmra.mxu0 %v456
        %v664 = vpop.f32.mrf.mxu0
        %v665 = vadd.f32 %v401, %v664
        %666 = vmatmul.f32.gmra.mxu0 %v459
        %v667 = vpop.f32.mrf.mxu0
        %v668 = vadd.f32 %v401, %v667
        %669 = vmatmul.f32.gmra.mxu0 %v462
        %v670 = vpop.f32.mrf.mxu0
        %v671 = vadd.f32 %v401, %v670
        %672 = vmatmul.f32.gmra.mxu0 %v465
        %v673 = vpop.f32.mrf.mxu0
        %v674 = vadd.f32 %v401, %v673
        %675 = vmatmul.f32.gmra.mxu0 %v468
        %v676 = vpop.f32.mrf.mxu0
        %v677 = vadd.f32 %v401, %v676
        %678 = vmatmul.f32.gmra.mxu0 %v471
        %v679 = vpop.f32.mrf.mxu0
        %v680 = vadd.f32 %v401, %v679
        %681 = vmatmul.f32.gmra.mxu0 %v474
        %v682 = vpop.f32.mrf.mxu0
        %v683 = vadd.f32 %v401, %v682
        %684 = vmatmul.f32.gmra.mxu0 %v477
        %v685 = vpop.f32.mrf.mxu0
        %v686 = vadd.f32 %v401, %v685
        %687 = vmatmul.f32.gmra.mxu0 %v480
        %v688 = vpop.f32.mrf.mxu0
        %v689 = vadd.f32 %v401, %v688
        %690 = vmatmul.f32.gmra.mxu0 %v483
        %v691 = vpop.f32.mrf.mxu0
        %v692 = vadd.f32 %v401, %v691
        %693 = vmatmul.f32.gmra.mxu0 %v486
        %v694 = vpop.f32.mrf.mxu0
        %v695 = vadd.f32 %v401, %v694
        %696 = vmatmul.f32.gmra.mxu0 %v489
        %v697 = vpop.f32.mrf.mxu0
        %v698 = vadd.f32 %v401, %v697
        %699 = vmatmul.f32.gmra.mxu0 %v492
        %v700 = vpop.f32.mrf.mxu0
        %v701 = vadd.f32 %v401, %v700
        %702 = vmatmul.f32.gmra.mxu0 %v495
        %v703 = vpop.f32.mrf.mxu0
        %v704 = vadd.f32 %v401, %v703
        %705 = vmatmul.f32.gmra.mxu0 %v498
        %v706 = vpop.f32.mrf.mxu0
        %v707 = vadd.f32 %v401, %v706
        %708 = vmatmul.f32.gmra.mxu0 %v501
        %v709 = vpop.f32.mrf.mxu0
        %v710 = vadd.f32 %v401, %v709
        %711 = vmatmul.f32.gmra.mxu0 %v504
        %v712 = vpop.f32.mrf.mxu0
        %v713 = vadd.f32 %v401, %v712
        %714 = vmatmul.f32.gmra.mxu0 %v507
        %v715 = vpop.f32.mrf.mxu0
        %v716 = vadd.f32 %v401, %v715
        %717 = vmatmul.f32.gmra.mxu0 %v510
        %v718 = vpop.f32.mrf.mxu0
        %v719 = vadd.f32 %v401, %v718
        %720 = vmatmul.f32.gmra.mxu0 %v513
        %v721 = vpop.f32.mrf.mxu0
        %v722 = vadd.f32 %v401, %v721
        %723 = vmatmul.f32.gmra.mxu0 %v516
        %v724 = vpop.f32.mrf.mxu0
        %v725 = vadd.f32 %v401, %v724
        %726 = vmatmul.f32.gmra.mxu0 %v519
        %v727 = vpop.f32.mrf.mxu0
        %v728 = vadd.f32 %v401, %v727
        %729 = vmatmul.f32.gmra.mxu0 %v522
        %v730 = vpop.f32.mrf.mxu0
        %v731 = vadd.f32 %v401, %v730
        %732 = vmatmul.f32.gmra.mxu0 %v525
        %v733 = vpop.f32.mrf.mxu0
        %v734 = vadd.f32 %v401, %v733
        %735 = vmatmul.f32.gmra.mxu0 %v528
        %v736 = vpop.f32.mrf.mxu0
        %v737 = vadd.f32 %v401, %v736
        %738 = vmatmul.f32.gmra.mxu0 %v531
        %v739 = vpop.f32.mrf.mxu0
        %v740 = vadd.f32 %v401, %v739
        %741 = vmatmul.f32.gmra.mxu0 %v534
        %v742 = vpop.f32.mrf.mxu0
        %v743 = vadd.f32 %v401, %v742
        %744 = vmatmul.f32.gmra.mxu0 %v537
        %v745 = vpop.f32.mrf.mxu0
        %v746 = vadd.f32 %v401, %v745
        %747 = vmatmul.f32.gmra.mxu0 %v540
        %v748 = vpop.f32.mrf.mxu0
        %v749 = vadd.f32 %v401, %v748
        %750 = vmatmul.f32.gmra.mxu0 %v543
        %v751 = vpop.f32.mrf.mxu0
        %v752 = vadd.f32 %v401, %v751
        %753 = vmatmul.f32.gmra.mxu0 %v546
        %v754 = vpop.f32.mrf.mxu0
        %v755 = vadd.f32 %v401, %v754
        %756 = vmatmul.f32.gmra.mxu0 %v549
        %v757 = vpop.f32.mrf.mxu0
        %v758 = vadd.f32 %v401, %v757
        %759 = vmatmul.f32.gmra.mxu0 %v552
        %v760 = vpop.f32.mrf.mxu0
        %v761 = vadd.f32 %v401, %v760
        %762 = vmatmul.f32.gmra.mxu0 %v555
        %v763 = vpop.f32.mrf.mxu0
        %v764 = vadd.f32 %v401, %v763
        %765 = vmatmul.f32.gmra.mxu0 %v558
        %v766 = vpop.f32.mrf.mxu0
        %v767 = vadd.f32 %v401, %v766
        %768 = vmatmul.f32.gmra.mxu0 %v561
        %v769 = vpop.f32.mrf.mxu0
        %v770 = vadd.f32 %v401, %v769
        %771 = vmatmul.f32.gmra.mxu0 %v564
        %v772 = vpop.f32.mrf.mxu0
        %v773 = vadd.f32 %v401, %v772
        %774 = vmatmul.f32.gmra.mxu0 %v567
        %v775 = vpop.f32.mrf.mxu0
        %v776 = vadd.f32 %v401, %v775
        %777 = vmatmul.f32.gmra.mxu0 %v570
        %v778 = vpop.f32.mrf.mxu0
        %v779 = vadd.f32 %v401, %v778
        %780 = vmatmul.f32.gmra.mxu0 %v573
        %v781 = vpop.f32.mrf.mxu0
        %v782 = vadd.f32 %v401, %v781
        %783 = vmatmul.f32.gmra.mxu0 %v576
        %v784 = vpop.f32.mrf.mxu0
        %v785 = vadd.f32 %v401, %v784
        %786 = vmatmul.f32.gmra.mxu0 %v579
        %v787 = vpop.f32.mrf.mxu0
        %v788 = vadd.f32 %v401, %v787
        %789 = vmatmul.f32.gmra.mxu0 %v582
        %v790 = vpop.f32.mrf.mxu0
        %v791 = vadd.f32 %v401, %v790
        %792 = vmatmul.f32.gmra.mxu0 %v585
        %v793 = vpop.f32.mrf.mxu0
        %v794 = vadd.f32 %v401, %v793
        %795 = vmatmul.f32.gmra.mxu0 %v588
        %v796 = vpop.f32.mrf.mxu0
        %v797 = vadd.f32 %v401, %v796
        %798 = vmatmul.f32.gmra.mxu0 %v591
        %v799 = vpop.f32.mrf.mxu0
        %v800 = vadd.f32 %v401, %v799
        %801 = vmatmul.f32.gmra.mxu0 %v594
        %v802 = vpop.f32.mrf.mxu0
        %v803 = vadd.f32 %v401, %v802
        %804 = vdwg.mxu0
        %v805 = vmax.f32 %v614, 0.0
        %v806 = vmax.f32 %v617, 0.0
        %v807 = vmax.f32 %v620, 0.0
        %v808 = vmax.f32 %v623, 0.0
        %v809 = vmax.f32 %v626, 0.0
        %v810 = vmax.f32 %v629, 0.0
        %v811 = vmax.f32 %v632, 0.0
        %v812 = vmax.f32 %v635, 0.0
        %v813 = vmax.f32 %v638, 0.0
        %v814 = vmax.f32 %v641, 0.0
        %v815 = vmax.f32 %v644, 0.0
        %v816 = vmax.f32 %v647, 0.0
        %v817 = vmax.f32 %v650, 0.0
        %v818 = vmax.f32 %v653, 0.0
        %v819 = vmax.f32 %v656, 0.0
        %v820 = vmax.f32 %v659, 0.0
        %v821 = vmax.f32 %v662, 0.0
        %v822 = vmax.f32 %v665, 0.0
        %v823 = vmax.f32 %v668, 0.0
        %v824 = vmax.f32 %v671, 0.0
        %v825 = vmax.f32 %v674, 0.0
        %v826 = vmax.f32 %v677, 0.0
        %v827 = vmax.f32 %v680, 0.0
        %v828 = vmax.f32 %v683, 0.0
        %v829 = vmax.f32 %v686, 0.0
        %v830 = vmax.f32 %v689, 0.0
        %v831 = vmax.f32 %v692, 0.0
        %v832 = vmax.f32 %v695, 0.0
        %v833 = vmax.f32 %v698, 0.0
        %v834 = vmax.f32 %v701, 0.0
        %v835 = vmax.f32 %v704, 0.0
        %v836 = vmax.f32 %v707, 0.0
        %v837 = vmax.f32 %v710, 0.0
        %v838 = vmax.f32 %v713, 0.0
        %v839 = vmax.f32 %v716, 0.0
        %v840 = vmax.f32 %v719, 0.0
        %v841 = vmax.f32 %v722, 0.0
        %v842 = vmax.f32 %v725, 0.0
        %v843 = vmax.f32 %v728, 0.0
        %v844 = vmax.f32 %v731, 0.0
        %v845 = vmax.f32 %v734, 0.0
        %v846 = vmax.f32 %v737, 0.0
        %v847 = vmax.f32 %v740, 0.0
        %v848 = vmax.f32 %v743, 0.0
        %v849 = vmax.f32 %v746, 0.0
        %v850 = vmax.f32 %v749, 0.0
        %v851 = vmax.f32 %v752, 0.0
        %v852 = vmax.f32 %v755, 0.0
        %v853 = vmax.f32 %v758, 0.0
        %v854 = vmax.f32 %v761, 0.0
        %v855 = vmax.f32 %v764, 0.0
        %v856 = vmax.f32 %v767, 0.0
        %v857 = vmax.f32 %v770, 0.0
        %v858 = vmax.f32 %v773, 0.0
        %v859 = vmax.f32 %v776, 0.0
        %v860 = vmax.f32 %v779, 0.0
        %v861 = vmax.f32 %v782, 0.0
        %v862 = vmax.f32 %v785, 0.0
        %v863 = vmax.f32 %v788, 0.0
        %v864 = vmax.f32 %v791, 0.0
        %v865 = vmax.f32 %v794, 0.0
        %v866 = vmax.f32 %v797, 0.0
        %v867 = vmax.f32 %v800, 0.0
        %v868 = vmax.f32 %v803, 0.0
        %v869 = vpack.c.bf16 %v806, %v805
        %v870 = vpack.c.bf16 %v808, %v807
        %v871 = vpack.c.bf16 %v810, %v809
        %v872 = vpack.c.bf16 %v812, %v811
        %v873 = vpack.c.bf16 %v814, %v813
        %v874 = vpack.c.bf16 %v816, %v815
        %v875 = vpack.c.bf16 %v818, %v817
        %v876 = vpack.c.bf16 %v820, %v819
        %v877 = vpack.c.bf16 %v822, %v821
        %v878 = vpack.c.bf16 %v824, %v823
        %v879 = vpack.c.bf16 %v826, %v825
        %v880 = vpack.c.bf16 %v828, %v827
        %v881 = vpack.c.bf16 %v830, %v829
        %v882 = vpack.c.bf16 %v832, %v831
        %v883 = vpack.c.bf16 %v834, %v833
        %v884 = vpack.c.bf16 %v836, %v835
        %v885 = vpack.c.bf16 %v838, %v837
        %v886 = vpack.c.bf16 %v840, %v839
        %v887 = vpack.c.bf16 %v842, %v841
        %v888 = vpack.c.bf16 %v844, %v843
        %v889 = vpack.c.bf16 %v846, %v845
        %v890 = vpack.c.bf16 %v848, %v847
        %v891 = vpack.c.bf16 %v850, %v849
        %v892 = vpack.c.bf16 %v852, %v851
        %v893 = vpack.c.bf16 %v854, %v853
        %v894 = vpack.c.bf16 %v856, %v855
        %v895 = vpack.c.bf16 %v858, %v857
        %v896 = vpack.c.bf16 %v860, %v859
        %v897 = vpack.c.bf16 %v862, %v861
        %v898 = vpack.c.bf16 %v864, %v863
        %v899 = vpack.c.bf16 %v866, %v865
        %v900 = vpack.c.bf16 %v868, %v867
        %v901 = vld [vmem:[%s3] sm:$0xf]
        %v902 = vld [vmem:[%s3 + $0x4] sm:$0xf]
        %v903 = vld [vmem:[%s3 + $0x8] sm:$0xf]
        %v904 = vld [vmem:[%s3 + $0xc] sm:$0xf]
        %v905 = vld [vmem:[%s3 + $0x10] sm:$0xf]
        %v906 = vld [vmem:[%s3 + $0x14] sm:$0xf]
        %v907 = vld [vmem:[%s3 + $0x18] sm:$0xf]
        %v908 = vld [vmem:[%s3 + $0x1c] sm:$0xf]
        %v909 = vld [vmem:[%s4] sm:$0x1]
        %v911 = vperm.slane %v909, 0
        %v921 = vunpack.c.l.b16 %v901
        %v922 = vunpack.c.l.b16 %v902
        %v923 = vunpack.c.l.b16 %v903
        %v924 = vunpack.c.l.b16 %v904
        %v925 = vunpack.c.l.b16 %v905
        %v926 = vunpack.c.l.b16 %v906
        %v927 = vunpack.c.l.b16 %v907
        %v928 = vunpack.c.l.b16 %v908
        %v929 = vpack.c.b16 %v922, %v921
        %v930 = vpack.c.b16 %v924, %v923
        %v931 = vpack.c.b16 %v926, %v925
        %v932 = vpack.c.b16 %v928, %v927
        %vm937 = vcmask 523264
        %v939 = vsel %vm937, %v869, 0
        %v942 = vsel %vm937, %v870, 0
        %v945 = vsel %vm937, %v871, 0
        %v948 = vsel %vm937, %v872, 0
        %v951 = vsel %vm937, %v873, 0
        %v954 = vsel %vm937, %v874, 0
        %v957 = vsel %vm937, %v875, 0
        %v960 = vsel %vm937, %v876, 0
        %v963 = vsel %vm937, %v877, 0
        %v966 = vsel %vm937, %v878, 0
        %v969 = vsel %vm937, %v879, 0
        %v972 = vsel %vm937, %v880, 0
        %v975 = vsel %vm937, %v881, 0
        %v978 = vsel %vm937, %v882, 0
        %v981 = vsel %vm937, %v883, 0
        %v984 = vsel %vm937, %v884, 0
        %v987 = vsel %vm937, %v885, 0
        %v990 = vsel %vm937, %v886, 0
        %v993 = vsel %vm937, %v887, 0
        %v996 = vsel %vm937, %v888, 0
        %v999 = vsel %vm937, %v889, 0
        %v1002 = vsel %vm937, %v890, 0
        %v1005 = vsel %vm937, %v891, 0
        %v1008 = vsel %vm937, %v892, 0
        %v1011 = vsel %vm937, %v893, 0
        %v1014 = vsel %vm937, %v894, 0
        %v1017 = vsel %vm937, %v895, 0
        %v1020 = vsel %vm937, %v896, 0
        %v1023 = vsel %vm937, %v897, 0
        %v1026 = vsel %vm937, %v898, 0
        %v1029 = vsel %vm937, %v899, 0
        %v1032 = vsel %vm937, %v900, 0
        %1034 = vmatpush.bf16.msra.mxu0 0
        %1035 = vmatpush.bf16.msra.mxu0 0
        %1036 = vmatpush.bf16.msra.mxu0 0
        %1037 = vmatpush.bf16.msra.mxu0 0
        %1038 = vmatpush.bf16.msra.mxu0 %v932
        %1039 = vmatpush.bf16.msra.mxu0 %v931
        %1040 = vmatpush.bf16.msra.mxu0 %v930
        %1041 = vmatpush.bf16.msra.mxu0 %v929
        %1042 = vmatmul.bf16.gmra.mxu0 %v939
        %v1043 = vpop.f32.mrf.mxu0
        %v1044 = vadd.f32 %v911, %v1043
        %v1045 = vpop.f32.mrf.mxu0
        %v1046 = vadd.f32 %v911, %v1045
        %1047 = vmatmul.bf16.gmra.mxu0 %v942
        %v1048 = vpop.f32.mrf.mxu0
        %v1049 = vadd.f32 %v911, %v1048
        %v1050 = vpop.f32.mrf.mxu0
        %v1051 = vadd.f32 %v911, %v1050
        %1052 = vmatmul.bf16.gmra.mxu0 %v945
        %v1053 = vpop.f32.mrf.mxu0
        %v1054 = vadd.f32 %v911, %v1053
        %v1055 = vpop.f32.mrf.mxu0
        %v1056 = vadd.f32 %v911, %v1055
        %1057 = vmatmul.bf16.gmra.mxu0 %v948
        %v1058 = vpop.f32.mrf.mxu0
        %v1059 = vadd.f32 %v911, %v1058
        %v1060 = vpop.f32.mrf.mxu0
        %v1061 = vadd.f32 %v911, %v1060
        %1062 = vmatmul.bf16.gmra.mxu0 %v951
        %v1063 = vpop.f32.mrf.mxu0
        %v1064 = vadd.f32 %v911, %v1063
        %v1065 = vpop.f32.mrf.mxu0
        %v1066 = vadd.f32 %v911, %v1065
        %1067 = vmatmul.bf16.gmra.mxu0 %v954
        %v1068 = vpop.f32.mrf.mxu0
        %v1069 = vadd.f32 %v911, %v1068
        %v1070 = vpop.f32.mrf.mxu0
        %v1071 = vadd.f32 %v911, %v1070
        %1072 = vmatmul.bf16.gmra.mxu0 %v957
        %v1073 = vpop.f32.mrf.mxu0
        %v1074 = vadd.f32 %v911, %v1073
        %v1075 = vpop.f32.mrf.mxu0
        %v1076 = vadd.f32 %v911, %v1075
        %1077 = vmatmul.bf16.gmra.mxu0 %v960
        %v1078 = vpop.f32.mrf.mxu0
        %v1079 = vadd.f32 %v911, %v1078
        %v1080 = vpop.f32.mrf.mxu0
        %v1081 = vadd.f32 %v911, %v1080
        %1082 = vmatmul.bf16.gmra.mxu0 %v963
        %v1083 = vpop.f32.mrf.mxu0
        %v1084 = vadd.f32 %v911, %v1083
        %v1085 = vpop.f32.mrf.mxu0
        %v1086 = vadd.f32 %v911, %v1085
        %1087 = vmatmul.bf16.gmra.mxu0 %v966
        %v1088 = vpop.f32.mrf.mxu0
        %v1089 = vadd.f32 %v911, %v1088
        %v1090 = vpop.f32.mrf.mxu0
        %v1091 = vadd.f32 %v911, %v1090
        %1092 = vmatmul.bf16.gmra.mxu0 %v969
        %v1093 = vpop.f32.mrf.mxu0
        %v1094 = vadd.f32 %v911, %v1093
        %v1095 = vpop.f32.mrf.mxu0
        %v1096 = vadd.f32 %v911, %v1095
        %1097 = vmatmul.bf16.gmra.mxu0 %v972
        %v1098 = vpop.f32.mrf.mxu0
        %v1099 = vadd.f32 %v911, %v1098
        %v1100 = vpop.f32.mrf.mxu0
        %v1101 = vadd.f32 %v911, %v1100
        %1102 = vmatmul.bf16.gmra.mxu0 %v975
        %v1103 = vpop.f32.mrf.mxu0
        %v1104 = vadd.f32 %v911, %v1103
        %v1105 = vpop.f32.mrf.mxu0
        %v1106 = vadd.f32 %v911, %v1105
        %1107 = vmatmul.bf16.gmra.mxu0 %v978
        %v1108 = vpop.f32.mrf.mxu0
        %v1109 = vadd.f32 %v911, %v1108
        %v1110 = vpop.f32.mrf.mxu0
        %v1111 = vadd.f32 %v911, %v1110
        %1112 = vmatmul.bf16.gmra.mxu0 %v981
        %v1113 = vpop.f32.mrf.mxu0
        %v1114 = vadd.f32 %v911, %v1113
        %v1115 = vpop.f32.mrf.mxu0
        %v1116 = vadd.f32 %v911, %v1115
        %1117 = vmatmul.bf16.gmra.mxu0 %v984
        %v1118 = vpop.f32.mrf.mxu0
        %v1119 = vadd.f32 %v911, %v1118
        %v1120 = vpop.f32.mrf.mxu0
        %v1121 = vadd.f32 %v911, %v1120
        %1122 = vmatmul.bf16.gmra.mxu0 %v987
        %v1123 = vpop.f32.mrf.mxu0
        %v1124 = vadd.f32 %v911, %v1123
        %v1125 = vpop.f32.mrf.mxu0
        %v1126 = vadd.f32 %v911, %v1125
        %1127 = vmatmul.bf16.gmra.mxu0 %v990
        %v1128 = vpop.f32.mrf.mxu0
        %v1129 = vadd.f32 %v911, %v1128
        %v1130 = vpop.f32.mrf.mxu0
        %v1131 = vadd.f32 %v911, %v1130
        %1132 = vmatmul.bf16.gmra.mxu0 %v993
        %v1133 = vpop.f32.mrf.mxu0
        %v1134 = vadd.f32 %v911, %v1133
        %v1135 = vpop.f32.mrf.mxu0
        %v1136 = vadd.f32 %v911, %v1135
        %1137 = vmatmul.bf16.gmra.mxu0 %v996
        %v1138 = vpop.f32.mrf.mxu0
        %v1139 = vadd.f32 %v911, %v1138
        %v1140 = vpop.f32.mrf.mxu0
        %v1141 = vadd.f32 %v911, %v1140
        %1142 = vmatmul.bf16.gmra.mxu0 %v999
        %v1143 = vpop.f32.mrf.mxu0
        %v1144 = vadd.f32 %v911, %v1143
        %v1145 = vpop.f32.mrf.mxu0
        %v1146 = vadd.f32 %v911, %v1145
        %1147 = vmatmul.bf16.gmra.mxu0 %v1002
        %v1148 = vpop.f32.mrf.mxu0
        %v1149 = vadd.f32 %v911, %v1148
        %v1150 = vpop.f32.mrf.mxu0
        %v1151 = vadd.f32 %v911, %v1150
        %1152 = vmatmul.bf16.gmra.mxu0 %v1005
        %v1153 = vpop.f32.mrf.mxu0
        %v1154 = vadd.f32 %v911, %v1153
        %v1155 = vpop.f32.mrf.mxu0
        %v1156 = vadd.f32 %v911, %v1155
        %1157 = vmatmul.bf16.gmra.mxu0 %v1008
        %v1158 = vpop.f32.mrf.mxu0
        %v1159 = vadd.f32 %v911, %v1158
        %v1160 = vpop.f32.mrf.mxu0
        %v1161 = vadd.f32 %v911, %v1160
        %1162 = vmatmul.bf16.gmra.mxu0 %v1011
        %v1163 = vpop.f32.mrf.mxu0
        %v1164 = vadd.f32 %v911, %v1163
        %v1165 = vpop.f32.mrf.mxu0
        %v1166 = vadd.f32 %v911, %v1165
        %1167 = vmatmul.bf16.gmra.mxu0 %v1014
        %v1168 = vpop.f32.mrf.mxu0
        %v1169 = vadd.f32 %v911, %v1168
        %v1170 = vpop.f32.mrf.mxu0
        %v1171 = vadd.f32 %v911, %v1170
        %1172 = vmatmul.bf16.gmra.mxu0 %v1017
        %v1173 = vpop.f32.mrf.mxu0
        %v1174 = vadd.f32 %v911, %v1173
        %v1175 = vpop.f32.mrf.mxu0
        %v1176 = vadd.f32 %v911, %v1175
        %1177 = vmatmul.bf16.gmra.mxu0 %v1020
        %v1178 = vpop.f32.mrf.mxu0
        %v1179 = vadd.f32 %v911, %v1178
        %v1180 = vpop.f32.mrf.mxu0
        %v1181 = vadd.f32 %v911, %v1180
        %1182 = vmatmul.bf16.gmra.mxu0 %v1023
        %v1183 = vpop.f32.mrf.mxu0
        %v1184 = vadd.f32 %v911, %v1183
        %v1185 = vpop.f32.mrf.mxu0
        %v1186 = vadd.f32 %v911, %v1185
        %1187 = vmatmul.bf16.gmra.mxu0 %v1026
        %v1188 = vpop.f32.mrf.mxu0
        %v1189 = vadd.f32 %v911, %v1188
        %v1190 = vpop.f32.mrf.mxu0
        %v1191 = vadd.f32 %v911, %v1190
        %1192 = vmatmul.bf16.gmra.mxu0 %v1029
        %v1193 = vpop.f32.mrf.mxu0
        %v1194 = vadd.f32 %v911, %v1193
        %v1195 = vpop.f32.mrf.mxu0
        %v1196 = vadd.f32 %v911, %v1195
        %1197 = vmatmul.bf16.gmra.mxu0 %v1032
        %v1198 = vpop.f32.mrf.mxu0
        %v1199 = vadd.f32 %v911, %v1198
        %v1200 = vpop.f32.mrf.mxu0
        %v1201 = vadd.f32 %v911, %v1200
        %1202 = vdwg.mxu0
        %v1203 = vmax.f32 %v1044, 0.0
        %v1204 = vmax.f32 %v1046, 0.0
        %v1205 = vmax.f32 %v1049, 0.0
        %v1206 = vmax.f32 %v1051, 0.0
        %v1207 = vmax.f32 %v1054, 0.0
        %v1208 = vmax.f32 %v1056, 0.0
        %v1209 = vmax.f32 %v1059, 0.0
        %v1210 = vmax.f32 %v1061, 0.0
        %v1211 = vmax.f32 %v1064, 0.0
        %v1212 = vmax.f32 %v1066, 0.0
        %v1213 = vmax.f32 %v1069, 0.0
        %v1214 = vmax.f32 %v1071, 0.0
        %v1215 = vmax.f32 %v1074, 0.0
        %v1216 = vmax.f32 %v1076, 0.0
        %v1217 = vmax.f32 %v1079, 0.0
        %v1218 = vmax.f32 %v1081, 0.0
        %v1219 = vmax.f32 %v1084, 0.0
        %v1220 = vmax.f32 %v1086, 0.0
        %v1221 = vmax.f32 %v1089, 0.0
        %v1222 = vmax.f32 %v1091, 0.0
        %v1223 = vmax.f32 %v1094, 0.0
        %v1224 = vmax.f32 %v1096, 0.0
        %v1225 = vmax.f32 %v1099, 0.0
        %v1226 = vmax.f32 %v1101, 0.0
        %v1227 = vmax.f32 %v1104, 0.0
        %v1228 = vmax.f32 %v1106, 0.0
        %v1229 = vmax.f32 %v1109, 0.0
        %v1230 = vmax.f32 %v1111, 0.0
        %v1231 = vmax.f32 %v1114, 0.0
        %v1232 = vmax.f32 %v1116, 0.0
        %v1233 = vmax.f32 %v1119, 0.0
        %v1234 = vmax.f32 %v1121, 0.0
        %v1235 = vmax.f32 %v1124, 0.0
        %v1236 = vmax.f32 %v1126, 0.0
        %v1237 = vmax.f32 %v1129, 0.0
        %v1238 = vmax.f32 %v1131, 0.0
        %v1239 = vmax.f32 %v1134, 0.0
        %v1240 = vmax.f32 %v1136, 0.0
        %v1241 = vmax.f32 %v1139, 0.0
        %v1242 = vmax.f32 %v1141, 0.0
        %v1243 = vmax.f32 %v1144, 0.0
        %v1244 = vmax.f32 %v1146, 0.0
        %v1245 = vmax.f32 %v1149, 0.0
        %v1246 = vmax.f32 %v1151, 0.0
        %v1247 = vmax.f32 %v1154, 0.0
        %v1248 = vmax.f32 %v1156, 0.0
        %v1249 = vmax.f32 %v1159, 0.0
        %v1250 = vmax.f32 %v1161, 0.0
        %v1251 = vmax.f32 %v1164, 0.0
        %v1252 = vmax.f32 %v1166, 0.0
        %v1253 = vmax.f32 %v1169, 0.0
        %v1254 = vmax.f32 %v1171, 0.0
        %v1255 = vmax.f32 %v1174, 0.0
        %v1256 = vmax.f32 %v1176, 0.0
        %v1257 = vmax.f32 %v1179, 0.0
        %v1258 = vmax.f32 %v1181, 0.0
        %v1259 = vmax.f32 %v1184, 0.0
        %v1260 = vmax.f32 %v1186, 0.0
        %v1261 = vmax.f32 %v1189, 0.0
        %v1262 = vmax.f32 %v1191, 0.0
        %v1263 = vmax.f32 %v1194, 0.0
        %v1264 = vmax.f32 %v1196, 0.0
        %v1265 = vmax.f32 %v1199, 0.0
        %v1266 = vmax.f32 %v1201, 0.0
        %v1267 = vpack.c.bf16 %v1204, %v1203
        %v1268 = vpack.c.bf16 %v1206, %v1205
        %v1269 = vpack.c.bf16 %v1208, %v1207
        %v1270 = vpack.c.bf16 %v1210, %v1209
        %v1271 = vpack.c.bf16 %v1212, %v1211
        %v1272 = vpack.c.bf16 %v1214, %v1213
        %v1273 = vpack.c.bf16 %v1216, %v1215
        %v1274 = vpack.c.bf16 %v1218, %v1217
        %v1275 = vpack.c.bf16 %v1220, %v1219
        %v1276 = vpack.c.bf16 %v1222, %v1221
        %v1277 = vpack.c.bf16 %v1224, %v1223
        %v1278 = vpack.c.bf16 %v1226, %v1225
        %v1279 = vpack.c.bf16 %v1228, %v1227
        %v1280 = vpack.c.bf16 %v1230, %v1229
        %v1281 = vpack.c.bf16 %v1232, %v1231
        %v1282 = vpack.c.bf16 %v1234, %v1233
        %v1283 = vpack.c.bf16 %v1236, %v1235
        %v1284 = vpack.c.bf16 %v1238, %v1237
        %v1285 = vpack.c.bf16 %v1240, %v1239
        %v1286 = vpack.c.bf16 %v1242, %v1241
        %v1287 = vpack.c.bf16 %v1244, %v1243
        %v1288 = vpack.c.bf16 %v1246, %v1245
        %v1289 = vpack.c.bf16 %v1248, %v1247
        %v1290 = vpack.c.bf16 %v1250, %v1249
        %v1291 = vpack.c.bf16 %v1252, %v1251
        %v1292 = vpack.c.bf16 %v1254, %v1253
        %v1293 = vpack.c.bf16 %v1256, %v1255
        %v1294 = vpack.c.bf16 %v1258, %v1257
        %v1295 = vpack.c.bf16 %v1260, %v1259
        %v1296 = vpack.c.bf16 %v1262, %v1261
        %v1297 = vpack.c.bf16 %v1264, %v1263
        %v1298 = vpack.c.bf16 %v1266, %v1265
        %v1299 = vld [vmem:[%s5] sm:$0xff]
        %v1300 = vld [vmem:[%s5 + $0x20] sm:$0xff]
        %v1301 = vld [vmem:[%s5 + $0x40] sm:$0xff]
        %v1302 = vld [vmem:[%s5 + $0x60] sm:$0xff]
        %v1303 = vld [vmem:[%s5 + $0x80] sm:$0xff]
        %v1304 = vld [vmem:[%s5 + $0xa0] sm:$0xff]
        %v1305 = vld [vmem:[%s5 + $0xc0] sm:$0xff]
        %v1306 = vld [vmem:[%s5 + $0xe0] sm:$0xff]
        %v1307 = vld [vmem:[%s5 + $0x100] sm:$0xff]
        %v1308 = vld [vmem:[%s5 + $0x120] sm:$0xff]
        %v1309 = vld [vmem:[%s5 + $0x140] sm:$0xff]
        %v1310 = vld [vmem:[%s5 + $0x160] sm:$0xff]
        %v1311 = vld [vmem:[%s5 + $0x180] sm:$0xff]
        %v1312 = vld [vmem:[%s5 + $0x1a0] sm:$0xff]
        %v1313 = vld [vmem:[%s5 + $0x1c0] sm:$0xff]
        %v1314 = vld [vmem:[%s5 + $0x1e0] sm:$0xff]
        %v1315 = vld [vmem:[%s6] sm:$0x3]
        %v1317 = vperm.slane %v1315, 0
        %v1318 = vperm.slane %v1315, 1
        %v1337 = vunpack.c.l.b16 %v1299
        %v1338 = vunpack.c.h.b16 %v1299
        %v1339 = vunpack.c.l.b16 %v1300
        %v1340 = vunpack.c.h.b16 %v1300
        %v1341 = vunpack.c.l.b16 %v1301
        %v1342 = vunpack.c.h.b16 %v1301
        %v1343 = vunpack.c.l.b16 %v1302
        %v1344 = vunpack.c.h.b16 %v1302
        %v1345 = vunpack.c.l.b16 %v1303
        %v1346 = vunpack.c.h.b16 %v1303
        %v1347 = vunpack.c.l.b16 %v1304
        %v1348 = vunpack.c.h.b16 %v1304
        %v1349 = vunpack.c.l.b16 %v1305
        %v1350 = vunpack.c.h.b16 %v1305
        %v1351 = vunpack.c.l.b16 %v1306
        %v1352 = vunpack.c.h.b16 %v1306
        %v1353 = vunpack.c.l.b16 %v1307
        %v1354 = vunpack.c.h.b16 %v1307
        %v1355 = vunpack.c.l.b16 %v1308
        %v1356 = vunpack.c.h.b16 %v1308
        %v1357 = vunpack.c.l.b16 %v1309
        %v1358 = vunpack.c.h.b16 %v1309
        %v1359 = vunpack.c.l.b16 %v1310
        %v1360 = vunpack.c.h.b16 %v1310
        %v1361 = vunpack.c.l.b16 %v1311
        %v1362 = vunpack.c.h.b16 %v1311
        %v1363 = vunpack.c.l.b16 %v1312
        %v1364 = vunpack.c.h.b16 %v1312
        %v1365 = vunpack.c.l.b16 %v1313
        %v1366 = vunpack.c.h.b16 %v1313
        %v1367 = vunpack.c.l.b16 %v1314
        %v1368 = vunpack.c.h.b16 %v1314
        %v1369 = vpack.c.b16 %v1339, %v1337
        %v1370 = vpack.c.b16 %v1340, %v1338
        %v1371 = vpack.c.b16 %v1343, %v1341
        %v1372 = vpack.c.b16 %v1344, %v1342
        %v1373 = vpack.c.b16 %v1347, %v1345
        %v1374 = vpack.c.b16 %v1348, %v1346
        %v1375 = vpack.c.b16 %v1351, %v1349
        %v1376 = vpack.c.b16 %v1352, %v1350
        %v1377 = vpack.c.b16 %v1355, %v1353
        %v1378 = vpack.c.b16 %v1356, %v1354
        %v1379 = vpack.c.b16 %v1359, %v1357
        %v1380 = vpack.c.b16 %v1360, %v1358
        %v1381 = vpack.c.b16 %v1363, %v1361
        %v1382 = vpack.c.b16 %v1364, %v1362
        %v1383 = vpack.c.b16 %v1367, %v1365
        %v1384 = vpack.c.b16 %v1368, %v1366
        %1401 = vmatpush.bf16.msra.mxu0 %v1383
        %1402 = vmatpush.bf16.msra.mxu0 %v1381
        %1403 = vmatpush.bf16.msra.mxu0 %v1379
        %1404 = vmatpush.bf16.msra.mxu0 %v1377
        %1405 = vmatpush.bf16.msra.mxu0 %v1375
        %1406 = vmatpush.bf16.msra.mxu0 %v1373
        %1407 = vmatpush.bf16.msra.mxu0 %v1371
        %1408 = vmatpush.bf16.msra.mxu0 %v1369
        %1409 = vmatmul.bf16.gmra.mxu0 %v1267
        %v1410 = vpop.f32.mrf.mxu0
        %v1411 = vadd.f32 %v1317, %v1410
        %v1412 = vpop.f32.mrf.mxu0
        %v1413 = vadd.f32 %v1317, %v1412
        %1414 = vmatmul.bf16.gmra.mxu0 %v1268
        %v1415 = vpop.f32.mrf.mxu0
        %v1416 = vadd.f32 %v1317, %v1415
        %v1417 = vpop.f32.mrf.mxu0
        %v1418 = vadd.f32 %v1317, %v1417
        %1419 = vmatmul.bf16.gmra.mxu0 %v1269
        %v1420 = vpop.f32.mrf.mxu0
        %v1421 = vadd.f32 %v1317, %v1420
        %v1422 = vpop.f32.mrf.mxu0
        %v1423 = vadd.f32 %v1317, %v1422
        %1424 = vmatmul.bf16.gmra.mxu0 %v1270
        %v1425 = vpop.f32.mrf.mxu0
        %v1426 = vadd.f32 %v1317, %v1425
        %v1427 = vpop.f32.mrf.mxu0
        %v1428 = vadd.f32 %v1317, %v1427
        %1429 = vmatmul.bf16.gmra.mxu0 %v1271
        %v1430 = vpop.f32.mrf.mxu0
        %v1431 = vadd.f32 %v1317, %v1430
        %v1432 = vpop.f32.mrf.mxu0
        %v1433 = vadd.f32 %v1317, %v1432
        %1434 = vmatmul.bf16.gmra.mxu0 %v1272
        %v1435 = vpop.f32.mrf.mxu0
        %v1436 = vadd.f32 %v1317, %v1435
        %v1437 = vpop.f32.mrf.mxu0
        %v1438 = vadd.f32 %v1317, %v1437
        %1439 = vmatmul.bf16.gmra.mxu0 %v1273
        %v1440 = vpop.f32.mrf.mxu0
        %v1441 = vadd.f32 %v1317, %v1440
        %v1442 = vpop.f32.mrf.mxu0
        %v1443 = vadd.f32 %v1317, %v1442
        %1444 = vmatmul.bf16.gmra.mxu0 %v1274
        %v1445 = vpop.f32.mrf.mxu0
        %v1446 = vadd.f32 %v1317, %v1445
        %v1447 = vpop.f32.mrf.mxu0
        %v1448 = vadd.f32 %v1317, %v1447
        %1449 = vmatmul.bf16.gmra.mxu0 %v1275
        %v1450 = vpop.f32.mrf.mxu0
        %v1451 = vadd.f32 %v1317, %v1450
        %v1452 = vpop.f32.mrf.mxu0
        %v1453 = vadd.f32 %v1317, %v1452
        %1454 = vmatmul.bf16.gmra.mxu0 %v1276
        %v1455 = vpop.f32.mrf.mxu0
        %v1456 = vadd.f32 %v1317, %v1455
        %v1457 = vpop.f32.mrf.mxu0
        %v1458 = vadd.f32 %v1317, %v1457
        %1459 = vmatmul.bf16.gmra.mxu0 %v1277
        %v1460 = vpop.f32.mrf.mxu0
        %v1461 = vadd.f32 %v1317, %v1460
        %v1462 = vpop.f32.mrf.mxu0
        %v1463 = vadd.f32 %v1317, %v1462
        %1464 = vmatmul.bf16.gmra.mxu0 %v1278
        %v1465 = vpop.f32.mrf.mxu0
        %v1466 = vadd.f32 %v1317, %v1465
        %v1467 = vpop.f32.mrf.mxu0
        %v1468 = vadd.f32 %v1317, %v1467
        %1469 = vmatmul.bf16.gmra.mxu0 %v1279
        %v1470 = vpop.f32.mrf.mxu0
        %v1471 = vadd.f32 %v1317, %v1470
        %v1472 = vpop.f32.mrf.mxu0
        %v1473 = vadd.f32 %v1317, %v1472
        %1474 = vmatmul.bf16.gmra.mxu0 %v1280
        %v1475 = vpop.f32.mrf.mxu0
        %v1476 = vadd.f32 %v1317, %v1475
        %v1477 = vpop.f32.mrf.mxu0
        %v1478 = vadd.f32 %v1317, %v1477
        %1479 = vmatmul.bf16.gmra.mxu0 %v1281
        %v1480 = vpop.f32.mrf.mxu0
        %v1481 = vadd.f32 %v1317, %v1480
        %v1482 = vpop.f32.mrf.mxu0
        %v1483 = vadd.f32 %v1317, %v1482
        %1484 = vmatmul.bf16.gmra.mxu0 %v1282
        %v1485 = vpop.f32.mrf.mxu0
        %v1486 = vadd.f32 %v1317, %v1485
        %v1487 = vpop.f32.mrf.mxu0
        %v1488 = vadd.f32 %v1317, %v1487
        %1489 = vmatmul.bf16.gmra.mxu0 %v1283
        %v1490 = vpop.f32.mrf.mxu0
        %v1491 = vadd.f32 %v1317, %v1490
        %v1492 = vpop.f32.mrf.mxu0
        %v1493 = vadd.f32 %v1317, %v1492
        %1494 = vmatmul.bf16.gmra.mxu0 %v1284
        %v1495 = vpop.f32.mrf.mxu0
        %v1496 = vadd.f32 %v1317, %v1495
        %v1497 = vpop.f32.mrf.mxu0
        %v1498 = vadd.f32 %v1317, %v1497
        %1499 = vmatmul.bf16.gmra.mxu0 %v1285
        %v1500 = vpop.f32.mrf.mxu0
        %v1501 = vadd.f32 %v1317, %v1500
        %v1502 = vpop.f32.mrf.mxu0
        %v1503 = vadd.f32 %v1317, %v1502
        %1504 = vmatmul.bf16.gmra.mxu0 %v1286
        %v1505 = vpop.f32.mrf.mxu0
        %v1506 = vadd.f32 %v1317, %v1505
        %v1507 = vpop.f32.mrf.mxu0
        %v1508 = vadd.f32 %v1317, %v1507
        %1509 = vmatmul.bf16.gmra.mxu0 %v1287
        %v1510 = vpop.f32.mrf.mxu0
        %v1511 = vadd.f32 %v1317, %v1510
        %v1512 = vpop.f32.mrf.mxu0
        %v1513 = vadd.f32 %v1317, %v1512
        %1514 = vmatmul.bf16.gmra.mxu0 %v1288
        %v1515 = vpop.f32.mrf.mxu0
        %v1516 = vadd.f32 %v1317, %v1515
        %v1517 = vpop.f32.mrf.mxu0
        %v1518 = vadd.f32 %v1317, %v1517
        %1519 = vmatmul.bf16.gmra.mxu0 %v1289
        %v1520 = vpop.f32.mrf.mxu0
        %v1521 = vadd.f32 %v1317, %v1520
        %v1522 = vpop.f32.mrf.mxu0
        %v1523 = vadd.f32 %v1317, %v1522
        %1524 = vmatmul.bf16.gmra.mxu0 %v1290
        %v1525 = vpop.f32.mrf.mxu0
        %v1526 = vadd.f32 %v1317, %v1525
        %v1527 = vpop.f32.mrf.mxu0
        %v1528 = vadd.f32 %v1317, %v1527
        %1529 = vmatmul.bf16.gmra.mxu0 %v1291
        %v1530 = vpop.f32.mrf.mxu0
        %v1531 = vadd.f32 %v1317, %v1530
        %v1532 = vpop.f32.mrf.mxu0
        %v1533 = vadd.f32 %v1317, %v1532
        %1534 = vmatmul.bf16.gmra.mxu0 %v1292
        %v1535 = vpop.f32.mrf.mxu0
        %v1536 = vadd.f32 %v1317, %v1535
        %v1537 = vpop.f32.mrf.mxu0
        %v1538 = vadd.f32 %v1317, %v1537
        %1539 = vmatmul.bf16.gmra.mxu0 %v1293
        %v1540 = vpop.f32.mrf.mxu0
        %v1541 = vadd.f32 %v1317, %v1540
        %v1542 = vpop.f32.mrf.mxu0
        %v1543 = vadd.f32 %v1317, %v1542
        %1544 = vmatmul.bf16.gmra.mxu0 %v1294
        %v1545 = vpop.f32.mrf.mxu0
        %v1546 = vadd.f32 %v1317, %v1545
        %v1547 = vpop.f32.mrf.mxu0
        %v1548 = vadd.f32 %v1317, %v1547
        %1549 = vmatmul.bf16.gmra.mxu0 %v1295
        %v1550 = vpop.f32.mrf.mxu0
        %v1551 = vadd.f32 %v1317, %v1550
        %v1552 = vpop.f32.mrf.mxu0
        %v1553 = vadd.f32 %v1317, %v1552
        %1554 = vmatmul.bf16.gmra.mxu0 %v1296
        %v1555 = vpop.f32.mrf.mxu0
        %v1556 = vadd.f32 %v1317, %v1555
        %v1557 = vpop.f32.mrf.mxu0
        %v1558 = vadd.f32 %v1317, %v1557
        %1559 = vmatmul.bf16.gmra.mxu0 %v1297
        %v1560 = vpop.f32.mrf.mxu0
        %v1561 = vadd.f32 %v1317, %v1560
        %v1562 = vpop.f32.mrf.mxu0
        %v1563 = vadd.f32 %v1317, %v1562
        %1564 = vmatmul.bf16.gmra.mxu0 %v1298
        %v1565 = vpop.f32.mrf.mxu0
        %v1566 = vadd.f32 %v1317, %v1565
        %v1567 = vpop.f32.mrf.mxu0
        %v1568 = vadd.f32 %v1317, %v1567
        %1569 = vdwg.mxu0
        %1570 = vmatpush.bf16.msra.mxu0 %v1384
        %1571 = vmatpush.bf16.msra.mxu0 %v1382
        %1572 = vmatpush.bf16.msra.mxu0 %v1380
        %1573 = vmatpush.bf16.msra.mxu0 %v1378
        %1574 = vmatpush.bf16.msra.mxu0 %v1376
        %1575 = vmatpush.bf16.msra.mxu0 %v1374
        %1576 = vmatpush.bf16.msra.mxu0 %v1372
        %1577 = vmatpush.bf16.msra.mxu0 %v1370
        %1578 = vmatmul.bf16.gmra.mxu0 %v1267
        %v1579 = vpop.f32.mrf.mxu0
        %v1580 = vadd.f32 %v1318, %v1579
        %v1581 = vpop.f32.mrf.mxu0
        %v1582 = vadd.f32 %v1318, %v1581
        %1583 = vmatmul.bf16.gmra.mxu0 %v1268
        %v1584 = vpop.f32.mrf.mxu0
        %v1585 = vadd.f32 %v1318, %v1584
        %v1586 = vpop.f32.mrf.mxu0
        %v1587 = vadd.f32 %v1318, %v1586
        %1588 = vmatmul.bf16.gmra.mxu0 %v1269
        %v1589 = vpop.f32.mrf.mxu0
        %v1590 = vadd.f32 %v1318, %v1589
        %v1591 = vpop.f32.mrf.mxu0
        %v1592 = vadd.f32 %v1318, %v1591
        %1593 = vmatmul.bf16.gmra.mxu0 %v1270
        %v1594 = vpop.f32.mrf.mxu0
        %v1595 = vadd.f32 %v1318, %v1594
        %v1596 = vpop.f32.mrf.mxu0
        %v1597 = vadd.f32 %v1318, %v1596
        %1598 = vmatmul.bf16.gmra.mxu0 %v1271
        %v1599 = vpop.f32.mrf.mxu0
        %v1600 = vadd.f32 %v1318, %v1599
        %v1601 = vpop.f32.mrf.mxu0
        %v1602 = vadd.f32 %v1318, %v1601
        %1603 = vmatmul.bf16.gmra.mxu0 %v1272
        %v1604 = vpop.f32.mrf.mxu0
        %v1605 = vadd.f32 %v1318, %v1604
        %v1606 = vpop.f32.mrf.mxu0
        %v1607 = vadd.f32 %v1318, %v1606
        %1608 = vmatmul.bf16.gmra.mxu0 %v1273
        %v1609 = vpop.f32.mrf.mxu0
        %v1610 = vadd.f32 %v1318, %v1609
        %v1611 = vpop.f32.mrf.mxu0
        %v1612 = vadd.f32 %v1318, %v1611
        %1613 = vmatmul.bf16.gmra.mxu0 %v1274
        %v1614 = vpop.f32.mrf.mxu0
        %v1615 = vadd.f32 %v1318, %v1614
        %v1616 = vpop.f32.mrf.mxu0
        %v1617 = vadd.f32 %v1318, %v1616
        %1618 = vmatmul.bf16.gmra.mxu0 %v1275
        %v1619 = vpop.f32.mrf.mxu0
        %v1620 = vadd.f32 %v1318, %v1619
        %v1621 = vpop.f32.mrf.mxu0
        %v1622 = vadd.f32 %v1318, %v1621
        %1623 = vmatmul.bf16.gmra.mxu0 %v1276
        %v1624 = vpop.f32.mrf.mxu0
        %v1625 = vadd.f32 %v1318, %v1624
        %v1626 = vpop.f32.mrf.mxu0
        %v1627 = vadd.f32 %v1318, %v1626
        %1628 = vmatmul.bf16.gmra.mxu0 %v1277
        %v1629 = vpop.f32.mrf.mxu0
        %v1630 = vadd.f32 %v1318, %v1629
        %v1631 = vpop.f32.mrf.mxu0
        %v1632 = vadd.f32 %v1318, %v1631
        %1633 = vmatmul.bf16.gmra.mxu0 %v1278
        %v1634 = vpop.f32.mrf.mxu0
        %v1635 = vadd.f32 %v1318, %v1634
        %v1636 = vpop.f32.mrf.mxu0
        %v1637 = vadd.f32 %v1318, %v1636
        %1638 = vmatmul.bf16.gmra.mxu0 %v1279
        %v1639 = vpop.f32.mrf.mxu0
        %v1640 = vadd.f32 %v1318, %v1639
        %v1641 = vpop.f32.mrf.mxu0
        %v1642 = vadd.f32 %v1318, %v1641
        %1643 = vmatmul.bf16.gmra.mxu0 %v1280
        %v1644 = vpop.f32.mrf.mxu0
        %v1645 = vadd.f32 %v1318, %v1644
        %v1646 = vpop.f32.mrf.mxu0
        %v1647 = vadd.f32 %v1318, %v1646
        %1648 = vmatmul.bf16.gmra.mxu0 %v1281
        %v1649 = vpop.f32.mrf.mxu0
        %v1650 = vadd.f32 %v1318, %v1649
        %v1651 = vpop.f32.mrf.mxu0
        %v1652 = vadd.f32 %v1318, %v1651
        %1653 = vmatmul.bf16.gmra.mxu0 %v1282
        %v1654 = vpop.f32.mrf.mxu0
        %v1655 = vadd.f32 %v1318, %v1654
        %v1656 = vpop.f32.mrf.mxu0
        %v1657 = vadd.f32 %v1318, %v1656
        %1658 = vmatmul.bf16.gmra.mxu0 %v1283
        %v1659 = vpop.f32.mrf.mxu0
        %v1660 = vadd.f32 %v1318, %v1659
        %v1661 = vpop.f32.mrf.mxu0
        %v1662 = vadd.f32 %v1318, %v1661
        %1663 = vmatmul.bf16.gmra.mxu0 %v1284
        %v1664 = vpop.f32.mrf.mxu0
        %v1665 = vadd.f32 %v1318, %v1664
        %v1666 = vpop.f32.mrf.mxu0
        %v1667 = vadd.f32 %v1318, %v1666
        %1668 = vmatmul.bf16.gmra.mxu0 %v1285
        %v1669 = vpop.f32.mrf.mxu0
        %v1670 = vadd.f32 %v1318, %v1669
        %v1671 = vpop.f32.mrf.mxu0
        %v1672 = vadd.f32 %v1318, %v1671
        %1673 = vmatmul.bf16.gmra.mxu0 %v1286
        %v1674 = vpop.f32.mrf.mxu0
        %v1675 = vadd.f32 %v1318, %v1674
        %v1676 = vpop.f32.mrf.mxu0
        %v1677 = vadd.f32 %v1318, %v1676
        %1678 = vmatmul.bf16.gmra.mxu0 %v1287
        %v1679 = vpop.f32.mrf.mxu0
        %v1680 = vadd.f32 %v1318, %v1679
        %v1681 = vpop.f32.mrf.mxu0
        %v1682 = vadd.f32 %v1318, %v1681
        %1683 = vmatmul.bf16.gmra.mxu0 %v1288
        %v1684 = vpop.f32.mrf.mxu0
        %v1685 = vadd.f32 %v1318, %v1684
        %v1686 = vpop.f32.mrf.mxu0
        %v1687 = vadd.f32 %v1318, %v1686
        %1688 = vmatmul.bf16.gmra.mxu0 %v1289
        %v1689 = vpop.f32.mrf.mxu0
        %v1690 = vadd.f32 %v1318, %v1689
        %v1691 = vpop.f32.mrf.mxu0
        %v1692 = vadd.f32 %v1318, %v1691
        %1693 = vmatmul.bf16.gmra.mxu0 %v1290
        %v1694 = vpop.f32.mrf.mxu0
        %v1695 = vadd.f32 %v1318, %v1694
        %v1696 = vpop.f32.mrf.mxu0
        %v1697 = vadd.f32 %v1318, %v1696
        %1698 = vmatmul.bf16.gmra.mxu0 %v1291
        %v1699 = vpop.f32.mrf.mxu0
        %v1700 = vadd.f32 %v1318, %v1699
        %v1701 = vpop.f32.mrf.mxu0
        %v1702 = vadd.f32 %v1318, %v1701
        %1703 = vmatmul.bf16.gmra.mxu0 %v1292
        %v1704 = vpop.f32.mrf.mxu0
        %v1705 = vadd.f32 %v1318, %v1704
        %v1706 = vpop.f32.mrf.mxu0
        %v1707 = vadd.f32 %v1318, %v1706
        %1708 = vmatmul.bf16.gmra.mxu0 %v1293
        %v1709 = vpop.f32.mrf.mxu0
        %v1710 = vadd.f32 %v1318, %v1709
        %v1711 = vpop.f32.mrf.mxu0
        %v1712 = vadd.f32 %v1318, %v1711
        %1713 = vmatmul.bf16.gmra.mxu0 %v1294
        %v1714 = vpop.f32.mrf.mxu0
        %v1715 = vadd.f32 %v1318, %v1714
        %v1716 = vpop.f32.mrf.mxu0
        %v1717 = vadd.f32 %v1318, %v1716
        %1718 = vmatmul.bf16.gmra.mxu0 %v1295
        %v1719 = vpop.f32.mrf.mxu0
        %v1720 = vadd.f32 %v1318, %v1719
        %v1721 = vpop.f32.mrf.mxu0
        %v1722 = vadd.f32 %v1318, %v1721
        %1723 = vmatmul.bf16.gmra.mxu0 %v1296
        %v1724 = vpop.f32.mrf.mxu0
        %v1725 = vadd.f32 %v1318, %v1724
        %v1726 = vpop.f32.mrf.mxu0
        %v1727 = vadd.f32 %v1318, %v1726
        %1728 = vmatmul.bf16.gmra.mxu0 %v1297
        %v1729 = vpop.f32.mrf.mxu0
        %v1730 = vadd.f32 %v1318, %v1729
        %v1731 = vpop.f32.mrf.mxu0
        %v1732 = vadd.f32 %v1318, %v1731
        %1733 = vmatmul.bf16.gmra.mxu0 %v1298
        %v1734 = vpop.f32.mrf.mxu0
        %v1735 = vadd.f32 %v1318, %v1734
        %v1736 = vpop.f32.mrf.mxu0
        %v1737 = vadd.f32 %v1318, %v1736
        %1738 = vdwg.mxu0
        %v1739 = vmax.f32 %v1411, %v1416
        %v1740 = vmax.f32 %v1413, %v1418
        %v1741 = vmax.f32 %v1739, %v1421
        %v1742 = vmax.f32 %v1740, %v1423
        %v1743 = vmax.f32 %v1741, %v1426
        %v1744 = vmax.f32 %v1742, %v1428
        %v1745 = vmax.f32 %v1743, %v1431
        %v1746 = vmax.f32 %v1744, %v1433
        %v1747 = vmax.f32 %v1745, %v1436
        %v1748 = vmax.f32 %v1746, %v1438
        %v1749 = vmax.f32 %v1747, %v1441
        %v1750 = vmax.f32 %v1748, %v1443
        %v1751 = vmax.f32 %v1749, %v1446
        %v1752 = vmax.f32 %v1750, %v1448
        %v1753 = vmax.f32 %v1751, %v1451
        %v1754 = vmax.f32 %v1752, %v1453
        %v1755 = vmax.f32 %v1753, %v1456
        %v1756 = vmax.f32 %v1754, %v1458
        %v1757 = vmax.f32 %v1755, %v1461
        %v1758 = vmax.f32 %v1756, %v1463
        %v1759 = vmax.f32 %v1757, %v1466
        %v1760 = vmax.f32 %v1758, %v1468
        %v1761 = vmax.f32 %v1759, %v1471
        %v1762 = vmax.f32 %v1760, %v1473
        %v1763 = vmax.f32 %v1761, %v1476
        %v1764 = vmax.f32 %v1762, %v1478
        %v1765 = vmax.f32 %v1763, %v1481
        %v1766 = vmax.f32 %v1764, %v1483
        %v1767 = vmax.f32 %v1765, %v1486
        %v1768 = vmax.f32 %v1766, %v1488
        %v1769 = vmax.f32 %v1767, %v1491
        %v1770 = vmax.f32 %v1768, %v1493
        %v1771 = vmax.f32 %v1769, %v1496
        %v1772 = vmax.f32 %v1770, %v1498
        %v1773 = vmax.f32 %v1771, %v1501
        %v1774 = vmax.f32 %v1772, %v1503
        %v1775 = vmax.f32 %v1773, %v1506
        %v1776 = vmax.f32 %v1774, %v1508
        %v1777 = vmax.f32 %v1775, %v1511
        %v1778 = vmax.f32 %v1776, %v1513
        %v1779 = vmax.f32 %v1777, %v1516
        %v1780 = vmax.f32 %v1778, %v1518
        %v1781 = vmax.f32 %v1779, %v1521
        %v1782 = vmax.f32 %v1780, %v1523
        %v1783 = vmax.f32 %v1781, %v1526
        %v1784 = vmax.f32 %v1782, %v1528
        %v1785 = vmax.f32 %v1783, %v1531
        %v1786 = vmax.f32 %v1784, %v1533
        %v1787 = vmax.f32 %v1785, %v1536
        %v1788 = vmax.f32 %v1786, %v1538
        %v1789 = vmax.f32 %v1787, %v1541
        %v1790 = vmax.f32 %v1788, %v1543
        %v1791 = vmax.f32 %v1789, %v1546
        %v1792 = vmax.f32 %v1790, %v1548
        %v1793 = vmax.f32 %v1791, %v1551
        %v1794 = vmax.f32 %v1792, %v1553
        %v1795 = vmax.f32 %v1793, %v1556
        %v1796 = vmax.f32 %v1794, %v1558
        %v1797 = vmax.f32 %v1795, %v1561
        %v1798 = vmax.f32 %v1796, %v1563
        %v1799 = vmax.f32 %v1797, %v1566
        %v1800 = vmax.f32 %v1798, %v1568
        %v1801 = vmax.f32 %v1799, %v1800
        %v1802 = vmax.f32 %v1580, %v1585
        %v1803 = vmax.f32 %v1582, %v1587
        %v1804 = vmax.f32 %v1802, %v1590
        %v1805 = vmax.f32 %v1803, %v1592
        %v1806 = vmax.f32 %v1804, %v1595
        %v1807 = vmax.f32 %v1805, %v1597
        %v1808 = vmax.f32 %v1806, %v1600
        %v1809 = vmax.f32 %v1807, %v1602
        %v1810 = vmax.f32 %v1808, %v1605
        %v1811 = vmax.f32 %v1809, %v1607
        %v1812 = vmax.f32 %v1810, %v1610
        %v1813 = vmax.f32 %v1811, %v1612
        %v1814 = vmax.f32 %v1812, %v1615
        %v1815 = vmax.f32 %v1813, %v1617
        %v1816 = vmax.f32 %v1814, %v1620
        %v1817 = vmax.f32 %v1815, %v1622
        %v1818 = vmax.f32 %v1816, %v1625
        %v1819 = vmax.f32 %v1817, %v1627
        %v1820 = vmax.f32 %v1818, %v1630
        %v1821 = vmax.f32 %v1819, %v1632
        %v1822 = vmax.f32 %v1820, %v1635
        %v1823 = vmax.f32 %v1821, %v1637
        %v1824 = vmax.f32 %v1822, %v1640
        %v1825 = vmax.f32 %v1823, %v1642
        %v1826 = vmax.f32 %v1824, %v1645
        %v1827 = vmax.f32 %v1825, %v1647
        %v1828 = vmax.f32 %v1826, %v1650
        %v1829 = vmax.f32 %v1827, %v1652
        %v1830 = vmax.f32 %v1828, %v1655
        %v1831 = vmax.f32 %v1829, %v1657
        %v1832 = vmax.f32 %v1830, %v1660
        %v1833 = vmax.f32 %v1831, %v1662
        %v1834 = vmax.f32 %v1832, %v1665
        %v1835 = vmax.f32 %v1833, %v1667
        %v1836 = vmax.f32 %v1834, %v1670
        %v1837 = vmax.f32 %v1835, %v1672
        %v1838 = vmax.f32 %v1836, %v1675
        %v1839 = vmax.f32 %v1837, %v1677
        %v1840 = vmax.f32 %v1838, %v1680
        %v1841 = vmax.f32 %v1839, %v1682
        %v1842 = vmax.f32 %v1840, %v1685
        %v1843 = vmax.f32 %v1841, %v1687
        %v1844 = vmax.f32 %v1842, %v1690
        %v1845 = vmax.f32 %v1843, %v1692
        %v1846 = vmax.f32 %v1844, %v1695
        %v1847 = vmax.f32 %v1845, %v1697
        %v1848 = vmax.f32 %v1846, %v1700
        %v1849 = vmax.f32 %v1847, %v1702
        %v1850 = vmax.f32 %v1848, %v1705
        %v1851 = vmax.f32 %v1849, %v1707
        %v1852 = vmax.f32 %v1850, %v1710
        %v1853 = vmax.f32 %v1851, %v1712
        %v1854 = vmax.f32 %v1852, %v1715
        %v1855 = vmax.f32 %v1853, %v1717
        %v1856 = vmax.f32 %v1854, %v1720
        %v1857 = vmax.f32 %v1855, %v1722
        %v1858 = vmax.f32 %v1856, %v1725
        %v1859 = vmax.f32 %v1857, %v1727
        %v1860 = vmax.f32 %v1858, %v1730
        %v1861 = vmax.f32 %v1859, %v1732
        %v1862 = vmax.f32 %v1860, %v1735
        %v1863 = vmax.f32 %v1861, %v1737
        %v1864 = vmax.f32 %v1862, %v1863
        %v1865 = vld [vmem:[#allocation2] sm:$0xff]
        %v1866 = vld [vmem:[#allocation2 + $0x8] sm:$0xff]
        %v1867 = vmax.f32 %v1865, %v1801
        %v1868 = vmax.f32 %v1866, %v1864
        %1869 = vst [vmem:[#allocation2] sm:$0xff] %v1867
        %1870 = vst [vmem:[#allocation2 + $0x8] sm:$0xff] %v1868
        %v1871 = vld [vmem:[%s5 + $0x8] sm:$0xff]
        %v1872 = vld [vmem:[%s5 + $0x28] sm:$0xff]
        %v1873 = vld [vmem:[%s5 + $0x48] sm:$0xff]
        %v1874 = vld [vmem:[%s5 + $0x68] sm:$0xff]
        %v1875 = vld [vmem:[%s5 + $0x88] sm:$0xff]
        %v1876 = vld [vmem:[%s5 + $0xa8] sm:$0xff]
        %v1877 = vld [vmem:[%s5 + $0xc8] sm:$0xff]
        %v1878 = vld [vmem:[%s5 + $0xe8] sm:$0xff]
        %v1879 = vld [vmem:[%s5 + $0x108] sm:$0xff]
        %v1880 = vld [vmem:[%s5 + $0x128] sm:$0xff]
        %v1881 = vld [vmem:[%s5 + $0x148] sm:$0xff]
        %v1882 = vld [vmem:[%s5 + $0x168] sm:$0xff]
        %v1883 = vld [vmem:[%s5 + $0x188] sm:$0xff]
        %v1884 = vld [vmem:[%s5 + $0x1a8] sm:$0xff]
        %v1885 = vld [vmem:[%s5 + $0x1c8] sm:$0xff]
        %v1886 = vld [vmem:[%s5 + $0x1e8] sm:$0xff]
        %v1887 = vld [vmem:[%s6 + $0x2] sm:$0x3]
        %v1889 = vperm.slane %v1887, 0
        %v1890 = vperm.slane %v1887, 1
        %v1909 = vunpack.c.l.b16 %v1871
        %v1910 = vunpack.c.h.b16 %v1871
        %v1911 = vunpack.c.l.b16 %v1872
        %v1912 = vunpack.c.h.b16 %v1872
        %v1913 = vunpack.c.l.b16 %v1873
        %v1914 = vunpack.c.h.b16 %v1873
        %v1915 = vunpack.c.l.b16 %v1874
        %v1916 = vunpack.c.h.b16 %v1874
        %v1917 = vunpack.c.l.b16 %v1875
        %v1918 = vunpack.c.h.b16 %v1875
        %v1919 = vunpack.c.l.b16 %v1876
        %v1920 = vunpack.c.h.b16 %v1876
        %v1921 = vunpack.c.l.b16 %v1877
        %v1922 = vunpack.c.h.b16 %v1877
        %v1923 = vunpack.c.l.b16 %v1878
        %v1924 = vunpack.c.h.b16 %v1878
        %v1925 = vunpack.c.l.b16 %v1879
        %v1926 = vunpack.c.h.b16 %v1879
        %v1927 = vunpack.c.l.b16 %v1880
        %v1928 = vunpack.c.h.b16 %v1880
        %v1929 = vunpack.c.l.b16 %v1881
        %v1930 = vunpack.c.h.b16 %v1881
        %v1931 = vunpack.c.l.b16 %v1882
        %v1932 = vunpack.c.h.b16 %v1882
        %v1933 = vunpack.c.l.b16 %v1883
        %v1934 = vunpack.c.h.b16 %v1883
        %v1935 = vunpack.c.l.b16 %v1884
        %v1936 = vunpack.c.h.b16 %v1884
        %v1937 = vunpack.c.l.b16 %v1885
        %v1938 = vunpack.c.h.b16 %v1885
        %v1939 = vunpack.c.l.b16 %v1886
        %v1940 = vunpack.c.h.b16 %v1886
        %v1941 = vpack.c.b16 %v1911, %v1909
        %v1942 = vpack.c.b16 %v1912, %v1910
        %v1943 = vpack.c.b16 %v1915, %v1913
        %v1944 = vpack.c.b16 %v1916, %v1914
        %v1945 = vpack.c.b16 %v1919, %v1917
        %v1946 = vpack.c.b16 %v1920, %v1918
        %v1947 = vpack.c.b16 %v1923, %v1921
        %v1948 = vpack.c.b16 %v1924, %v1922
        %v1949 = vpack.c.b16 %v1927, %v1925
        %v1950 = vpack.c.b16 %v1928, %v1926
        %v1951 = vpack.c.b16 %v1931, %v1929
        %v1952 = vpack.c.b16 %v1932, %v1930
        %v1953 = vpack.c.b16 %v1935, %v1933
        %v1954 = vpack.c.b16 %v1936, %v1934
        %v1955 = vpack.c.b16 %v1939, %v1937
        %v1956 = vpack.c.b16 %v1940, %v1938
        %1973 = vmatpush.bf16.msra.mxu0 %v1955
        %1974 = vmatpush.bf16.msra.mxu0 %v1953
        %1975 = vmatpush.bf16.msra.mxu0 %v1951
        %1976 = vmatpush.bf16.msra.mxu0 %v1949
        %1977 = vmatpush.bf16.msra.mxu0 %v1947
        %1978 = vmatpush.bf16.msra.mxu0 %v1945
        %1979 = vmatpush.bf16.msra.mxu0 %v1943
        %1980 = vmatpush.bf16.msra.mxu0 %v1941
        %1981 = vmatmul.bf16.gmra.mxu0 %v1267
        %v1982 = vpop.f32.mrf.mxu0
        %v1983 = vadd.f32 %v1889, %v1982
        %v1984 = vpop.f32.mrf.mxu0
        %v1985 = vadd.f32 %v1889, %v1984
        %1986 = vmatmul.bf16.gmra.mxu0 %v1268
        %v1987 = vpop.f32.mrf.mxu0
        %v1988 = vadd.f32 %v1889, %v1987
        %v1989 = vpop.f32.mrf.mxu0
        %v1990 = vadd.f32 %v1889, %v1989
        %1991 = vmatmul.bf16.gmra.mxu0 %v1269
        %v1992 = vpop.f32.mrf.mxu0
        %v1993 = vadd.f32 %v1889, %v1992
        %v1994 = vpop.f32.mrf.mxu0
        %v1995 = vadd.f32 %v1889, %v1994
        %1996 = vmatmul.bf16.gmra.mxu0 %v1270
        %v1997 = vpop.f32.mrf.mxu0
        %v1998 = vadd.f32 %v1889, %v1997
        %v1999 = vpop.f32.mrf.mxu0
        %v2000 = vadd.f32 %v1889, %v1999
        %2001 = vmatmul.bf16.gmra.mxu0 %v1271
        %v2002 = vpop.f32.mrf.mxu0
        %v2003 = vadd.f32 %v1889, %v2002
        %v2004 = vpop.f32.mrf.mxu0
        %v2005 = vadd.f32 %v1889, %v2004
        %2006 = vmatmul.bf16.gmra.mxu0 %v1272
        %v2007 = vpop.f32.mrf.mxu0
        %v2008 = vadd.f32 %v1889, %v2007
        %v2009 = vpop.f32.mrf.mxu0
        %v2010 = vadd.f32 %v1889, %v2009
        %2011 = vmatmul.bf16.gmra.mxu0 %v1273
        %v2012 = vpop.f32.mrf.mxu0
        %v2013 = vadd.f32 %v1889, %v2012
        %v2014 = vpop.f32.mrf.mxu0
        %v2015 = vadd.f32 %v1889, %v2014
        %2016 = vmatmul.bf16.gmra.mxu0 %v1274
        %v2017 = vpop.f32.mrf.mxu0
        %v2018 = vadd.f32 %v1889, %v2017
        %v2019 = vpop.f32.mrf.mxu0
        %v2020 = vadd.f32 %v1889, %v2019
        %2021 = vmatmul.bf16.gmra.mxu0 %v1275
        %v2022 = vpop.f32.mrf.mxu0
        %v2023 = vadd.f32 %v1889, %v2022
        %v2024 = vpop.f32.mrf.mxu0
        %v2025 = vadd.f32 %v1889, %v2024
        %2026 = vmatmul.bf16.gmra.mxu0 %v1276
        %v2027 = vpop.f32.mrf.mxu0
        %v2028 = vadd.f32 %v1889, %v2027
        %v2029 = vpop.f32.mrf.mxu0
        %v2030 = vadd.f32 %v1889, %v2029
        %2031 = vmatmul.bf16.gmra.mxu0 %v1277
        %v2032 = vpop.f32.mrf.mxu0
        %v2033 = vadd.f32 %v1889, %v2032
        %v2034 = vpop.f32.mrf.mxu0
        %v2035 = vadd.f32 %v1889, %v2034
        %2036 = vmatmul.bf16.gmra.mxu0 %v1278
        %v2037 = vpop.f32.mrf.mxu0
        %v2038 = vadd.f32 %v1889, %v2037
        %v2039 = vpop.f32.mrf.mxu0
        %v2040 = vadd.f32 %v1889, %v2039
        %2041 = vmatmul.bf16.gmra.mxu0 %v1279
        %v2042 = vpop.f32.mrf.mxu0
        %v2043 = vadd.f32 %v1889, %v2042
        %v2044 = vpop.f32.mrf.mxu0
        %v2045 = vadd.f32 %v1889, %v2044
        %2046 = vmatmul.bf16.gmra.mxu0 %v1280
        %v2047 = vpop.f32.mrf.mxu0
        %v2048 = vadd.f32 %v1889, %v2047
        %v2049 = vpop.f32.mrf.mxu0
        %v2050 = vadd.f32 %v1889, %v2049
        %2051 = vmatmul.bf16.gmra.mxu0 %v1281
        %v2052 = vpop.f32.mrf.mxu0
        %v2053 = vadd.f32 %v1889, %v2052
        %v2054 = vpop.f32.mrf.mxu0
        %v2055 = vadd.f32 %v1889, %v2054
        %2056 = vmatmul.bf16.gmra.mxu0 %v1282
        %v2057 = vpop.f32.mrf.mxu0
        %v2058 = vadd.f32 %v1889, %v2057
        %v2059 = vpop.f32.mrf.mxu0
        %v2060 = vadd.f32 %v1889, %v2059
        %2061 = vmatmul.bf16.gmra.mxu0 %v1283
        %v2062 = vpop.f32.mrf.mxu0
        %v2063 = vadd.f32 %v1889, %v2062
        %v2064 = vpop.f32.mrf.mxu0
        %v2065 = vadd.f32 %v1889, %v2064
        %2066 = vmatmul.bf16.gmra.mxu0 %v1284
        %v2067 = vpop.f32.mrf.mxu0
        %v2068 = vadd.f32 %v1889, %v2067
        %v2069 = vpop.f32.mrf.mxu0
        %v2070 = vadd.f32 %v1889, %v2069
        %2071 = vmatmul.bf16.gmra.mxu0 %v1285
        %v2072 = vpop.f32.mrf.mxu0
        %v2073 = vadd.f32 %v1889, %v2072
        %v2074 = vpop.f32.mrf.mxu0
        %v2075 = vadd.f32 %v1889, %v2074
        %2076 = vmatmul.bf16.gmra.mxu0 %v1286
        %v2077 = vpop.f32.mrf.mxu0
        %v2078 = vadd.f32 %v1889, %v2077
        %v2079 = vpop.f32.mrf.mxu0
        %v2080 = vadd.f32 %v1889, %v2079
        %2081 = vmatmul.bf16.gmra.mxu0 %v1287
        %v2082 = vpop.f32.mrf.mxu0
        %v2083 = vadd.f32 %v1889, %v2082
        %v2084 = vpop.f32.mrf.mxu0
        %v2085 = vadd.f32 %v1889, %v2084
        %2086 = vmatmul.bf16.gmra.mxu0 %v1288
        %v2087 = vpop.f32.mrf.mxu0
        %v2088 = vadd.f32 %v1889, %v2087
        %v2089 = vpop.f32.mrf.mxu0
        %v2090 = vadd.f32 %v1889, %v2089
        %2091 = vmatmul.bf16.gmra.mxu0 %v1289
        %v2092 = vpop.f32.mrf.mxu0
        %v2093 = vadd.f32 %v1889, %v2092
        %v2094 = vpop.f32.mrf.mxu0
        %v2095 = vadd.f32 %v1889, %v2094
        %2096 = vmatmul.bf16.gmra.mxu0 %v1290
        %v2097 = vpop.f32.mrf.mxu0
        %v2098 = vadd.f32 %v1889, %v2097
        %v2099 = vpop.f32.mrf.mxu0
        %v2100 = vadd.f32 %v1889, %v2099
        %2101 = vmatmul.bf16.gmra.mxu0 %v1291
        %v2102 = vpop.f32.mrf.mxu0
        %v2103 = vadd.f32 %v1889, %v2102
        %v2104 = vpop.f32.mrf.mxu0
        %v2105 = vadd.f32 %v1889, %v2104
        %2106 = vmatmul.bf16.gmra.mxu0 %v1292
        %v2107 = vpop.f32.mrf.mxu0
        %v2108 = vadd.f32 %v1889, %v2107
        %v2109 = vpop.f32.mrf.mxu0
        %v2110 = vadd.f32 %v1889, %v2109
        %2111 = vmatmul.bf16.gmra.mxu0 %v1293
        %v2112 = vpop.f32.mrf.mxu0
        %v2113 = vadd.f32 %v1889, %v2112
        %v2114 = vpop.f32.mrf.mxu0
        %v2115 = vadd.f32 %v1889, %v2114
        %2116 = vmatmul.bf16.gmra.mxu0 %v1294
        %v2117 = vpop.f32.mrf.mxu0
        %v2118 = vadd.f32 %v1889, %v2117
        %v2119 = vpop.f32.mrf.mxu0
        %v2120 = vadd.f32 %v1889, %v2119
        %2121 = vmatmul.bf16.gmra.mxu0 %v1295
        %v2122 = vpop.f32.mrf.mxu0
        %v2123 = vadd.f32 %v1889, %v2122
        %v2124 = vpop.f32.mrf.mxu0
        %v2125 = vadd.f32 %v1889, %v2124
        %2126 = vmatmul.bf16.gmra.mxu0 %v1296
        %v2127 = vpop.f32.mrf.mxu0
        %v2128 = vadd.f32 %v1889, %v2127
        %v2129 = vpop.f32.mrf.mxu0
        %v2130 = vadd.f32 %v1889, %v2129
        %2131 = vmatmul.bf16.gmra.mxu0 %v1297
        %v2132 = vpop.f32.mrf.mxu0
        %v2133 = vadd.f32 %v1889, %v2132
        %v2134 = vpop.f32.mrf.mxu0
        %v2135 = vadd.f32 %v1889, %v2134
        %2136 = vmatmul.bf16.gmra.mxu0 %v1298
        %v2137 = vpop.f32.mrf.mxu0
        %v2138 = vadd.f32 %v1889, %v2137
        %v2139 = vpop.f32.mrf.mxu0
        %v2140 = vadd.f32 %v1889, %v2139
        %2141 = vdwg.mxu0
        %2142 = vmatpush.bf16.msra.mxu0 %v1956
        %2143 = vmatpush.bf16.msra.mxu0 %v1954
        %2144 = vmatpush.bf16.msra.mxu0 %v1952
        %2145 = vmatpush.bf16.msra.mxu0 %v1950
        %2146 = vmatpush.bf16.msra.mxu0 %v1948
        %2147 = vmatpush.bf16.msra.mxu0 %v1946
        %2148 = vmatpush.bf16.msra.mxu0 %v1944
        %2149 = vmatpush.bf16.msra.mxu0 %v1942
        %2150 = vmatmul.bf16.gmra.mxu0 %v1267
        %v2151 = vpop.f32.mrf.mxu0
        %v2152 = vadd.f32 %v1890, %v2151
        %v2153 = vpop.f32.mrf.mxu0
        %v2154 = vadd.f32 %v1890, %v2153
        %2155 = vmatmul.bf16.gmra.mxu0 %v1268
        %v2156 = vpop.f32.mrf.mxu0
        %v2157 = vadd.f32 %v1890, %v2156
        %v2158 = vpop.f32.mrf.mxu0
        %v2159 = vadd.f32 %v1890, %v2158
        %2160 = vmatmul.bf16.gmra.mxu0 %v1269
        %v2161 = vpop.f32.mrf.mxu0
        %v2162 = vadd.f32 %v1890, %v2161
        %v2163 = vpop.f32.mrf.mxu0
        %v2164 = vadd.f32 %v1890, %v2163
        %2165 = vmatmul.bf16.gmra.mxu0 %v1270
        %v2166 = vpop.f32.mrf.mxu0
        %v2167 = vadd.f32 %v1890, %v2166
        %v2168 = vpop.f32.mrf.mxu0
        %v2169 = vadd.f32 %v1890, %v2168
        %2170 = vmatmul.bf16.gmra.mxu0 %v1271
        %v2171 = vpop.f32.mrf.mxu0
        %v2172 = vadd.f32 %v1890, %v2171
        %v2173 = vpop.f32.mrf.mxu0
        %v2174 = vadd.f32 %v1890, %v2173
        %2175 = vmatmul.bf16.gmra.mxu0 %v1272
        %v2176 = vpop.f32.mrf.mxu0
        %v2177 = vadd.f32 %v1890, %v2176
        %v2178 = vpop.f32.mrf.mxu0
        %v2179 = vadd.f32 %v1890, %v2178
        %2180 = vmatmul.bf16.gmra.mxu0 %v1273
        %v2181 = vpop.f32.mrf.mxu0
        %v2182 = vadd.f32 %v1890, %v2181
        %v2183 = vpop.f32.mrf.mxu0
        %v2184 = vadd.f32 %v1890, %v2183
        %2185 = vmatmul.bf16.gmra.mxu0 %v1274
        %v2186 = vpop.f32.mrf.mxu0
        %v2187 = vadd.f32 %v1890, %v2186
        %v2188 = vpop.f32.mrf.mxu0
        %v2189 = vadd.f32 %v1890, %v2188
        %2190 = vmatmul.bf16.gmra.mxu0 %v1275
        %v2191 = vpop.f32.mrf.mxu0
        %v2192 = vadd.f32 %v1890, %v2191
        %v2193 = vpop.f32.mrf.mxu0
        %v2194 = vadd.f32 %v1890, %v2193
        %2195 = vmatmul.bf16.gmra.mxu0 %v1276
        %v2196 = vpop.f32.mrf.mxu0
        %v2197 = vadd.f32 %v1890, %v2196
        %v2198 = vpop.f32.mrf.mxu0
        %v2199 = vadd.f32 %v1890, %v2198
        %2200 = vmatmul.bf16.gmra.mxu0 %v1277
        %v2201 = vpop.f32.mrf.mxu0
        %v2202 = vadd.f32 %v1890, %v2201
        %v2203 = vpop.f32.mrf.mxu0
        %v2204 = vadd.f32 %v1890, %v2203
        %2205 = vmatmul.bf16.gmra.mxu0 %v1278
        %v2206 = vpop.f32.mrf.mxu0
        %v2207 = vadd.f32 %v1890, %v2206
        %v2208 = vpop.f32.mrf.mxu0
        %v2209 = vadd.f32 %v1890, %v2208
        %2210 = vmatmul.bf16.gmra.mxu0 %v1279
        %v2211 = vpop.f32.mrf.mxu0
        %v2212 = vadd.f32 %v1890, %v2211
        %v2213 = vpop.f32.mrf.mxu0
        %v2214 = vadd.f32 %v1890, %v2213
        %2215 = vmatmul.bf16.gmra.mxu0 %v1280
        %v2216 = vpop.f32.mrf.mxu0
        %v2217 = vadd.f32 %v1890, %v2216
        %v2218 = vpop.f32.mrf.mxu0
        %v2219 = vadd.f32 %v1890, %v2218
        %2220 = vmatmul.bf16.gmra.mxu0 %v1281
        %v2221 = vpop.f32.mrf.mxu0
        %v2222 = vadd.f32 %v1890, %v2221
        %v2223 = vpop.f32.mrf.mxu0
        %v2224 = vadd.f32 %v1890, %v2223
        %2225 = vmatmul.bf16.gmra.mxu0 %v1282
        %v2226 = vpop.f32.mrf.mxu0
        %v2227 = vadd.f32 %v1890, %v2226
        %v2228 = vpop.f32.mrf.mxu0
        %v2229 = vadd.f32 %v1890, %v2228
        %2230 = vmatmul.bf16.gmra.mxu0 %v1283
        %v2231 = vpop.f32.mrf.mxu0
        %v2232 = vadd.f32 %v1890, %v2231
        %v2233 = vpop.f32.mrf.mxu0
        %v2234 = vadd.f32 %v1890, %v2233
        %2235 = vmatmul.bf16.gmra.mxu0 %v1284
        %v2236 = vpop.f32.mrf.mxu0
        %v2237 = vadd.f32 %v1890, %v2236
        %v2238 = vpop.f32.mrf.mxu0
        %v2239 = vadd.f32 %v1890, %v2238
        %2240 = vmatmul.bf16.gmra.mxu0 %v1285
        %v2241 = vpop.f32.mrf.mxu0
        %v2242 = vadd.f32 %v1890, %v2241
        %v2243 = vpop.f32.mrf.mxu0
        %v2244 = vadd.f32 %v1890, %v2243
        %2245 = vmatmul.bf16.gmra.mxu0 %v1286
        %v2246 = vpop.f32.mrf.mxu0
        %v2247 = vadd.f32 %v1890, %v2246
        %v2248 = vpop.f32.mrf.mxu0
        %v2249 = vadd.f32 %v1890, %v2248
        %2250 = vmatmul.bf16.gmra.mxu0 %v1287
        %v2251 = vpop.f32.mrf.mxu0
        %v2252 = vadd.f32 %v1890, %v2251
        %v2253 = vpop.f32.mrf.mxu0
        %v2254 = vadd.f32 %v1890, %v2253
        %2255 = vmatmul.bf16.gmra.mxu0 %v1288
        %v2256 = vpop.f32.mrf.mxu0
        %v2257 = vadd.f32 %v1890, %v2256
        %v2258 = vpop.f32.mrf.mxu0
        %v2259 = vadd.f32 %v1890, %v2258
        %2260 = vmatmul.bf16.gmra.mxu0 %v1289
        %v2261 = vpop.f32.mrf.mxu0
        %v2262 = vadd.f32 %v1890, %v2261
        %v2263 = vpop.f32.mrf.mxu0
        %v2264 = vadd.f32 %v1890, %v2263
        %2265 = vmatmul.bf16.gmra.mxu0 %v1290
        %v2266 = vpop.f32.mrf.mxu0
        %v2267 = vadd.f32 %v1890, %v2266
        %v2268 = vpop.f32.mrf.mxu0
        %v2269 = vadd.f32 %v1890, %v2268
        %2270 = vmatmul.bf16.gmra.mxu0 %v1291
        %v2271 = vpop.f32.mrf.mxu0
        %v2272 = vadd.f32 %v1890, %v2271
        %v2273 = vpop.f32.mrf.mxu0
        %v2274 = vadd.f32 %v1890, %v2273
        %2275 = vmatmul.bf16.gmra.mxu0 %v1292
        %v2276 = vpop.f32.mrf.mxu0
        %v2277 = vadd.f32 %v1890, %v2276
        %v2278 = vpop.f32.mrf.mxu0
        %v2279 = vadd.f32 %v1890, %v2278
        %2280 = vmatmul.bf16.gmra.mxu0 %v1293
        %v2281 = vpop.f32.mrf.mxu0
        %v2282 = vadd.f32 %v1890, %v2281
        %v2283 = vpop.f32.mrf.mxu0
        %v2284 = vadd.f32 %v1890, %v2283
        %2285 = vmatmul.bf16.gmra.mxu0 %v1294
        %v2286 = vpop.f32.mrf.mxu0
        %v2287 = vadd.f32 %v1890, %v2286
        %v2288 = vpop.f32.mrf.mxu0
        %v2289 = vadd.f32 %v1890, %v2288
        %2290 = vmatmul.bf16.gmra.mxu0 %v1295
        %v2291 = vpop.f32.mrf.mxu0
        %v2292 = vadd.f32 %v1890, %v2291
        %v2293 = vpop.f32.mrf.mxu0
        %v2294 = vadd.f32 %v1890, %v2293
        %2295 = vmatmul.bf16.gmra.mxu0 %v1296
        %v2296 = vpop.f32.mrf.mxu0
        %v2297 = vadd.f32 %v1890, %v2296
        %v2298 = vpop.f32.mrf.mxu0
        %v2299 = vadd.f32 %v1890, %v2298
        %2300 = vmatmul.bf16.gmra.mxu0 %v1297
        %v2301 = vpop.f32.mrf.mxu0
        %v2302 = vadd.f32 %v1890, %v2301
        %v2303 = vpop.f32.mrf.mxu0
        %v2304 = vadd.f32 %v1890, %v2303
        %2305 = vmatmul.bf16.gmra.mxu0 %v1298
        %v2306 = vpop.f32.mrf.mxu0
        %v2307 = vadd.f32 %v1890, %v2306
        %v2308 = vpop.f32.mrf.mxu0
        %v2309 = vadd.f32 %v1890, %v2308
        %2310 = vdwg.mxu0
        %v2311 = vmax.f32 %v1983, %v1988
        %v2312 = vmax.f32 %v1985, %v1990
        %v2313 = vmax.f32 %v2311, %v1993
        %v2314 = vmax.f32 %v2312, %v1995
        %v2315 = vmax.f32 %v2313, %v1998
        %v2316 = vmax.f32 %v2314, %v2000
        %v2317 = vmax.f32 %v2315, %v2003
        %v2318 = vmax.f32 %v2316, %v2005
        %v2319 = vmax.f32 %v2317, %v2008
        %v2320 = vmax.f32 %v2318, %v2010
        %v2321 = vmax.f32 %v2319, %v2013
        %v2322 = vmax.f32 %v2320, %v2015
        %v2323 = vmax.f32 %v2321, %v2018
        %v2324 = vmax.f32 %v2322, %v2020
        %v2325 = vmax.f32 %v2323, %v2023
        %v2326 = vmax.f32 %v2324, %v2025
        %v2327 = vmax.f32 %v2325, %v2028
        %v2328 = vmax.f32 %v2326, %v2030
        %v2329 = vmax.f32 %v2327, %v2033
        %v2330 = vmax.f32 %v2328, %v2035
        %v2331 = vmax.f32 %v2329, %v2038
        %v2332 = vmax.f32 %v2330, %v2040
        %v2333 = vmax.f32 %v2331, %v2043
        %v2334 = vmax.f32 %v2332, %v2045
        %v2335 = vmax.f32 %v2333, %v2048
        %v2336 = vmax.f32 %v2334, %v2050
        %v2337 = vmax.f32 %v2335, %v2053
        %v2338 = vmax.f32 %v2336, %v2055
        %v2339 = vmax.f32 %v2337, %v2058
        %v2340 = vmax.f32 %v2338, %v2060
        %v2341 = vmax.f32 %v2339, %v2063
        %v2342 = vmax.f32 %v2340, %v2065
        %v2343 = vmax.f32 %v2341, %v2068
        %v2344 = vmax.f32 %v2342, %v2070
        %v2345 = vmax.f32 %v2343, %v2073
        %v2346 = vmax.f32 %v2344, %v2075
        %v2347 = vmax.f32 %v2345, %v2078
        %v2348 = vmax.f32 %v2346, %v2080
        %v2349 = vmax.f32 %v2347, %v2083
        %v2350 = vmax.f32 %v2348, %v2085
        %v2351 = vmax.f32 %v2349, %v2088
        %v2352 = vmax.f32 %v2350, %v2090
        %v2353 = vmax.f32 %v2351, %v2093
        %v2354 = vmax.f32 %v2352, %v2095
        %v2355 = vmax.f32 %v2353, %v2098
        %v2356 = vmax.f32 %v2354, %v2100
        %v2357 = vmax.f32 %v2355, %v2103
        %v2358 = vmax.f32 %v2356, %v2105
        %v2359 = vmax.f32 %v2357, %v2108
        %v2360 = vmax.f32 %v2358, %v2110
        %v2361 = vmax.f32 %v2359, %v2113
        %v2362 = vmax.f32 %v2360, %v2115
        %v2363 = vmax.f32 %v2361, %v2118
        %v2364 = vmax.f32 %v2362, %v2120
        %v2365 = vmax.f32 %v2363, %v2123
        %v2366 = vmax.f32 %v2364, %v2125
        %v2367 = vmax.f32 %v2365, %v2128
        %v2368 = vmax.f32 %v2366, %v2130
        %v2369 = vmax.f32 %v2367, %v2133
        %v2370 = vmax.f32 %v2368, %v2135
        %v2371 = vmax.f32 %v2369, %v2138
        %v2372 = vmax.f32 %v2370, %v2140
        %v2373 = vmax.f32 %v2371, %v2372
        %v2374 = vmax.f32 %v2152, %v2157
        %v2375 = vmax.f32 %v2154, %v2159
        %v2376 = vmax.f32 %v2374, %v2162
        %v2377 = vmax.f32 %v2375, %v2164
        %v2378 = vmax.f32 %v2376, %v2167
        %v2379 = vmax.f32 %v2377, %v2169
        %v2380 = vmax.f32 %v2378, %v2172
        %v2381 = vmax.f32 %v2379, %v2174
        %v2382 = vmax.f32 %v2380, %v2177
        %v2383 = vmax.f32 %v2381, %v2179
        %v2384 = vmax.f32 %v2382, %v2182
        %v2385 = vmax.f32 %v2383, %v2184
        %v2386 = vmax.f32 %v2384, %v2187
        %v2387 = vmax.f32 %v2385, %v2189
        %v2388 = vmax.f32 %v2386, %v2192
        %v2389 = vmax.f32 %v2387, %v2194
        %v2390 = vmax.f32 %v2388, %v2197
        %v2391 = vmax.f32 %v2389, %v2199
        %v2392 = vmax.f32 %v2390, %v2202
        %v2393 = vmax.f32 %v2391, %v2204
        %v2394 = vmax.f32 %v2392, %v2207
        %v2395 = vmax.f32 %v2393, %v2209
        %v2396 = vmax.f32 %v2394, %v2212
        %v2397 = vmax.f32 %v2395, %v2214
        %v2398 = vmax.f32 %v2396, %v2217
        %v2399 = vmax.f32 %v2397, %v2219
        %v2400 = vmax.f32 %v2398, %v2222
        %v2401 = vmax.f32 %v2399, %v2224
        %v2402 = vmax.f32 %v2400, %v2227
        %v2403 = vmax.f32 %v2401, %v2229
        %v2404 = vmax.f32 %v2402, %v2232
        %v2405 = vmax.f32 %v2403, %v2234
        %v2406 = vmax.f32 %v2404, %v2237
        %v2407 = vmax.f32 %v2405, %v2239
        %v2408 = vmax.f32 %v2406, %v2242
        %v2409 = vmax.f32 %v2407, %v2244
        %v2410 = vmax.f32 %v2408, %v2247
        %v2411 = vmax.f32 %v2409, %v2249
        %v2412 = vmax.f32 %v2410, %v2252
        %v2413 = vmax.f32 %v2411, %v2254
        %v2414 = vmax.f32 %v2412, %v2257
        %v2415 = vmax.f32 %v2413, %v2259
        %v2416 = vmax.f32 %v2414, %v2262
        %v2417 = vmax.f32 %v2415, %v2264
        %v2418 = vmax.f32 %v2416, %v2267
        %v2419 = vmax.f32 %v2417, %v2269
        %v2420 = vmax.f32 %v2418, %v2272
        %v2421 = vmax.f32 %v2419, %v2274
        %v2422 = vmax.f32 %v2420, %v2277
        %v2423 = vmax.f32 %v2421, %v2279
        %v2424 = vmax.f32 %v2422, %v2282
        %v2425 = vmax.f32 %v2423, %v2284
        %v2426 = vmax.f32 %v2424, %v2287
        %v2427 = vmax.f32 %v2425, %v2289
        %v2428 = vmax.f32 %v2426, %v2292
        %v2429 = vmax.f32 %v2427, %v2294
        %v2430 = vmax.f32 %v2428, %v2297
        %v2431 = vmax.f32 %v2429, %v2299
        %v2432 = vmax.f32 %v2430, %v2302
        %v2433 = vmax.f32 %v2431, %v2304
        %v2434 = vmax.f32 %v2432, %v2307
        %v2435 = vmax.f32 %v2433, %v2309
        %v2436 = vmax.f32 %v2434, %v2435
        %v2437 = vld [vmem:[#allocation2 + $0x10] sm:$0xff]
        %v2438 = vld [vmem:[#allocation2 + $0x18] sm:$0xff]
        %v2439 = vmax.f32 %v2437, %v2373
        %v2440 = vmax.f32 %v2438, %v2436
        %2441 = vst [vmem:[#allocation2 + $0x10] sm:$0xff] %v2439
        %2442 = vst [vmem:[#allocation2 + $0x18] sm:$0xff] %v2440
        %v2443 = vld [vmem:[%s5 + $0x10] sm:$0xff]
        %v2444 = vld [vmem:[%s5 + $0x30] sm:$0xff]
        %v2445 = vld [vmem:[%s5 + $0x50] sm:$0xff]
        %v2446 = vld [vmem:[%s5 + $0x70] sm:$0xff]
        %v2447 = vld [vmem:[%s5 + $0x90] sm:$0xff]
        %v2448 = vld [vmem:[%s5 + $0xb0] sm:$0xff]
        %v2449 = vld [vmem:[%s5 + $0xd0] sm:$0xff]
        %v2450 = vld [vmem:[%s5 + $0xf0] sm:$0xff]
        %v2451 = vld [vmem:[%s5 + $0x110] sm:$0xff]
        %v2452 = vld [vmem:[%s5 + $0x130] sm:$0xff]
        %v2453 = vld [vmem:[%s5 + $0x150] sm:$0xff]
        %v2454 = vld [vmem:[%s5 + $0x170] sm:$0xff]
        %v2455 = vld [vmem:[%s5 + $0x190] sm:$0xff]
        %v2456 = vld [vmem:[%s5 + $0x1b0] sm:$0xff]
        %v2457 = vld [vmem:[%s5 + $0x1d0] sm:$0xff]
        %v2458 = vld [vmem:[%s5 + $0x1f0] sm:$0xff]
        %v2459 = vld [vmem:[%s6 + $0x4] sm:$0x3]
        %v2461 = vperm.slane %v2459, 0
        %v2462 = vperm.slane %v2459, 1
        %v2481 = vunpack.c.l.b16 %v2443
        %v2482 = vunpack.c.h.b16 %v2443
        %v2483 = vunpack.c.l.b16 %v2444
        %v2484 = vunpack.c.h.b16 %v2444
        %v2485 = vunpack.c.l.b16 %v2445
        %v2486 = vunpack.c.h.b16 %v2445
        %v2487 = vunpack.c.l.b16 %v2446
        %v2488 = vunpack.c.h.b16 %v2446
        %v2489 = vunpack.c.l.b16 %v2447
        %v2490 = vunpack.c.h.b16 %v2447
        %v2491 = vunpack.c.l.b16 %v2448
        %v2492 = vunpack.c.h.b16 %v2448
        %v2493 = vunpack.c.l.b16 %v2449
        %v2494 = vunpack.c.h.b16 %v2449
        %v2495 = vunpack.c.l.b16 %v2450
        %v2496 = vunpack.c.h.b16 %v2450
        %v2497 = vunpack.c.l.b16 %v2451
        %v2498 = vunpack.c.h.b16 %v2451
        %v2499 = vunpack.c.l.b16 %v2452
        %v2500 = vunpack.c.h.b16 %v2452
        %v2501 = vunpack.c.l.b16 %v2453
        %v2502 = vunpack.c.h.b16 %v2453
        %v2503 = vunpack.c.l.b16 %v2454
        %v2504 = vunpack.c.h.b16 %v2454
        %v2505 = vunpack.c.l.b16 %v2455
        %v2506 = vunpack.c.h.b16 %v2455
        %v2507 = vunpack.c.l.b16 %v2456
        %v2508 = vunpack.c.h.b16 %v2456
        %v2509 = vunpack.c.l.b16 %v2457
        %v2510 = vunpack.c.h.b16 %v2457
        %v2511 = vunpack.c.l.b16 %v2458
        %v2512 = vunpack.c.h.b16 %v2458
        %v2513 = vpack.c.b16 %v2483, %v2481
        %v2514 = vpack.c.b16 %v2484, %v2482
        %v2515 = vpack.c.b16 %v2487, %v2485
        %v2516 = vpack.c.b16 %v2488, %v2486
        %v2517 = vpack.c.b16 %v2491, %v2489
        %v2518 = vpack.c.b16 %v2492, %v2490
        %v2519 = vpack.c.b16 %v2495, %v2493
        %v2520 = vpack.c.b16 %v2496, %v2494
        %v2521 = vpack.c.b16 %v2499, %v2497
        %v2522 = vpack.c.b16 %v2500, %v2498
        %v2523 = vpack.c.b16 %v2503, %v2501
        %v2524 = vpack.c.b16 %v2504, %v2502
        %v2525 = vpack.c.b16 %v2507, %v2505
        %v2526 = vpack.c.b16 %v2508, %v2506
        %v2527 = vpack.c.b16 %v2511, %v2509
        %v2528 = vpack.c.b16 %v2512, %v2510
        %2545 = vmatpush.bf16.msra.mxu0 %v2527
        %2546 = vmatpush.bf16.msra.mxu0 %v2525
        %2547 = vmatpush.bf16.msra.mxu0 %v2523
        %2548 = vmatpush.bf16.msra.mxu0 %v2521
        %2549 = vmatpush.bf16.msra.mxu0 %v2519
        %2550 = vmatpush.bf16.msra.mxu0 %v2517
        %2551 = vmatpush.bf16.msra.mxu0 %v2515
        %2552 = vmatpush.bf16.msra.mxu0 %v2513
        %2553 = vmatmul.bf16.gmra.mxu0 %v1267
        %v2554 = vpop.f32.mrf.mxu0
        %v2555 = vadd.f32 %v2461, %v2554
        %v2556 = vpop.f32.mrf.mxu0
        %v2557 = vadd.f32 %v2461, %v2556
        %2558 = vmatmul.bf16.gmra.mxu0 %v1268
        %v2559 = vpop.f32.mrf.mxu0
        %v2560 = vadd.f32 %v2461, %v2559
        %v2561 = vpop.f32.mrf.mxu0
        %v2562 = vadd.f32 %v2461, %v2561
        %2563 = vmatmul.bf16.gmra.mxu0 %v1269
        %v2564 = vpop.f32.mrf.mxu0
        %v2565 = vadd.f32 %v2461, %v2564
        %v2566 = vpop.f32.mrf.mxu0
        %v2567 = vadd.f32 %v2461, %v2566
        %2568 = vmatmul.bf16.gmra.mxu0 %v1270
        %v2569 = vpop.f32.mrf.mxu0
        %v2570 = vadd.f32 %v2461, %v2569
        %v2571 = vpop.f32.mrf.mxu0
        %v2572 = vadd.f32 %v2461, %v2571
        %2573 = vmatmul.bf16.gmra.mxu0 %v1271
        %v2574 = vpop.f32.mrf.mxu0
        %v2575 = vadd.f32 %v2461, %v2574
        %v2576 = vpop.f32.mrf.mxu0
        %v2577 = vadd.f32 %v2461, %v2576
        %2578 = vmatmul.bf16.gmra.mxu0 %v1272
        %v2579 = vpop.f32.mrf.mxu0
        %v2580 = vadd.f32 %v2461, %v2579
        %v2581 = vpop.f32.mrf.mxu0
        %v2582 = vadd.f32 %v2461, %v2581
        %2583 = vmatmul.bf16.gmra.mxu0 %v1273
        %v2584 = vpop.f32.mrf.mxu0
        %v2585 = vadd.f32 %v2461, %v2584
        %v2586 = vpop.f32.mrf.mxu0
        %v2587 = vadd.f32 %v2461, %v2586
        %2588 = vmatmul.bf16.gmra.mxu0 %v1274
        %v2589 = vpop.f32.mrf.mxu0
        %v2590 = vadd.f32 %v2461, %v2589
        %v2591 = vpop.f32.mrf.mxu0
        %v2592 = vadd.f32 %v2461, %v2591
        %2593 = vmatmul.bf16.gmra.mxu0 %v1275
        %v2594 = vpop.f32.mrf.mxu0
        %v2595 = vadd.f32 %v2461, %v2594
        %v2596 = vpop.f32.mrf.mxu0
        %v2597 = vadd.f32 %v2461, %v2596
        %2598 = vmatmul.bf16.gmra.mxu0 %v1276
        %v2599 = vpop.f32.mrf.mxu0
        %v2600 = vadd.f32 %v2461, %v2599
        %v2601 = vpop.f32.mrf.mxu0
        %v2602 = vadd.f32 %v2461, %v2601
        %2603 = vmatmul.bf16.gmra.mxu0 %v1277
        %v2604 = vpop.f32.mrf.mxu0
        %v2605 = vadd.f32 %v2461, %v2604
        %v2606 = vpop.f32.mrf.mxu0
        %v2607 = vadd.f32 %v2461, %v2606
        %2608 = vmatmul.bf16.gmra.mxu0 %v1278
        %v2609 = vpop.f32.mrf.mxu0
        %v2610 = vadd.f32 %v2461, %v2609
        %v2611 = vpop.f32.mrf.mxu0
        %v2612 = vadd.f32 %v2461, %v2611
        %2613 = vmatmul.bf16.gmra.mxu0 %v1279
        %v2614 = vpop.f32.mrf.mxu0
        %v2615 = vadd.f32 %v2461, %v2614
        %v2616 = vpop.f32.mrf.mxu0
        %v2617 = vadd.f32 %v2461, %v2616
        %2618 = vmatmul.bf16.gmra.mxu0 %v1280
        %v2619 = vpop.f32.mrf.mxu0
        %v2620 = vadd.f32 %v2461, %v2619
        %v2621 = vpop.f32.mrf.mxu0
        %v2622 = vadd.f32 %v2461, %v2621
        %2623 = vmatmul.bf16.gmra.mxu0 %v1281
        %v2624 = vpop.f32.mrf.mxu0
        %v2625 = vadd.f32 %v2461, %v2624
        %v2626 = vpop.f32.mrf.mxu0
        %v2627 = vadd.f32 %v2461, %v2626
        %2628 = vmatmul.bf16.gmra.mxu0 %v1282
        %v2629 = vpop.f32.mrf.mxu0
        %v2630 = vadd.f32 %v2461, %v2629
        %v2631 = vpop.f32.mrf.mxu0
        %v2632 = vadd.f32 %v2461, %v2631
        %2633 = vmatmul.bf16.gmra.mxu0 %v1283
        %v2634 = vpop.f32.mrf.mxu0
        %v2635 = vadd.f32 %v2461, %v2634
        %v2636 = vpop.f32.mrf.mxu0
        %v2637 = vadd.f32 %v2461, %v2636
        %2638 = vmatmul.bf16.gmra.mxu0 %v1284
        %v2639 = vpop.f32.mrf.mxu0
        %v2640 = vadd.f32 %v2461, %v2639
        %v2641 = vpop.f32.mrf.mxu0
        %v2642 = vadd.f32 %v2461, %v2641
        %2643 = vmatmul.bf16.gmra.mxu0 %v1285
        %v2644 = vpop.f32.mrf.mxu0
        %v2645 = vadd.f32 %v2461, %v2644
        %v2646 = vpop.f32.mrf.mxu0
        %v2647 = vadd.f32 %v2461, %v2646
        %2648 = vmatmul.bf16.gmra.mxu0 %v1286
        %v2649 = vpop.f32.mrf.mxu0
        %v2650 = vadd.f32 %v2461, %v2649
        %v2651 = vpop.f32.mrf.mxu0
        %v2652 = vadd.f32 %v2461, %v2651
        %2653 = vmatmul.bf16.gmra.mxu0 %v1287
        %v2654 = vpop.f32.mrf.mxu0
        %v2655 = vadd.f32 %v2461, %v2654
        %v2656 = vpop.f32.mrf.mxu0
        %v2657 = vadd.f32 %v2461, %v2656
        %2658 = vmatmul.bf16.gmra.mxu0 %v1288
        %v2659 = vpop.f32.mrf.mxu0
        %v2660 = vadd.f32 %v2461, %v2659
        %v2661 = vpop.f32.mrf.mxu0
        %v2662 = vadd.f32 %v2461, %v2661
        %2663 = vmatmul.bf16.gmra.mxu0 %v1289
        %v2664 = vpop.f32.mrf.mxu0
        %v2665 = vadd.f32 %v2461, %v2664
        %v2666 = vpop.f32.mrf.mxu0
        %v2667 = vadd.f32 %v2461, %v2666
        %2668 = vmatmul.bf16.gmra.mxu0 %v1290
        %v2669 = vpop.f32.mrf.mxu0
        %v2670 = vadd.f32 %v2461, %v2669
        %v2671 = vpop.f32.mrf.mxu0
        %v2672 = vadd.f32 %v2461, %v2671
        %2673 = vmatmul.bf16.gmra.mxu0 %v1291
        %v2674 = vpop.f32.mrf.mxu0
        %v2675 = vadd.f32 %v2461, %v2674
        %v2676 = vpop.f32.mrf.mxu0
        %v2677 = vadd.f32 %v2461, %v2676
        %2678 = vmatmul.bf16.gmra.mxu0 %v1292
        %v2679 = vpop.f32.mrf.mxu0
        %v2680 = vadd.f32 %v2461, %v2679
        %v2681 = vpop.f32.mrf.mxu0
        %v2682 = vadd.f32 %v2461, %v2681
        %2683 = vmatmul.bf16.gmra.mxu0 %v1293
        %v2684 = vpop.f32.mrf.mxu0
        %v2685 = vadd.f32 %v2461, %v2684
        %v2686 = vpop.f32.mrf.mxu0
        %v2687 = vadd.f32 %v2461, %v2686
        %2688 = vmatmul.bf16.gmra.mxu0 %v1294
        %v2689 = vpop.f32.mrf.mxu0
        %v2690 = vadd.f32 %v2461, %v2689
        %v2691 = vpop.f32.mrf.mxu0
        %v2692 = vadd.f32 %v2461, %v2691
        %2693 = vmatmul.bf16.gmra.mxu0 %v1295
        %v2694 = vpop.f32.mrf.mxu0
        %v2695 = vadd.f32 %v2461, %v2694
        %v2696 = vpop.f32.mrf.mxu0
        %v2697 = vadd.f32 %v2461, %v2696
        %2698 = vmatmul.bf16.gmra.mxu0 %v1296
        %v2699 = vpop.f32.mrf.mxu0
        %v2700 = vadd.f32 %v2461, %v2699
        %v2701 = vpop.f32.mrf.mxu0
        %v2702 = vadd.f32 %v2461, %v2701
        %2703 = vmatmul.bf16.gmra.mxu0 %v1297
        %v2704 = vpop.f32.mrf.mxu0
        %v2705 = vadd.f32 %v2461, %v2704
        %v2706 = vpop.f32.mrf.mxu0
        %v2707 = vadd.f32 %v2461, %v2706
        %2708 = vmatmul.bf16.gmra.mxu0 %v1298
        %v2709 = vpop.f32.mrf.mxu0
        %v2710 = vadd.f32 %v2461, %v2709
        %v2711 = vpop.f32.mrf.mxu0
        %v2712 = vadd.f32 %v2461, %v2711
        %2713 = vdwg.mxu0
        %2714 = vmatpush.bf16.msra.mxu0 %v2528
        %2715 = vmatpush.bf16.msra.mxu0 %v2526
        %2716 = vmatpush.bf16.msra.mxu0 %v2524
        %2717 = vmatpush.bf16.msra.mxu0 %v2522
        %2718 = vmatpush.bf16.msra.mxu0 %v2520
        %2719 = vmatpush.bf16.msra.mxu0 %v2518
        %2720 = vmatpush.bf16.msra.mxu0 %v2516
        %2721 = vmatpush.bf16.msra.mxu0 %v2514
        %2722 = vmatmul.bf16.gmra.mxu0 %v1267
        %v2723 = vpop.f32.mrf.mxu0
        %v2724 = vadd.f32 %v2462, %v2723
        %v2725 = vpop.f32.mrf.mxu0
        %v2726 = vadd.f32 %v2462, %v2725
        %2727 = vmatmul.bf16.gmra.mxu0 %v1268
        %v2728 = vpop.f32.mrf.mxu0
        %v2729 = vadd.f32 %v2462, %v2728
        %v2730 = vpop.f32.mrf.mxu0
        %v2731 = vadd.f32 %v2462, %v2730
        %2732 = vmatmul.bf16.gmra.mxu0 %v1269
        %v2733 = vpop.f32.mrf.mxu0
        %v2734 = vadd.f32 %v2462, %v2733
        %v2735 = vpop.f32.mrf.mxu0
        %v2736 = vadd.f32 %v2462, %v2735
        %2737 = vmatmul.bf16.gmra.mxu0 %v1270
        %v2738 = vpop.f32.mrf.mxu0
        %v2739 = vadd.f32 %v2462, %v2738
        %v2740 = vpop.f32.mrf.mxu0
        %v2741 = vadd.f32 %v2462, %v2740
        %2742 = vmatmul.bf16.gmra.mxu0 %v1271
        %v2743 = vpop.f32.mrf.mxu0
        %v2744 = vadd.f32 %v2462, %v2743
        %v2745 = vpop.f32.mrf.mxu0
        %v2746 = vadd.f32 %v2462, %v2745
        %2747 = vmatmul.bf16.gmra.mxu0 %v1272
        %v2748 = vpop.f32.mrf.mxu0
        %v2749 = vadd.f32 %v2462, %v2748
        %v2750 = vpop.f32.mrf.mxu0
        %v2751 = vadd.f32 %v2462, %v2750
        %2752 = vmatmul.bf16.gmra.mxu0 %v1273
        %v2753 = vpop.f32.mrf.mxu0
        %v2754 = vadd.f32 %v2462, %v2753
        %v2755 = vpop.f32.mrf.mxu0
        %v2756 = vadd.f32 %v2462, %v2755
        %2757 = vmatmul.bf16.gmra.mxu0 %v1274
        %v2758 = vpop.f32.mrf.mxu0
        %v2759 = vadd.f32 %v2462, %v2758
        %v2760 = vpop.f32.mrf.mxu0
        %v2761 = vadd.f32 %v2462, %v2760
        %2762 = vmatmul.bf16.gmra.mxu0 %v1275
        %v2763 = vpop.f32.mrf.mxu0
        %v2764 = vadd.f32 %v2462, %v2763
        %v2765 = vpop.f32.mrf.mxu0
        %v2766 = vadd.f32 %v2462, %v2765
        %2767 = vmatmul.bf16.gmra.mxu0 %v1276
        %v2768 = vpop.f32.mrf.mxu0
        %v2769 = vadd.f32 %v2462, %v2768
        %v2770 = vpop.f32.mrf.mxu0
        %v2771 = vadd.f32 %v2462, %v2770
        %2772 = vmatmul.bf16.gmra.mxu0 %v1277
        %v2773 = vpop.f32.mrf.mxu0
        %v2774 = vadd.f32 %v2462, %v2773
        %v2775 = vpop.f32.mrf.mxu0
        %v2776 = vadd.f32 %v2462, %v2775
        %2777 = vmatmul.bf16.gmra.mxu0 %v1278
        %v2778 = vpop.f32.mrf.mxu0
        %v2779 = vadd.f32 %v2462, %v2778
        %v2780 = vpop.f32.mrf.mxu0
        %v2781 = vadd.f32 %v2462, %v2780
        %2782 = vmatmul.bf16.gmra.mxu0 %v1279
        %v2783 = vpop.f32.mrf.mxu0
        %v2784 = vadd.f32 %v2462, %v2783
        %v2785 = vpop.f32.mrf.mxu0
        %v2786 = vadd.f32 %v2462, %v2785
        %2787 = vmatmul.bf16.gmra.mxu0 %v1280
        %v2788 = vpop.f32.mrf.mxu0
        %v2789 = vadd.f32 %v2462, %v2788
        %v2790 = vpop.f32.mrf.mxu0
        %v2791 = vadd.f32 %v2462, %v2790
        %2792 = vmatmul.bf16.gmra.mxu0 %v1281
        %v2793 = vpop.f32.mrf.mxu0
        %v2794 = vadd.f32 %v2462, %v2793
        %v2795 = vpop.f32.mrf.mxu0
        %v2796 = vadd.f32 %v2462, %v2795
        %2797 = vmatmul.bf16.gmra.mxu0 %v1282
        %v2798 = vpop.f32.mrf.mxu0
        %v2799 = vadd.f32 %v2462, %v2798
        %v2800 = vpop.f32.mrf.mxu0
        %v2801 = vadd.f32 %v2462, %v2800
        %2802 = vmatmul.bf16.gmra.mxu0 %v1283
        %v2803 = vpop.f32.mrf.mxu0
        %v2804 = vadd.f32 %v2462, %v2803
        %v2805 = vpop.f32.mrf.mxu0
        %v2806 = vadd.f32 %v2462, %v2805
        %2807 = vmatmul.bf16.gmra.mxu0 %v1284
        %v2808 = vpop.f32.mrf.mxu0
        %v2809 = vadd.f32 %v2462, %v2808
        %v2810 = vpop.f32.mrf.mxu0
        %v2811 = vadd.f32 %v2462, %v2810
        %2812 = vmatmul.bf16.gmra.mxu0 %v1285
        %v2813 = vpop.f32.mrf.mxu0
        %v2814 = vadd.f32 %v2462, %v2813
        %v2815 = vpop.f32.mrf.mxu0
        %v2816 = vadd.f32 %v2462, %v2815
        %2817 = vmatmul.bf16.gmra.mxu0 %v1286
        %v2818 = vpop.f32.mrf.mxu0
        %v2819 = vadd.f32 %v2462, %v2818
        %v2820 = vpop.f32.mrf.mxu0
        %v2821 = vadd.f32 %v2462, %v2820
        %2822 = vmatmul.bf16.gmra.mxu0 %v1287
        %v2823 = vpop.f32.mrf.mxu0
        %v2824 = vadd.f32 %v2462, %v2823
        %v2825 = vpop.f32.mrf.mxu0
        %v2826 = vadd.f32 %v2462, %v2825
        %2827 = vmatmul.bf16.gmra.mxu0 %v1288
        %v2828 = vpop.f32.mrf.mxu0
        %v2829 = vadd.f32 %v2462, %v2828
        %v2830 = vpop.f32.mrf.mxu0
        %v2831 = vadd.f32 %v2462, %v2830
        %2832 = vmatmul.bf16.gmra.mxu0 %v1289
        %v2833 = vpop.f32.mrf.mxu0
        %v2834 = vadd.f32 %v2462, %v2833
        %v2835 = vpop.f32.mrf.mxu0
        %v2836 = vadd.f32 %v2462, %v2835
        %2837 = vmatmul.bf16.gmra.mxu0 %v1290
        %v2838 = vpop.f32.mrf.mxu0
        %v2839 = vadd.f32 %v2462, %v2838
        %v2840 = vpop.f32.mrf.mxu0
        %v2841 = vadd.f32 %v2462, %v2840
        %2842 = vmatmul.bf16.gmra.mxu0 %v1291
        %v2843 = vpop.f32.mrf.mxu0
        %v2844 = vadd.f32 %v2462, %v2843
        %v2845 = vpop.f32.mrf.mxu0
        %v2846 = vadd.f32 %v2462, %v2845
        %2847 = vmatmul.bf16.gmra.mxu0 %v1292
        %v2848 = vpop.f32.mrf.mxu0
        %v2849 = vadd.f32 %v2462, %v2848
        %v2850 = vpop.f32.mrf.mxu0
        %v2851 = vadd.f32 %v2462, %v2850
        %2852 = vmatmul.bf16.gmra.mxu0 %v1293
        %v2853 = vpop.f32.mrf.mxu0
        %v2854 = vadd.f32 %v2462, %v2853
        %v2855 = vpop.f32.mrf.mxu0
        %v2856 = vadd.f32 %v2462, %v2855
        %2857 = vmatmul.bf16.gmra.mxu0 %v1294
        %v2858 = vpop.f32.mrf.mxu0
        %v2859 = vadd.f32 %v2462, %v2858
        %v2860 = vpop.f32.mrf.mxu0
        %v2861 = vadd.f32 %v2462, %v2860
        %2862 = vmatmul.bf16.gmra.mxu0 %v1295
        %v2863 = vpop.f32.mrf.mxu0
        %v2864 = vadd.f32 %v2462, %v2863
        %v2865 = vpop.f32.mrf.mxu0
        %v2866 = vadd.f32 %v2462, %v2865
        %2867 = vmatmul.bf16.gmra.mxu0 %v1296
        %v2868 = vpop.f32.mrf.mxu0
        %v2869 = vadd.f32 %v2462, %v2868
        %v2870 = vpop.f32.mrf.mxu0
        %v2871 = vadd.f32 %v2462, %v2870
        %2872 = vmatmul.bf16.gmra.mxu0 %v1297
        %v2873 = vpop.f32.mrf.mxu0
        %v2874 = vadd.f32 %v2462, %v2873
        %v2875 = vpop.f32.mrf.mxu0
        %v2876 = vadd.f32 %v2462, %v2875
        %2877 = vmatmul.bf16.gmra.mxu0 %v1298
        %v2878 = vpop.f32.mrf.mxu0
        %v2879 = vadd.f32 %v2462, %v2878
        %v2880 = vpop.f32.mrf.mxu0
        %v2881 = vadd.f32 %v2462, %v2880
        %2882 = vdwg.mxu0
        %v2883 = vmax.f32 %v2555, %v2560
        %v2884 = vmax.f32 %v2557, %v2562
        %v2885 = vmax.f32 %v2883, %v2565
        %v2886 = vmax.f32 %v2884, %v2567
        %v2887 = vmax.f32 %v2885, %v2570
        %v2888 = vmax.f32 %v2886, %v2572
        %v2889 = vmax.f32 %v2887, %v2575
        %v2890 = vmax.f32 %v2888, %v2577
        %v2891 = vmax.f32 %v2889, %v2580
        %v2892 = vmax.f32 %v2890, %v2582
        %v2893 = vmax.f32 %v2891, %v2585
        %v2894 = vmax.f32 %v2892, %v2587
        %v2895 = vmax.f32 %v2893, %v2590
        %v2896 = vmax.f32 %v2894, %v2592
        %v2897 = vmax.f32 %v2895, %v2595
        %v2898 = vmax.f32 %v2896, %v2597
        %v2899 = vmax.f32 %v2897, %v2600
        %v2900 = vmax.f32 %v2898, %v2602
        %v2901 = vmax.f32 %v2899, %v2605
        %v2902 = vmax.f32 %v2900, %v2607
        %v2903 = vmax.f32 %v2901, %v2610
        %v2904 = vmax.f32 %v2902, %v2612
        %v2905 = vmax.f32 %v2903, %v2615
        %v2906 = vmax.f32 %v2904, %v2617
        %v2907 = vmax.f32 %v2905, %v2620
        %v2908 = vmax.f32 %v2906, %v2622
        %v2909 = vmax.f32 %v2907, %v2625
        %v2910 = vmax.f32 %v2908, %v2627
        %v2911 = vmax.f32 %v2909, %v2630
        %v2912 = vmax.f32 %v2910, %v2632
        %v2913 = vmax.f32 %v2911, %v2635
        %v2914 = vmax.f32 %v2912, %v2637
        %v2915 = vmax.f32 %v2913, %v2640
        %v2916 = vmax.f32 %v2914, %v2642
        %v2917 = vmax.f32 %v2915, %v2645
        %v2918 = vmax.f32 %v2916, %v2647
        %v2919 = vmax.f32 %v2917, %v2650
        %v2920 = vmax.f32 %v2918, %v2652
        %v2921 = vmax.f32 %v2919, %v2655
        %v2922 = vmax.f32 %v2920, %v2657
        %v2923 = vmax.f32 %v2921, %v2660
        %v2924 = vmax.f32 %v2922, %v2662
        %v2925 = vmax.f32 %v2923, %v2665
        %v2926 = vmax.f32 %v2924, %v2667
        %v2927 = vmax.f32 %v2925, %v2670
        %v2928 = vmax.f32 %v2926, %v2672
        %v2929 = vmax.f32 %v2927, %v2675
        %v2930 = vmax.f32 %v2928, %v2677
        %v2931 = vmax.f32 %v2929, %v2680
        %v2932 = vmax.f32 %v2930, %v2682
        %v2933 = vmax.f32 %v2931, %v2685
        %v2934 = vmax.f32 %v2932, %v2687
        %v2935 = vmax.f32 %v2933, %v2690
        %v2936 = vmax.f32 %v2934, %v2692
        %v2937 = vmax.f32 %v2935, %v2695
        %v2938 = vmax.f32 %v2936, %v2697
        %v2939 = vmax.f32 %v2937, %v2700
        %v2940 = vmax.f32 %v2938, %v2702
        %v2941 = vmax.f32 %v2939, %v2705
        %v2942 = vmax.f32 %v2940, %v2707
        %v2943 = vmax.f32 %v2941, %v2710
        %v2944 = vmax.f32 %v2942, %v2712
        %v2945 = vmax.f32 %v2943, %v2944
        %v2946 = vmax.f32 %v2724, %v2729
        %v2947 = vmax.f32 %v2726, %v2731
        %v2948 = vmax.f32 %v2946, %v2734
        %v2949 = vmax.f32 %v2947, %v2736
        %v2950 = vmax.f32 %v2948, %v2739
        %v2951 = vmax.f32 %v2949, %v2741
        %v2952 = vmax.f32 %v2950, %v2744
        %v2953 = vmax.f32 %v2951, %v2746
        %v2954 = vmax.f32 %v2952, %v2749
        %v2955 = vmax.f32 %v2953, %v2751
        %v2956 = vmax.f32 %v2954, %v2754
        %v2957 = vmax.f32 %v2955, %v2756
        %v2958 = vmax.f32 %v2956, %v2759
        %v2959 = vmax.f32 %v2957, %v2761
        %v2960 = vmax.f32 %v2958, %v2764
        %v2961 = vmax.f32 %v2959, %v2766
        %v2962 = vmax.f32 %v2960, %v2769
        %v2963 = vmax.f32 %v2961, %v2771
        %v2964 = vmax.f32 %v2962, %v2774
        %v2965 = vmax.f32 %v2963, %v2776
        %v2966 = vmax.f32 %v2964, %v2779
        %v2967 = vmax.f32 %v2965, %v2781
        %v2968 = vmax.f32 %v2966, %v2784
        %v2969 = vmax.f32 %v2967, %v2786
        %v2970 = vmax.f32 %v2968, %v2789
        %v2971 = vmax.f32 %v2969, %v2791
        %v2972 = vmax.f32 %v2970, %v2794
        %v2973 = vmax.f32 %v2971, %v2796
        %v2974 = vmax.f32 %v2972, %v2799
        %v2975 = vmax.f32 %v2973, %v2801
        %v2976 = vmax.f32 %v2974, %v2804
        %v2977 = vmax.f32 %v2975, %v2806
        %v2978 = vmax.f32 %v2976, %v2809
        %v2979 = vmax.f32 %v2977, %v2811
        %v2980 = vmax.f32 %v2978, %v2814
        %v2981 = vmax.f32 %v2979, %v2816
        %v2982 = vmax.f32 %v2980, %v2819
        %v2983 = vmax.f32 %v2981, %v2821
        %v2984 = vmax.f32 %v2982, %v2824
        %v2985 = vmax.f32 %v2983, %v2826
        %v2986 = vmax.f32 %v2984, %v2829
        %v2987 = vmax.f32 %v2985, %v2831
        %v2988 = vmax.f32 %v2986, %v2834
        %v2989 = vmax.f32 %v2987, %v2836
        %v2990 = vmax.f32 %v2988, %v2839
        %v2991 = vmax.f32 %v2989, %v2841
        %v2992 = vmax.f32 %v2990, %v2844
        %v2993 = vmax.f32 %v2991, %v2846
        %v2994 = vmax.f32 %v2992, %v2849
        %v2995 = vmax.f32 %v2993, %v2851
        %v2996 = vmax.f32 %v2994, %v2854
        %v2997 = vmax.f32 %v2995, %v2856
        %v2998 = vmax.f32 %v2996, %v2859
        %v2999 = vmax.f32 %v2997, %v2861
        %v3000 = vmax.f32 %v2998, %v2864
        %v3001 = vmax.f32 %v2999, %v2866
        %v3002 = vmax.f32 %v3000, %v2869
        %v3003 = vmax.f32 %v3001, %v2871
        %v3004 = vmax.f32 %v3002, %v2874
        %v3005 = vmax.f32 %v3003, %v2876
        %v3006 = vmax.f32 %v3004, %v2879
        %v3007 = vmax.f32 %v3005, %v2881
        %v3008 = vmax.f32 %v3006, %v3007
        %v3009 = vld [vmem:[#allocation2 + $0x20] sm:$0xff]
        %v3010 = vld [vmem:[#allocation2 + $0x28] sm:$0xff]
        %v3011 = vmax.f32 %v3009, %v2945
        %v3012 = vmax.f32 %v3010, %v3008
        %3013 = vst [vmem:[#allocation2 + $0x20] sm:$0xff] %v3011
        %3014 = vst [vmem:[#allocation2 + $0x28] sm:$0xff] %v3012
        %v3015 = vld [vmem:[%s5 + $0x18] sm:$0xff]
        %v3016 = vld [vmem:[%s5 + $0x38] sm:$0xff]
        %v3017 = vld [vmem:[%s5 + $0x58] sm:$0xff]
        %v3018 = vld [vmem:[%s5 + $0x78] sm:$0xff]
        %v3019 = vld [vmem:[%s5 + $0x98] sm:$0xff]
        %v3020 = vld [vmem:[%s5 + $0xb8] sm:$0xff]
        %v3021 = vld [vmem:[%s5 + $0xd8] sm:$0xff]
        %v3022 = vld [vmem:[%s5 + $0xf8] sm:$0xff]
        %v3023 = vld [vmem:[%s5 + $0x118] sm:$0xff]
        %v3024 = vld [vmem:[%s5 + $0x138] sm:$0xff]
        %v3025 = vld [vmem:[%s5 + $0x158] sm:$0xff]
        %v3026 = vld [vmem:[%s5 + $0x178] sm:$0xff]
        %v3027 = vld [vmem:[%s5 + $0x198] sm:$0xff]
        %v3028 = vld [vmem:[%s5 + $0x1b8] sm:$0xff]
        %v3029 = vld [vmem:[%s5 + $0x1d8] sm:$0xff]
        %v3030 = vld [vmem:[%s5 + $0x1f8] sm:$0xff]
        %v3031 = vld [vmem:[%s6 + $0x6] sm:$0x3]
        %v3033 = vperm.slane %v3031, 0
        %v3034 = vperm.slane %v3031, 1
        %v3053 = vunpack.c.l.b16 %v3015
        %v3054 = vunpack.c.h.b16 %v3015
        %v3055 = vunpack.c.l.b16 %v3016
        %v3056 = vunpack.c.h.b16 %v3016
        %v3057 = vunpack.c.l.b16 %v3017
        %v3058 = vunpack.c.h.b16 %v3017
        %v3059 = vunpack.c.l.b16 %v3018
        %v3060 = vunpack.c.h.b16 %v3018
        %v3061 = vunpack.c.l.b16 %v3019
        %v3062 = vunpack.c.h.b16 %v3019
        %v3063 = vunpack.c.l.b16 %v3020
        %v3064 = vunpack.c.h.b16 %v3020
        %v3065 = vunpack.c.l.b16 %v3021
        %v3066 = vunpack.c.h.b16 %v3021
        %v3067 = vunpack.c.l.b16 %v3022
        %v3068 = vunpack.c.h.b16 %v3022
        %v3069 = vunpack.c.l.b16 %v3023
        %v3070 = vunpack.c.h.b16 %v3023
        %v3071 = vunpack.c.l.b16 %v3024
        %v3072 = vunpack.c.h.b16 %v3024
        %v3073 = vunpack.c.l.b16 %v3025
        %v3074 = vunpack.c.h.b16 %v3025
        %v3075 = vunpack.c.l.b16 %v3026
        %v3076 = vunpack.c.h.b16 %v3026
        %v3077 = vunpack.c.l.b16 %v3027
        %v3078 = vunpack.c.h.b16 %v3027
        %v3079 = vunpack.c.l.b16 %v3028
        %v3080 = vunpack.c.h.b16 %v3028
        %v3081 = vunpack.c.l.b16 %v3029
        %v3082 = vunpack.c.h.b16 %v3029
        %v3083 = vunpack.c.l.b16 %v3030
        %v3084 = vunpack.c.h.b16 %v3030
        %v3085 = vpack.c.b16 %v3055, %v3053
        %v3086 = vpack.c.b16 %v3056, %v3054
        %v3087 = vpack.c.b16 %v3059, %v3057
        %v3088 = vpack.c.b16 %v3060, %v3058
        %v3089 = vpack.c.b16 %v3063, %v3061
        %v3090 = vpack.c.b16 %v3064, %v3062
        %v3091 = vpack.c.b16 %v3067, %v3065
        %v3092 = vpack.c.b16 %v3068, %v3066
        %v3093 = vpack.c.b16 %v3071, %v3069
        %v3094 = vpack.c.b16 %v3072, %v3070
        %v3095 = vpack.c.b16 %v3075, %v3073
        %v3096 = vpack.c.b16 %v3076, %v3074
        %v3097 = vpack.c.b16 %v3079, %v3077
        %v3098 = vpack.c.b16 %v3080, %v3078
        %v3099 = vpack.c.b16 %v3083, %v3081
        %v3100 = vpack.c.b16 %v3084, %v3082
        %3117 = vmatpush.bf16.msra.mxu0 %v3099
        %3118 = vmatpush.bf16.msra.mxu0 %v3097
        %3119 = vmatpush.bf16.msra.mxu0 %v3095
        %3120 = vmatpush.bf16.msra.mxu0 %v3093
        %3121 = vmatpush.bf16.msra.mxu0 %v3091
        %3122 = vmatpush.bf16.msra.mxu0 %v3089
        %3123 = vmatpush.bf16.msra.mxu0 %v3087
        %3124 = vmatpush.bf16.msra.mxu0 %v3085
        %3125 = vmatmul.bf16.gmra.mxu0 %v1267
        %v3126 = vpop.f32.mrf.mxu0
        %v3127 = vadd.f32 %v3033, %v3126
        %v3128 = vpop.f32.mrf.mxu0
        %v3129 = vadd.f32 %v3033, %v3128
        %3130 = vmatmul.bf16.gmra.mxu0 %v1268
        %v3131 = vpop.f32.mrf.mxu0
        %v3132 = vadd.f32 %v3033, %v3131
        %v3133 = vpop.f32.mrf.mxu0
        %v3134 = vadd.f32 %v3033, %v3133
        %3135 = vmatmul.bf16.gmra.mxu0 %v1269
        %v3136 = vpop.f32.mrf.mxu0
        %v3137 = vadd.f32 %v3033, %v3136
        %v3138 = vpop.f32.mrf.mxu0
        %v3139 = vadd.f32 %v3033, %v3138
        %3140 = vmatmul.bf16.gmra.mxu0 %v1270
        %v3141 = vpop.f32.mrf.mxu0
        %v3142 = vadd.f32 %v3033, %v3141
        %v3143 = vpop.f32.mrf.mxu0
        %v3144 = vadd.f32 %v3033, %v3143
        %3145 = vmatmul.bf16.gmra.mxu0 %v1271
        %v3146 = vpop.f32.mrf.mxu0
        %v3147 = vadd.f32 %v3033, %v3146
        %v3148 = vpop.f32.mrf.mxu0
        %v3149 = vadd.f32 %v3033, %v3148
        %3150 = vmatmul.bf16.gmra.mxu0 %v1272
        %v3151 = vpop.f32.mrf.mxu0
        %v3152 = vadd.f32 %v3033, %v3151
        %v3153 = vpop.f32.mrf.mxu0
        %v3154 = vadd.f32 %v3033, %v3153
        %3155 = vmatmul.bf16.gmra.mxu0 %v1273
        %v3156 = vpop.f32.mrf.mxu0
        %v3157 = vadd.f32 %v3033, %v3156
        %v3158 = vpop.f32.mrf.mxu0
        %v3159 = vadd.f32 %v3033, %v3158
        %3160 = vmatmul.bf16.gmra.mxu0 %v1274
        %v3161 = vpop.f32.mrf.mxu0
        %v3162 = vadd.f32 %v3033, %v3161
        %v3163 = vpop.f32.mrf.mxu0
        %v3164 = vadd.f32 %v3033, %v3163
        %3165 = vmatmul.bf16.gmra.mxu0 %v1275
        %v3166 = vpop.f32.mrf.mxu0
        %v3167 = vadd.f32 %v3033, %v3166
        %v3168 = vpop.f32.mrf.mxu0
        %v3169 = vadd.f32 %v3033, %v3168
        %3170 = vmatmul.bf16.gmra.mxu0 %v1276
        %v3171 = vpop.f32.mrf.mxu0
        %v3172 = vadd.f32 %v3033, %v3171
        %v3173 = vpop.f32.mrf.mxu0
        %v3174 = vadd.f32 %v3033, %v3173
        %3175 = vmatmul.bf16.gmra.mxu0 %v1277
        %v3176 = vpop.f32.mrf.mxu0
        %v3177 = vadd.f32 %v3033, %v3176
        %v3178 = vpop.f32.mrf.mxu0
        %v3179 = vadd.f32 %v3033, %v3178
        %3180 = vmatmul.bf16.gmra.mxu0 %v1278
        %v3181 = vpop.f32.mrf.mxu0
        %v3182 = vadd.f32 %v3033, %v3181
        %v3183 = vpop.f32.mrf.mxu0
        %v3184 = vadd.f32 %v3033, %v3183
        %3185 = vmatmul.bf16.gmra.mxu0 %v1279
        %v3186 = vpop.f32.mrf.mxu0
        %v3187 = vadd.f32 %v3033, %v3186
        %v3188 = vpop.f32.mrf.mxu0
        %v3189 = vadd.f32 %v3033, %v3188
        %3190 = vmatmul.bf16.gmra.mxu0 %v1280
        %v3191 = vpop.f32.mrf.mxu0
        %v3192 = vadd.f32 %v3033, %v3191
        %v3193 = vpop.f32.mrf.mxu0
        %v3194 = vadd.f32 %v3033, %v3193
        %3195 = vmatmul.bf16.gmra.mxu0 %v1281
        %v3196 = vpop.f32.mrf.mxu0
        %v3197 = vadd.f32 %v3033, %v3196
        %v3198 = vpop.f32.mrf.mxu0
        %v3199 = vadd.f32 %v3033, %v3198
        %3200 = vmatmul.bf16.gmra.mxu0 %v1282
        %v3201 = vpop.f32.mrf.mxu0
        %v3202 = vadd.f32 %v3033, %v3201
        %v3203 = vpop.f32.mrf.mxu0
        %v3204 = vadd.f32 %v3033, %v3203
        %3205 = vmatmul.bf16.gmra.mxu0 %v1283
        %v3206 = vpop.f32.mrf.mxu0
        %v3207 = vadd.f32 %v3033, %v3206
        %v3208 = vpop.f32.mrf.mxu0
        %v3209 = vadd.f32 %v3033, %v3208
        %3210 = vmatmul.bf16.gmra.mxu0 %v1284
        %v3211 = vpop.f32.mrf.mxu0
        %v3212 = vadd.f32 %v3033, %v3211
        %v3213 = vpop.f32.mrf.mxu0
        %v3214 = vadd.f32 %v3033, %v3213
        %3215 = vmatmul.bf16.gmra.mxu0 %v1285
        %v3216 = vpop.f32.mrf.mxu0
        %v3217 = vadd.f32 %v3033, %v3216
        %v3218 = vpop.f32.mrf.mxu0
        %v3219 = vadd.f32 %v3033, %v3218
        %3220 = vmatmul.bf16.gmra.mxu0 %v1286
        %v3221 = vpop.f32.mrf.mxu0
        %v3222 = vadd.f32 %v3033, %v3221
        %v3223 = vpop.f32.mrf.mxu0
        %v3224 = vadd.f32 %v3033, %v3223
        %3225 = vmatmul.bf16.gmra.mxu0 %v1287
        %v3226 = vpop.f32.mrf.mxu0
        %v3227 = vadd.f32 %v3033, %v3226
        %v3228 = vpop.f32.mrf.mxu0
        %v3229 = vadd.f32 %v3033, %v3228
        %3230 = vmatmul.bf16.gmra.mxu0 %v1288
        %v3231 = vpop.f32.mrf.mxu0
        %v3232 = vadd.f32 %v3033, %v3231
        %v3233 = vpop.f32.mrf.mxu0
        %v3234 = vadd.f32 %v3033, %v3233
        %3235 = vmatmul.bf16.gmra.mxu0 %v1289
        %v3236 = vpop.f32.mrf.mxu0
        %v3237 = vadd.f32 %v3033, %v3236
        %v3238 = vpop.f32.mrf.mxu0
        %v3239 = vadd.f32 %v3033, %v3238
        %3240 = vmatmul.bf16.gmra.mxu0 %v1290
        %v3241 = vpop.f32.mrf.mxu0
        %v3242 = vadd.f32 %v3033, %v3241
        %v3243 = vpop.f32.mrf.mxu0
        %v3244 = vadd.f32 %v3033, %v3243
        %3245 = vmatmul.bf16.gmra.mxu0 %v1291
        %v3246 = vpop.f32.mrf.mxu0
        %v3247 = vadd.f32 %v3033, %v3246
        %v3248 = vpop.f32.mrf.mxu0
        %v3249 = vadd.f32 %v3033, %v3248
        %3250 = vmatmul.bf16.gmra.mxu0 %v1292
        %v3251 = vpop.f32.mrf.mxu0
        %v3252 = vadd.f32 %v3033, %v3251
        %v3253 = vpop.f32.mrf.mxu0
        %v3254 = vadd.f32 %v3033, %v3253
        %3255 = vmatmul.bf16.gmra.mxu0 %v1293
        %v3256 = vpop.f32.mrf.mxu0
        %v3257 = vadd.f32 %v3033, %v3256
        %v3258 = vpop.f32.mrf.mxu0
        %v3259 = vadd.f32 %v3033, %v3258
        %3260 = vmatmul.bf16.gmra.mxu0 %v1294
        %v3261 = vpop.f32.mrf.mxu0
        %v3262 = vadd.f32 %v3033, %v3261
        %v3263 = vpop.f32.mrf.mxu0
        %v3264 = vadd.f32 %v3033, %v3263
        %3265 = vmatmul.bf16.gmra.mxu0 %v1295
        %v3266 = vpop.f32.mrf.mxu0
        %v3267 = vadd.f32 %v3033, %v3266
        %v3268 = vpop.f32.mrf.mxu0
        %v3269 = vadd.f32 %v3033, %v3268
        %3270 = vmatmul.bf16.gmra.mxu0 %v1296
        %v3271 = vpop.f32.mrf.mxu0
        %v3272 = vadd.f32 %v3033, %v3271
        %v3273 = vpop.f32.mrf.mxu0
        %v3274 = vadd.f32 %v3033, %v3273
        %3275 = vmatmul.bf16.gmra.mxu0 %v1297
        %v3276 = vpop.f32.mrf.mxu0
        %v3277 = vadd.f32 %v3033, %v3276
        %v3278 = vpop.f32.mrf.mxu0
        %v3279 = vadd.f32 %v3033, %v3278
        %3280 = vmatmul.bf16.gmra.mxu0 %v1298
        %v3281 = vpop.f32.mrf.mxu0
        %v3282 = vadd.f32 %v3033, %v3281
        %v3283 = vpop.f32.mrf.mxu0
        %v3284 = vadd.f32 %v3033, %v3283
        %3285 = vdwg.mxu0
        %3286 = vmatpush.bf16.msra.mxu0 %v3100
        %3287 = vmatpush.bf16.msra.mxu0 %v3098
        %3288 = vmatpush.bf16.msra.mxu0 %v3096
        %3289 = vmatpush.bf16.msra.mxu0 %v3094
        %3290 = vmatpush.bf16.msra.mxu0 %v3092
        %3291 = vmatpush.bf16.msra.mxu0 %v3090
        %3292 = vmatpush.bf16.msra.mxu0 %v3088
        %3293 = vmatpush.bf16.msra.mxu0 %v3086
        %3294 = vmatmul.bf16.gmra.mxu0 %v1267
        %v3295 = vpop.f32.mrf.mxu0
        %v3296 = vadd.f32 %v3034, %v3295
        %v3297 = vpop.f32.mrf.mxu0
        %v3298 = vadd.f32 %v3034, %v3297
        %3299 = vmatmul.bf16.gmra.mxu0 %v1268
        %v3300 = vpop.f32.mrf.mxu0
        %v3301 = vadd.f32 %v3034, %v3300
        %v3302 = vpop.f32.mrf.mxu0
        %v3303 = vadd.f32 %v3034, %v3302
        %3304 = vmatmul.bf16.gmra.mxu0 %v1269
        %v3305 = vpop.f32.mrf.mxu0
        %v3306 = vadd.f32 %v3034, %v3305
        %v3307 = vpop.f32.mrf.mxu0
        %v3308 = vadd.f32 %v3034, %v3307
        %3309 = vmatmul.bf16.gmra.mxu0 %v1270
        %v3310 = vpop.f32.mrf.mxu0
        %v3311 = vadd.f32 %v3034, %v3310
        %v3312 = vpop.f32.mrf.mxu0
        %v3313 = vadd.f32 %v3034, %v3312
        %3314 = vmatmul.bf16.gmra.mxu0 %v1271
        %v3315 = vpop.f32.mrf.mxu0
        %v3316 = vadd.f32 %v3034, %v3315
        %v3317 = vpop.f32.mrf.mxu0
        %v3318 = vadd.f32 %v3034, %v3317
        %3319 = vmatmul.bf16.gmra.mxu0 %v1272
        %v3320 = vpop.f32.mrf.mxu0
        %v3321 = vadd.f32 %v3034, %v3320
        %v3322 = vpop.f32.mrf.mxu0
        %v3323 = vadd.f32 %v3034, %v3322
        %3324 = vmatmul.bf16.gmra.mxu0 %v1273
        %v3325 = vpop.f32.mrf.mxu0
        %v3326 = vadd.f32 %v3034, %v3325
        %v3327 = vpop.f32.mrf.mxu0
        %v3328 = vadd.f32 %v3034, %v3327
        %3329 = vmatmul.bf16.gmra.mxu0 %v1274
        %v3330 = vpop.f32.mrf.mxu0
        %v3331 = vadd.f32 %v3034, %v3330
        %v3332 = vpop.f32.mrf.mxu0
        %v3333 = vadd.f32 %v3034, %v3332
        %3334 = vmatmul.bf16.gmra.mxu0 %v1275
        %v3335 = vpop.f32.mrf.mxu0
        %v3336 = vadd.f32 %v3034, %v3335
        %v3337 = vpop.f32.mrf.mxu0
        %v3338 = vadd.f32 %v3034, %v3337
        %3339 = vmatmul.bf16.gmra.mxu0 %v1276
        %v3340 = vpop.f32.mrf.mxu0
        %v3341 = vadd.f32 %v3034, %v3340
        %v3342 = vpop.f32.mrf.mxu0
        %v3343 = vadd.f32 %v3034, %v3342
        %3344 = vmatmul.bf16.gmra.mxu0 %v1277
        %v3345 = vpop.f32.mrf.mxu0
        %v3346 = vadd.f32 %v3034, %v3345
        %v3347 = vpop.f32.mrf.mxu0
        %v3348 = vadd.f32 %v3034, %v3347
        %3349 = vmatmul.bf16.gmra.mxu0 %v1278
        %v3350 = vpop.f32.mrf.mxu0
        %v3351 = vadd.f32 %v3034, %v3350
        %v3352 = vpop.f32.mrf.mxu0
        %v3353 = vadd.f32 %v3034, %v3352
        %3354 = vmatmul.bf16.gmra.mxu0 %v1279
        %v3355 = vpop.f32.mrf.mxu0
        %v3356 = vadd.f32 %v3034, %v3355
        %v3357 = vpop.f32.mrf.mxu0
        %v3358 = vadd.f32 %v3034, %v3357
        %3359 = vmatmul.bf16.gmra.mxu0 %v1280
        %v3360 = vpop.f32.mrf.mxu0
        %v3361 = vadd.f32 %v3034, %v3360
        %v3362 = vpop.f32.mrf.mxu0
        %v3363 = vadd.f32 %v3034, %v3362
        %3364 = vmatmul.bf16.gmra.mxu0 %v1281
        %v3365 = vpop.f32.mrf.mxu0
        %v3366 = vadd.f32 %v3034, %v3365
        %v3367 = vpop.f32.mrf.mxu0
        %v3368 = vadd.f32 %v3034, %v3367
        %3369 = vmatmul.bf16.gmra.mxu0 %v1282
        %v3370 = vpop.f32.mrf.mxu0
        %v3371 = vadd.f32 %v3034, %v3370
        %v3372 = vpop.f32.mrf.mxu0
        %v3373 = vadd.f32 %v3034, %v3372
        %3374 = vmatmul.bf16.gmra.mxu0 %v1283
        %v3375 = vpop.f32.mrf.mxu0
        %v3376 = vadd.f32 %v3034, %v3375
        %v3377 = vpop.f32.mrf.mxu0
        %v3378 = vadd.f32 %v3034, %v3377
        %3379 = vmatmul.bf16.gmra.mxu0 %v1284
        %v3380 = vpop.f32.mrf.mxu0
        %v3381 = vadd.f32 %v3034, %v3380
        %v3382 = vpop.f32.mrf.mxu0
        %v3383 = vadd.f32 %v3034, %v3382
        %3384 = vmatmul.bf16.gmra.mxu0 %v1285
        %v3385 = vpop.f32.mrf.mxu0
        %v3386 = vadd.f32 %v3034, %v3385
        %v3387 = vpop.f32.mrf.mxu0
        %v3388 = vadd.f32 %v3034, %v3387
        %3389 = vmatmul.bf16.gmra.mxu0 %v1286
        %v3390 = vpop.f32.mrf.mxu0
        %v3391 = vadd.f32 %v3034, %v3390
        %v3392 = vpop.f32.mrf.mxu0
        %v3393 = vadd.f32 %v3034, %v3392
        %3394 = vmatmul.bf16.gmra.mxu0 %v1287
        %v3395 = vpop.f32.mrf.mxu0
        %v3396 = vadd.f32 %v3034, %v3395
        %v3397 = vpop.f32.mrf.mxu0
        %v3398 = vadd.f32 %v3034, %v3397
        %3399 = vmatmul.bf16.gmra.mxu0 %v1288
        %v3400 = vpop.f32.mrf.mxu0
        %v3401 = vadd.f32 %v3034, %v3400
        %v3402 = vpop.f32.mrf.mxu0
        %v3403 = vadd.f32 %v3034, %v3402
        %3404 = vmatmul.bf16.gmra.mxu0 %v1289
        %v3405 = vpop.f32.mrf.mxu0
        %v3406 = vadd.f32 %v3034, %v3405
        %v3407 = vpop.f32.mrf.mxu0
        %v3408 = vadd.f32 %v3034, %v3407
        %3409 = vmatmul.bf16.gmra.mxu0 %v1290
        %v3410 = vpop.f32.mrf.mxu0
        %v3411 = vadd.f32 %v3034, %v3410
        %v3412 = vpop.f32.mrf.mxu0
        %v3413 = vadd.f32 %v3034, %v3412
        %3414 = vmatmul.bf16.gmra.mxu0 %v1291
        %v3415 = vpop.f32.mrf.mxu0
        %v3416 = vadd.f32 %v3034, %v3415
        %v3417 = vpop.f32.mrf.mxu0
        %v3418 = vadd.f32 %v3034, %v3417
        %3419 = vmatmul.bf16.gmra.mxu0 %v1292
        %v3420 = vpop.f32.mrf.mxu0
        %v3421 = vadd.f32 %v3034, %v3420
        %v3422 = vpop.f32.mrf.mxu0
        %v3423 = vadd.f32 %v3034, %v3422
        %3424 = vmatmul.bf16.gmra.mxu0 %v1293
        %v3425 = vpop.f32.mrf.mxu0
        %v3426 = vadd.f32 %v3034, %v3425
        %v3427 = vpop.f32.mrf.mxu0
        %v3428 = vadd.f32 %v3034, %v3427
        %3429 = vmatmul.bf16.gmra.mxu0 %v1294
        %v3430 = vpop.f32.mrf.mxu0
        %v3431 = vadd.f32 %v3034, %v3430
        %v3432 = vpop.f32.mrf.mxu0
        %v3433 = vadd.f32 %v3034, %v3432
        %3434 = vmatmul.bf16.gmra.mxu0 %v1295
        %v3435 = vpop.f32.mrf.mxu0
        %v3436 = vadd.f32 %v3034, %v3435
        %v3437 = vpop.f32.mrf.mxu0
        %v3438 = vadd.f32 %v3034, %v3437
        %3439 = vmatmul.bf16.gmra.mxu0 %v1296
        %v3440 = vpop.f32.mrf.mxu0
        %v3441 = vadd.f32 %v3034, %v3440
        %v3442 = vpop.f32.mrf.mxu0
        %v3443 = vadd.f32 %v3034, %v3442
        %3444 = vmatmul.bf16.gmra.mxu0 %v1297
        %v3445 = vpop.f32.mrf.mxu0
        %v3446 = vadd.f32 %v3034, %v3445
        %v3447 = vpop.f32.mrf.mxu0
        %v3448 = vadd.f32 %v3034, %v3447
        %3449 = vmatmul.bf16.gmra.mxu0 %v1298
        %v3450 = vpop.f32.mrf.mxu0
        %v3451 = vadd.f32 %v3034, %v3450
        %v3452 = vpop.f32.mrf.mxu0
        %v3453 = vadd.f32 %v3034, %v3452
        %3454 = vdwg.mxu0
        %v3455 = vmax.f32 %v3127, %v3132
        %v3456 = vmax.f32 %v3129, %v3134
        %v3457 = vmax.f32 %v3455, %v3137
        %v3458 = vmax.f32 %v3456, %v3139
        %v3459 = vmax.f32 %v3457, %v3142
        %v3460 = vmax.f32 %v3458, %v3144
        %v3461 = vmax.f32 %v3459, %v3147
        %v3462 = vmax.f32 %v3460, %v3149
        %v3463 = vmax.f32 %v3461, %v3152
        %v3464 = vmax.f32 %v3462, %v3154
        %v3465 = vmax.f32 %v3463, %v3157
        %v3466 = vmax.f32 %v3464, %v3159
        %v3467 = vmax.f32 %v3465, %v3162
        %v3468 = vmax.f32 %v3466, %v3164
        %v3469 = vmax.f32 %v3467, %v3167
        %v3470 = vmax.f32 %v3468, %v3169
        %v3471 = vmax.f32 %v3469, %v3172
        %v3472 = vmax.f32 %v3470, %v3174
        %v3473 = vmax.f32 %v3471, %v3177
        %v3474 = vmax.f32 %v3472, %v3179
        %v3475 = vmax.f32 %v3473, %v3182
        %v3476 = vmax.f32 %v3474, %v3184
        %v3477 = vmax.f32 %v3475, %v3187
        %v3478 = vmax.f32 %v3476, %v3189
        %v3479 = vmax.f32 %v3477, %v3192
        %v3480 = vmax.f32 %v3478, %v3194
        %v3481 = vmax.f32 %v3479, %v3197
        %v3482 = vmax.f32 %v3480, %v3199
        %v3483 = vmax.f32 %v3481, %v3202
        %v3484 = vmax.f32 %v3482, %v3204
        %v3485 = vmax.f32 %v3483, %v3207
        %v3486 = vmax.f32 %v3484, %v3209
        %v3487 = vmax.f32 %v3485, %v3212
        %v3488 = vmax.f32 %v3486, %v3214
        %v3489 = vmax.f32 %v3487, %v3217
        %v3490 = vmax.f32 %v3488, %v3219
        %v3491 = vmax.f32 %v3489, %v3222
        %v3492 = vmax.f32 %v3490, %v3224
        %v3493 = vmax.f32 %v3491, %v3227
        %v3494 = vmax.f32 %v3492, %v3229
        %v3495 = vmax.f32 %v3493, %v3232
        %v3496 = vmax.f32 %v3494, %v3234
        %v3497 = vmax.f32 %v3495, %v3237
        %v3498 = vmax.f32 %v3496, %v3239
        %v3499 = vmax.f32 %v3497, %v3242
        %v3500 = vmax.f32 %v3498, %v3244
        %v3501 = vmax.f32 %v3499, %v3247
        %v3502 = vmax.f32 %v3500, %v3249
        %v3503 = vmax.f32 %v3501, %v3252
        %v3504 = vmax.f32 %v3502, %v3254
        %v3505 = vmax.f32 %v3503, %v3257
        %v3506 = vmax.f32 %v3504, %v3259
        %v3507 = vmax.f32 %v3505, %v3262
        %v3508 = vmax.f32 %v3506, %v3264
        %v3509 = vmax.f32 %v3507, %v3267
        %v3510 = vmax.f32 %v3508, %v3269
        %v3511 = vmax.f32 %v3509, %v3272
        %v3512 = vmax.f32 %v3510, %v3274
        %v3513 = vmax.f32 %v3511, %v3277
        %v3514 = vmax.f32 %v3512, %v3279
        %v3515 = vmax.f32 %v3513, %v3282
        %v3516 = vmax.f32 %v3514, %v3284
        %v3517 = vmax.f32 %v3515, %v3516
        %v3518 = vmax.f32 %v3296, %v3301
        %v3519 = vmax.f32 %v3298, %v3303
        %v3520 = vmax.f32 %v3518, %v3306
        %v3521 = vmax.f32 %v3519, %v3308
        %v3522 = vmax.f32 %v3520, %v3311
        %v3523 = vmax.f32 %v3521, %v3313
        %v3524 = vmax.f32 %v3522, %v3316
        %v3525 = vmax.f32 %v3523, %v3318
        %v3526 = vmax.f32 %v3524, %v3321
        %v3527 = vmax.f32 %v3525, %v3323
        %v3528 = vmax.f32 %v3526, %v3326
        %v3529 = vmax.f32 %v3527, %v3328
        %v3530 = vmax.f32 %v3528, %v3331
        %v3531 = vmax.f32 %v3529, %v3333
        %v3532 = vmax.f32 %v3530, %v3336
        %v3533 = vmax.f32 %v3531, %v3338
        %v3534 = vmax.f32 %v3532, %v3341
        %v3535 = vmax.f32 %v3533, %v3343
        %v3536 = vmax.f32 %v3534, %v3346
        %v3537 = vmax.f32 %v3535, %v3348
        %v3538 = vmax.f32 %v3536, %v3351
        %v3539 = vmax.f32 %v3537, %v3353
        %v3540 = vmax.f32 %v3538, %v3356
        %v3541 = vmax.f32 %v3539, %v3358
        %v3542 = vmax.f32 %v3540, %v3361
        %v3543 = vmax.f32 %v3541, %v3363
        %v3544 = vmax.f32 %v3542, %v3366
        %v3545 = vmax.f32 %v3543, %v3368
        %v3546 = vmax.f32 %v3544, %v3371
        %v3547 = vmax.f32 %v3545, %v3373
        %v3548 = vmax.f32 %v3546, %v3376
        %v3549 = vmax.f32 %v3547, %v3378
        %v3550 = vmax.f32 %v3548, %v3381
        %v3551 = vmax.f32 %v3549, %v3383
        %v3552 = vmax.f32 %v3550, %v3386
        %v3553 = vmax.f32 %v3551, %v3388
        %v3554 = vmax.f32 %v3552, %v3391
        %v3555 = vmax.f32 %v3553, %v3393
        %v3556 = vmax.f32 %v3554, %v3396
        %v3557 = vmax.f32 %v3555, %v3398
        %v3558 = vmax.f32 %v3556, %v3401
        %v3559 = vmax.f32 %v3557, %v3403
        %v3560 = vmax.f32 %v3558, %v3406
        %v3561 = vmax.f32 %v3559, %v3408
        %v3562 = vmax.f32 %v3560, %v3411
        %v3563 = vmax.f32 %v3561, %v3413
        %v3564 = vmax.f32 %v3562, %v3416
        %v3565 = vmax.f32 %v3563, %v3418
        %v3566 = vmax.f32 %v3564, %v3421
        %v3567 = vmax.f32 %v3565, %v3423
        %v3568 = vmax.f32 %v3566, %v3426
        %v3569 = vmax.f32 %v3567, %v3428
        %v3570 = vmax.f32 %v3568, %v3431
        %v3571 = vmax.f32 %v3569, %v3433
        %v3572 = vmax.f32 %v3570, %v3436
        %v3573 = vmax.f32 %v3571, %v3438
        %v3574 = vmax.f32 %v3572, %v3441
        %v3575 = vmax.f32 %v3573, %v3443
        %v3576 = vmax.f32 %v3574, %v3446
        %v3577 = vmax.f32 %v3575, %v3448
        %v3578 = vmax.f32 %v3576, %v3451
        %v3579 = vmax.f32 %v3577, %v3453
        %v3580 = vmax.f32 %v3578, %v3579
        %v3581 = vld [vmem:[#allocation2 + $0x30] sm:$0xff]
        %v3582 = vld [vmem:[#allocation2 + $0x38] sm:$0xff]
        %v3583 = vmax.f32 %v3581, %v3517
        %v3584 = vmax.f32 %v3582, %v3580
        %3585 = vst [vmem:[#allocation2 + $0x30] sm:$0xff] %v3583
        %3586 = vst [vmem:[#allocation2 + $0x38] sm:$0xff] %v3584
        // Predicated region
        $region53: #{tpu_custom_call.1} parent=47 // pred_check
          %p3587 = pneg %p322
        $region54: #{tpu_custom_call.1} parent=47 // pred_check_branch
          %3589 = sbr.rel (%p3587) target = $region56
        $region55: #{tpu_custom_call.1} parent=47 // pred_region
          %v3590 = vld [vmem:[#allocation2] sm:$0xff]
          %v3591 = vld [vmem:[#allocation2 + $0x8] sm:$0xff]
          %v3592 = vld [vmem:[#allocation2 + $0x10] sm:$0xff]
          %v3593 = vld [vmem:[#allocation2 + $0x18] sm:$0xff]
          %v3594 = vld [vmem:[#allocation2 + $0x20] sm:$0xff]
          %v3595 = vld [vmem:[#allocation2 + $0x28] sm:$0xff]
          %v3596 = vld [vmem:[#allocation2 + $0x30] sm:$0xff]
          %v3597 = vld [vmem:[#allocation2 + $0x38] sm:$0xff]
          %3598 = vst [vmem:[%s308] sm:$0xff] %v3590
          %3599 = vst [vmem:[%s308 + $0x8] sm:$0xff] %v3591
          %3600 = vst [vmem:[%s308 + $0x10] sm:$0xff] %v3592
          %3601 = vst [vmem:[%s308 + $0x18] sm:$0xff] %v3593
          %3602 = vst [vmem:[%s308 + $0x20] sm:$0xff] %v3594
          %3603 = vst [vmem:[%s308 + $0x28] sm:$0xff] %v3595
          %3604 = vst [vmem:[%s308 + $0x30] sm:$0xff] %v3596
          %3605 = vst [vmem:[%s308 + $0x38] sm:$0xff] %v3597
        $region56: #{tpu_custom_call.1} parent=47 // pred_fallthru
          _
        %s3606 = sand.u32 %s206, 1
        %s3607 = scalar_lea.sflag [#allocation4], %s3606
        %s3608 = sand.u32 %s206, 1
        %s3609 = smul.addr %s3608, 64
        %s3610 = scalar_lea.vmem [#allocation3], %s3609
        // Predicated region
        $region57: #{tpu_custom_call.1} parent=47 // pred_check
          %p3611 = pneg %p216
        $region58: #{tpu_custom_call.1} parent=47 // pred_check_branch
          %3613 = sbr.rel (%p3611) target = $region60
        $region59: #{tpu_custom_call.1} parent=47 // pred_region
          %3615 = vsyncadd %s3607, 0
          %s3616 = smul.addr %s27, 8
          %s3617 = smul.addr %s26, 16
          %s3618 = sadd.s32 %s3616, %s3617
          %s3619 = smul.addr %s3618, 8
          %s3620 = scalar_lea.hbm %s7, %s3619
          %s3622 = sshll.u32 %s3610, 4
          %s3623 = int_to_ptr.vmem [resolvable:$true] %s3622
          %s3624 = sshll.u32 %s3620, 4
          %s3625 = int_to_ptr.hbm [resolvable:$true] %s3624
          %3627 = dma.vmem_to_hbm [thread:$0]  %s3623, 1024, %s3625, %s3607
        $region60: #{tpu_custom_call.1} parent=47 // pred_fallthru
          _
      $region48: #{tpu_custom_call.1} parent=5 // pred_fallthru
        _
      %p3628 = scmp.le.s32.totalorder 2, %s16
      // Predicated region
      $region61: #{tpu_custom_call.1} parent=5 // pred_check
        %p3629 = pneg %p3628
      $region62: #{tpu_custom_call.1} parent=5 // pred_check_branch
        %3631 = sbr.rel (%p3629) target = $region64
      $region63: #{tpu_custom_call.1} parent=5 // pred_region
        %s3632 = ssub.s32 %s16, 2
        // Predicated region
        $region65: #{tpu_custom_call.1} parent=63 // pred_check
          %p3633 = pneg %p222
        $region66: #{tpu_custom_call.1} parent=63 // pred_check_branch
          %3635 = sbr.rel (%p3633) target = $region68
        $region67: #{tpu_custom_call.1} parent=63 // pred_region
          %s3636 = sand.u32 %s207, 1
          %s3637 = scalar_lea.sflag [#allocation4], %s3636
          %s3638 = sand.u32 %s207, 1
          %s3639 = smul.addr %s3638, 64
          %s3640 = scalar_lea.vmem [#allocation3], %s3639
          %3642 = dma.done %s3637, 1024
        $region68: #{tpu_custom_call.1} parent=63 // pred_fallthru
          _
      $region64: #{tpu_custom_call.1} parent=5 // pred_fallthru
        _
    $region6: #{tpu_custom_call.1} parent=1 // loop_footer
      %s20 = sadd.s32 1, %s16
    $region7: #{tpu_custom_call.1} parent=1 // loop_footer_branch
      %15 = sbr.rel target = $region3
    $region8: #{tpu_custom_call.1} parent=1 // loop_exit
      _
    %3643 = vsyncpa [#allocation4], 1
    %s3644 = scalar_lea.sflag [#allocation4], 1
    %3645 = vsyncpa %s3644, 1

</llo_original>
